<compile_context>
chip_gen: v7x
topology: tpu7x:2x2x1
jax: 0.10.0
libtpu: 0.0.40
codegen_flags: <defaults>
</compile_context>

<pallas_src>
import functools

import jax
import jax.numpy as jnp
from jax import lax
from jax.experimental import pallas as pl
from jax.experimental.pallas import tpu as pltpu


def _upsample_conv_kernel(x_ref, w_ref, b_ref, o_ref, xpad_ref, *,
                          H, W, Cin, Cout, B):
    """Conv3x3(pad=1) + bias + ReLU for a tile of B images, NCHW layout.

    x_ref:    (B, Cin, H, W)       raw NCHW input tile (no pre-padding)
    w_ref:    (Cout, 9*Cin)        weight, columns ordered (kh, kw, ci)
    b_ref:    (Cout, 1)            bias
    o_ref:    (B, Cout, H*W)       lane-dense conv output (pixels flattened)
    xpad_ref: (B, Cin, H+2, W+2)   VMEM scratch holding the zero-padded input
    """
    HW = H * W

    # Fold the zero-padding into the kernel: memset the (few-KB) halo'd scratch
    # and write the interior.  The memset runs every step (not just step 0) so
    # results stay correct when the "parallel" batch axis is split across
    # TensorCores (each core only sees a subset of program_ids).
    xpad_ref[...] = jnp.zeros_like(xpad_ref)
    xpad_ref[:, :, 1:H + 1, 1:W + 1] = x_ref[...]
    xpad = xpad_ref[...]                                  # (B, Cin, H+2, W+2)

    # im2col oriented for a lane-dense MXU output:
    #   patches[(kh*3+kw)*Cin + ci, b*H*W + h*W + w] = xpad[b, ci, h+kh, w+kw]
    # Pixel flattening happens once per (kh, kw) tap (9 relayouts total);
    # sublane concat across taps and 128-aligned lane concat across batch
    # avoid masked lane shuffles.
    tap_rows = []
    for kh in range(3):
        for kw in range(3):
            per_b = [
                xpad[b, :, kh:kh + H, kw:kw + W].reshape(Cin, HW)
                for b in range(B)
            ]
            tap_rows.append(per_b[0] if B == 1
                            else jnp.concatenate(per_b, axis=-1))
    patches = jnp.concatenate(tap_rows, axis=0)           # (9*Cin, B*H*W)

    # Single MXU matmul with lane-dense output: N dim = B*H*W (>=128), so the
    # result is stored directly with unmasked vst (no output relayout).
    y = jnp.dot(w_ref[...], patches, preferred_element_type=jnp.float32)
    y = jnp.maximum(y + b_ref[...], 0.0)                  # bias + ReLU epilogue

    for b in range(B):                                    # 128-aligned lane slices
        o_ref[b] = y[:, b * HW:(b + 1) * HW].astype(o_ref.dtype)


def upsample_nchw(x_nchw, w_oihw, bias, *, scale_by, act="relu",
                  batch_tile=None):
    """PyTorch-convention Upsample forward: x (N,C,H,W), weight (C*r^2, C, 3, 3)."""
    if act != "relu":
        # TODO(synk): act='prelu' (learned PReLU slope) not implemented.
        raise NotImplementedError("only act='relu' is implemented")

    N, C, H, W = x_nchw.shape
    r = int(scale_by)
    Cout = C * r * r
    assert w_oihw.shape == (Cout, C, 3, 3)

    if batch_tile is None:
        # Small N: one grid step with the whole batch stacked along the matmul
        # lane dimension (one big matmul, per-step overhead amortized).  Larger
        # N keeps >=2 parallel steps so both v7x TensorCores get work and the
        # input DMA of step i+1 overlaps the compute of step i.
        batch_tile = N if N <= 4 else 1
    assert N % batch_tile == 0
    steps = N // batch_tile

    # (Cout, Cin, 3, 3) -> (co, kh, kw, ci) -> (Cout, 9*Cin): column order
    # matches the (kh, kw, ci) row order of the in-kernel im2col matrix.
    wT = jnp.transpose(w_oihw, (0, 2, 3, 1)).reshape(Cout, 9 * C)
    b2 = bias.reshape(Cout, 1)

    kernel = functools.partial(_upsample_conv_kernel,
                               H=H, W=W, Cin=C, Cout=Cout, B=batch_tile)

    y = pl.pallas_call(
        kernel,
        out_shape=jax.ShapeDtypeStruct((N, Cout, H * W), x_nchw.dtype),
        grid_spec=pltpu.PrefetchScalarGridSpec(
            num_scalar_prefetch=0,
            grid=(steps,),
            in_specs=[
                pl.BlockSpec((batch_tile, C, H, W), lambda n: (n, 0, 0, 0)),
                pl.BlockSpec((Cout, 9 * C), lambda n: (0, 0)),   # grid-invariant
                pl.BlockSpec((Cout, 1), lambda n: (0, 0)),       # grid-invariant
            ],
            out_specs=pl.BlockSpec((batch_tile, Cout, H * W),
                                   lambda n: (n, 0, 0)),
            scratch_shapes=[
                pltpu.VMEM((batch_tile, C, H + 2, W + 2), x_nchw.dtype),
            ],
        ),
        compiler_params=pltpu.CompilerParams(
            dimension_semantics=("parallel",)),   # batch tiles are independent
    )(x_nchw, wT, b2)

    # PixelShuffle(r): pure layout plumbing on the conv output (ReLU already
    # applied in-kernel; it commutes with the permutation).
    # (N, C*r*r, H*W) -> (N, C, r, r, H, W) -> (N, C, H, r, W, r) -> NCHW.
    # TODO(synk): on v5e consider emitting pixel-shuffled NCHW directly from
    # the kernel to save this output-sized HBM pass (masked-store trade-off).
    y = y.reshape(N, C, r, r, H, W)
    y = jnp.transpose(y, (0, 1, 4, 2, 5, 3))
    return y.reshape(N, C, H * r, W * r)


def _reference_nchw(x_nchw, w_oihw, bias, *, scale_by):
    """Pure-JAX reference: lax.conv + pixel shuffle + ReLU."""
    dn = ("NCHW", "OIHW", "NCHW")
    y = lax.conv_general_dilated(x_nchw, w_oihw, (1, 1), "SAME",
                                 dimension_numbers=dn)
    y = y + bias.reshape(1, -1, 1, 1)
    N, Co, H, W = y.shape
    r = int(scale_by)
    C = Co // (r * r)
    y = y.reshape(N, C, r, r, H, W)
    y = jnp.transpose(y, (0, 1, 4, 2, 5, 3))
    y = y.reshape(N, C, H * r, W * r)
    return jnp.maximum(y, 0.0)


if __name__ == "__main__":
    N, C, H, W = 2, 4, 16, 16
    scale_by = 2
    Cout = C * scale_by ** 2

    key = jax.random.PRNGKey(0)
    kx, kw, kb = jax.random.split(key, 3)

    x = jax.random.normal(kx, (N, C, H, W), jnp.float32)

    # Deterministic init mimicking nn.Conv2d default (kaiming-uniform-ish).
    fan_in = C * 3 * 3
    bound = 1.0 / (fan_in ** 0.5)
    w = jax.random.uniform(kw, (Cout, C, 3, 3), jnp.float32, -bound, bound)
    b = jax.random.uniform(kb, (Cout,), jnp.float32, -bound, bound)

    out = upsample_nchw(x, w, b, scale_by=scale_by, act="relu")
    out = jax.block_until_ready(out)

    ref = _reference_nchw(x, w, b, scale_by=scale_by)
    assert out.shape == (N, C, H * scale_by, W * scale_by)
    assert jnp.allclose(out, ref, atol=1e-4, rtol=1e-4), "mismatch vs reference"

    print("KERNEL_OK")
</pallas_src>

<mosaic_0001>
module attributes {stable_mosaic.version = 11 : i64} {
  func.func @_upsample_conv_kernel(%arg0: i32, %arg1: memref<2x4x16x16xf32, #tpu.memory_space<vmem>>, %arg2: memref<16x36xf32, #tpu.memory_space<vmem>>, %arg3: memref<16x1xf32, #tpu.memory_space<vmem>>, %arg4: memref<2x16x256xf32, #tpu.memory_space<vmem>>, %arg5: memref<2x4x18x18xf32, #tpu.memory_space<vmem>>) attributes {dimension_semantics = [#tpu.dimension_semantics<parallel>], iteration_bounds = array<i64: 1>, scalar_prefetch = 0 : i64, scratch_operands = 1 : i64, tpu.core_type = #tpu.core_type<tc>, window_params = [{transform_indices = @transform_0, window_bounds = array<i64: 2, 4, 16, 16>}, {pipeline_mode = #tpu.pipeline_mode<synchronous>, transform_indices = @transform_1, window_bounds = array<i64: 16, 36>}, {pipeline_mode = #tpu.pipeline_mode<synchronous>, transform_indices = @transform_2, window_bounds = array<i64: 16, 1>}, {transform_indices = @transform_3, window_bounds = array<i64: 2, 16, 256>}]} {
    %cst = arith.constant 0.000000e+00 : f32
    %0 = vector.broadcast %cst : f32 to vector<2x4x18x18xf32>
    %c0 = arith.constant 0 : index
    %c0_0 = arith.constant 0 : index
    %c0_1 = arith.constant 0 : index
    %c0_2 = arith.constant 0 : index
    %1 = vector.load %arg5[%c0, %c0_0, %c0_1, %c0_2] : memref<2x4x18x18xf32, #tpu.memory_space<vmem>>, vector<2x4x18x18xf32>
    tpu.vector_store %arg5[%c0, %c0_0, %c0_1, %c0_2], %0 {strides = array<i32>} : memref<2x4x18x18xf32, #tpu.memory_space<vmem>>, vector<2x4x18x18xf32>,
    %c0_3 = arith.constant 0 : index
    %c0_4 = arith.constant 0 : index
    %c0_5 = arith.constant 0 : index
    %c0_6 = arith.constant 0 : index
    %2 = vector.load %arg1[%c0_3, %c0_4, %c0_5, %c0_6] : memref<2x4x16x16xf32, #tpu.memory_space<vmem>>, vector<2x4x16x16xf32>
    %c0_7 = arith.constant 0 : index
    %c0_8 = arith.constant 0 : index
    %c1 = arith.constant 1 : index
    %c1_9 = arith.constant 1 : index
    %3 = vector.load %arg5[%c0_7, %c0_8, %c1, %c1_9] : memref<2x4x18x18xf32, #tpu.memory_space<vmem>>, vector<2x4x16x16xf32>
    tpu.vector_store %arg5[%c0_7, %c0_8, %c1, %c1_9], %2 {strides = array<i32>} : memref<2x4x18x18xf32, #tpu.memory_space<vmem>>, vector<2x4x16x16xf32>,
    %c0_10 = arith.constant 0 : index
    %c0_11 = arith.constant 0 : index
    %c0_12 = arith.constant 0 : index
    %c0_13 = arith.constant 0 : index
    %4 = vector.load %arg5[%c0_10, %c0_11, %c0_12, %c0_13] : memref<2x4x18x18xf32, #tpu.memory_space<vmem>>, vector<2x4x18x18xf32>
    %5 = vector.extract_strided_slice %4 {offsets = [0, 0, 0, 0], sizes = [1, 4, 16, 16], strides = [1, 1, 1, 1]} : vector<2x4x18x18xf32> to vector<1x4x16x16xf32>
    %6 = vector.shape_cast %5 : vector<1x4x16x16xf32> to vector<4x16x16xf32>
    %7 = vector.shape_cast %6 : vector<4x16x16xf32> to vector<4x256xf32>
    %8 = vector.extract_strided_slice %4 {offsets = [1, 0, 0, 0], sizes = [1, 4, 16, 16], strides = [1, 1, 1, 1]} : vector<2x4x18x18xf32> to vector<1x4x16x16xf32>
    %9 = vector.shape_cast %8 : vector<1x4x16x16xf32> to vector<4x16x16xf32>
    %10 = vector.shape_cast %9 : vector<4x16x16xf32> to vector<4x256xf32>
    %11 = tpu.concatenate %7, %10 in 1 : vector<4x256xf32>, vector<4x256xf32> -> vector<4x512xf32>
    %12 = vector.extract_strided_slice %4 {offsets = [0, 0, 0, 1], sizes = [1, 4, 16, 16], strides = [1, 1, 1, 1]} : vector<2x4x18x18xf32> to vector<1x4x16x16xf32>
    %13 = vector.shape_cast %12 : vector<1x4x16x16xf32> to vector<4x16x16xf32>
    %14 = vector.shape_cast %13 : vector<4x16x16xf32> to vector<4x256xf32>
    %15 = vector.extract_strided_slice %4 {offsets = [1, 0, 0, 1], sizes = [1, 4, 16, 16], strides = [1, 1, 1, 1]} : vector<2x4x18x18xf32> to vector<1x4x16x16xf32>
    %16 = vector.shape_cast %15 : vector<1x4x16x16xf32> to vector<4x16x16xf32>
    %17 = vector.shape_cast %16 : vector<4x16x16xf32> to vector<4x256xf32>
    %18 = tpu.concatenate %14, %17 in 1 : vector<4x256xf32>, vector<4x256xf32> -> vector<4x512xf32>
    %19 = vector.extract_strided_slice %4 {offsets = [0, 0, 0, 2], sizes = [1, 4, 16, 16], strides = [1, 1, 1, 1]} : vector<2x4x18x18xf32> to vector<1x4x16x16xf32>
    %20 = vector.shape_cast %19 : vector<1x4x16x16xf32> to vector<4x16x16xf32>
    %21 = vector.shape_cast %20 : vector<4x16x16xf32> to vector<4x256xf32>
    %22 = vector.extract_strided_slice %4 {offsets = [1, 0, 0, 2], sizes = [1, 4, 16, 16], strides = [1, 1, 1, 1]} : vector<2x4x18x18xf32> to vector<1x4x16x16xf32>
    %23 = vector.shape_cast %22 : vector<1x4x16x16xf32> to vector<4x16x16xf32>
    %24 = vector.shape_cast %23 : vector<4x16x16xf32> to vector<4x256xf32>
    %25 = tpu.concatenate %21, %24 in 1 : vector<4x256xf32>, vector<4x256xf32> -> vector<4x512xf32>
    %26 = vector.extract_strided_slice %4 {offsets = [0, 0, 1, 0], sizes = [1, 4, 16, 16], strides = [1, 1, 1, 1]} : vector<2x4x18x18xf32> to vector<1x4x16x16xf32>
    %27 = vector.shape_cast %26 : vector<1x4x16x16xf32> to vector<4x16x16xf32>
    %28 = vector.shape_cast %27 : vector<4x16x16xf32> to vector<4x256xf32>
    %29 = vector.extract_strided_slice %4 {offsets = [1, 0, 1, 0], sizes = [1, 4, 16, 16], strides = [1, 1, 1, 1]} : vector<2x4x18x18xf32> to vector<1x4x16x16xf32>
    %30 = vector.shape_cast %29 : vector<1x4x16x16xf32> to vector<4x16x16xf32>
    %31 = vector.shape_cast %30 : vector<4x16x16xf32> to vector<4x256xf32>
    %32 = tpu.concatenate %28, %31 in 1 : vector<4x256xf32>, vector<4x256xf32> -> vector<4x512xf32>
    %33 = vector.extract_strided_slice %4 {offsets = [0, 0, 1, 1], sizes = [1, 4, 16, 16], strides = [1, 1, 1, 1]} : vector<2x4x18x18xf32> to vector<1x4x16x16xf32>
    %34 = vector.shape_cast %33 : vector<1x4x16x16xf32> to vector<4x16x16xf32>
    %35 = vector.shape_cast %34 : vector<4x16x16xf32> to vector<4x256xf32>
    %36 = vector.extract_strided_slice %4 {offsets = [1, 0, 1, 1], sizes = [1, 4, 16, 16], strides = [1, 1, 1, 1]} : vector<2x4x18x18xf32> to vector<1x4x16x16xf32>
    %37 = vector.shape_cast %36 : vector<1x4x16x16xf32> to vector<4x16x16xf32>
    %38 = vector.shape_cast %37 : vector<4x16x16xf32> to vector<4x256xf32>
    %39 = tpu.concatenate %35, %38 in 1 : vector<4x256xf32>, vector<4x256xf32> -> vector<4x512xf32>
    %40 = vector.extract_strided_slice %4 {offsets = [0, 0, 1, 2], sizes = [1, 4, 16, 16], strides = [1, 1, 1, 1]} : vector<2x4x18x18xf32> to vector<1x4x16x16xf32>
    %41 = vector.shape_cast %40 : vector<1x4x16x16xf32> to vector<4x16x16xf32>
    %42 = vector.shape_cast %41 : vector<4x16x16xf32> to vector<4x256xf32>
    %43 = vector.extract_strided_slice %4 {offsets = [1, 0, 1, 2], sizes = [1, 4, 16, 16], strides = [1, 1, 1, 1]} : vector<2x4x18x18xf32> to vector<1x4x16x16xf32>
    %44 = vector.shape_cast %43 : vector<1x4x16x16xf32> to vector<4x16x16xf32>
    %45 = vector.shape_cast %44 : vector<4x16x16xf32> to vector<4x256xf32>
    %46 = tpu.concatenate %42, %45 in 1 : vector<4x256xf32>, vector<4x256xf32> -> vector<4x512xf32>
    %47 = vector.extract_strided_slice %4 {offsets = [0, 0, 2, 0], sizes = [1, 4, 16, 16], strides = [1, 1, 1, 1]} : vector<2x4x18x18xf32> to vector<1x4x16x16xf32>
    %48 = vector.shape_cast %47 : vector<1x4x16x16xf32> to vector<4x16x16xf32>
    %49 = vector.shape_cast %48 : vector<4x16x16xf32> to vector<4x256xf32>
    %50 = vector.extract_strided_slice %4 {offsets = [1, 0, 2, 0], sizes = [1, 4, 16, 16], strides = [1, 1, 1, 1]} : vector<2x4x18x18xf32> to vector<1x4x16x16xf32>
    %51 = vector.shape_cast %50 : vector<1x4x16x16xf32> to vector<4x16x16xf32>
    %52 = vector.shape_cast %51 : vector<4x16x16xf32> to vector<4x256xf32>
    %53 = tpu.concatenate %49, %52 in 1 : vector<4x256xf32>, vector<4x256xf32> -> vector<4x512xf32>
    %54 = vector.extract_strided_slice %4 {offsets = [0, 0, 2, 1], sizes = [1, 4, 16, 16], strides = [1, 1, 1, 1]} : vector<2x4x18x18xf32> to vector<1x4x16x16xf32>
    %55 = vector.shape_cast %54 : vector<1x4x16x16xf32> to vector<4x16x16xf32>
    %56 = vector.shape_cast %55 : vector<4x16x16xf32> to vector<4x256xf32>
    %57 = vector.extract_strided_slice %4 {offsets = [1, 0, 2, 1], sizes = [1, 4, 16, 16], strides = [1, 1, 1, 1]} : vector<2x4x18x18xf32> to vector<1x4x16x16xf32>
    %58 = vector.shape_cast %57 : vector<1x4x16x16xf32> to vector<4x16x16xf32>
    %59 = vector.shape_cast %58 : vector<4x16x16xf32> to vector<4x256xf32>
    %60 = tpu.concatenate %56, %59 in 1 : vector<4x256xf32>, vector<4x256xf32> -> vector<4x512xf32>
    %61 = vector.extract_strided_slice %4 {offsets = [0, 0, 2, 2], sizes = [1, 4, 16, 16], strides = [1, 1, 1, 1]} : vector<2x4x18x18xf32> to vector<1x4x16x16xf32>
    %62 = vector.shape_cast %61 : vector<1x4x16x16xf32> to vector<4x16x16xf32>
    %63 = vector.shape_cast %62 : vector<4x16x16xf32> to vector<4x256xf32>
    %64 = vector.extract_strided_slice %4 {offsets = [1, 0, 2, 2], sizes = [1, 4, 16, 16], strides = [1, 1, 1, 1]} : vector<2x4x18x18xf32> to vector<1x4x16x16xf32>
    %65 = vector.shape_cast %64 : vector<1x4x16x16xf32> to vector<4x16x16xf32>
    %66 = vector.shape_cast %65 : vector<4x16x16xf32> to vector<4x256xf32>
    %67 = tpu.concatenate %63, %66 in 1 : vector<4x256xf32>, vector<4x256xf32> -> vector<4x512xf32>
    %68 = tpu.concatenate %11, %18, %25, %32, %39, %46, %53, %60, %67 in 0 : vector<4x512xf32>, vector<4x512xf32>, vector<4x512xf32>, vector<4x512xf32>, vector<4x512xf32>, vector<4x512xf32>, vector<4x512xf32>, vector<4x512xf32>, vector<4x512xf32> -> vector<36x512xf32>
    %c0_14 = arith.constant 0 : index
    %c0_15 = arith.constant 0 : index
    %69 = vector.load %arg2[%c0_14, %c0_15] : memref<16x36xf32, #tpu.memory_space<vmem>>, vector<16x36xf32>
    %cst_16 = arith.constant dense<0.000000e+00> : vector<16x512xf32>
    %70 = tpu.matmul %69, %68, %cst_16 {dimension_numbers = #tpu.dot_dimension_numbers<[1], [0], [0], [1], [0, 0, 1, 1], [], []>} : vector<16x36xf32>, vector<36x512xf32>, vector<16x512xf32> -> vector<16x512xf32>
    %c0_17 = arith.constant 0 : index
    %c0_18 = arith.constant 0 : index
    %71 = vector.load %arg3[%c0_17, %c0_18] : memref<16x1xf32, #tpu.memory_space<vmem>>, vector<16x1xf32>
    %72 = vector.broadcast %71 : vector<16x1xf32> to vector<16x512xf32>
    %73 = arith.addf %70, %72 : vector<16x512xf32>
    %cst_19 = arith.constant 0.000000e+00 : f32
    %74 = vector.broadcast %cst_19 : f32 to vector<16x512xf32>
    %75 = arith.maximumf %73, %74 : vector<16x512xf32>
    %76 = vector.extract_strided_slice %75 {offsets = [0, 0], sizes = [16, 256], strides = [1, 1]} : vector<16x512xf32> to vector<16x256xf32>
    %c0_20 = arith.constant 0 : index
    %c0_21 = arith.constant 0 : index
    %c0_22 = arith.constant 0 : index
    %77 = vector.load %arg4[%c0_20, %c0_21, %c0_22] : memref<2x16x256xf32, #tpu.memory_space<vmem>>, vector<1x16x256xf32>
    %78 = vector.shape_cast %77 : vector<1x16x256xf32> to vector<16x256xf32>
    %79 = vector.shape_cast %76 : vector<16x256xf32> to vector<1x16x256xf32>
    tpu.vector_store %arg4[%c0_20, %c0_21, %c0_22], %79 {strides = array<i32>} : memref<2x16x256xf32, #tpu.memory_space<vmem>>, vector<1x16x256xf32>,
    %80 = vector.extract_strided_slice %75 {offsets = [0, 256], sizes = [16, 256], strides = [1, 1]} : vector<16x512xf32> to vector<16x256xf32>
    %c1_23 = arith.constant 1 : index
    %c0_24 = arith.constant 0 : index
    %c0_25 = arith.constant 0 : index
    %81 = vector.load %arg4[%c1_23, %c0_24, %c0_25] : memref<2x16x256xf32, #tpu.memory_space<vmem>>, vector<1x16x256xf32>
    %82 = vector.shape_cast %81 : vector<1x16x256xf32> to vector<16x256xf32>
    %83 = vector.shape_cast %80 : vector<16x256xf32> to vector<1x16x256xf32>
    tpu.vector_store %arg4[%c1_23, %c0_24, %c0_25], %83 {strides = array<i32>} : memref<2x16x256xf32, #tpu.memory_space<vmem>>, vector<1x16x256xf32>,
    return
  }
  func.func @transform_0(%arg0: i32) -> (i32, i32, i32, i32) {
    %c0_i32 = arith.constant 0 : i32
    %c0_i32_0 = arith.constant 0 : i32
    %c0_i32_1 = arith.constant 0 : i32
    %c0_i32_2 = arith.constant 0 : i32
    return %arg0, %c0_i32, %c0_i32_0, %c0_i32_1 : i32, i32, i32, i32
  }
  func.func @transform_1(%arg0: i32) -> (i32, i32) {
    %c0_i32 = arith.constant 0 : i32
    %c0_i32_0 = arith.constant 0 : i32
    %c0_i32_1 = arith.constant 0 : i32
    return %c0_i32, %c0_i32_0 : i32, i32
  }
  func.func @transform_2(%arg0: i32) -> (i32, i32) {
    %c0_i32 = arith.constant 0 : i32
    %c0_i32_0 = arith.constant 0 : i32
    %c0_i32_1 = arith.constant 0 : i32
    return %c0_i32, %c0_i32_0 : i32, i32
  }
  func.func @transform_3(%arg0: i32) -> (i32, i32, i32) {
    %c0_i32 = arith.constant 0 : i32
    %c0_i32_0 = arith.constant 0 : i32
    %c0_i32_1 = arith.constant 0 : i32
    return %arg0, %c0_i32, %c0_i32_0 : i32, i32, i32
  }
}

</mosaic_0001>

<llo_original>
// kernel: tpu_custom_call.1
$region0: #{tpu_custom_call.1}
  #allocation0 [shape = 'u32[]', space=smem, size = 0x4, offset = 0x4, fixed_abs, tag = 'smem constant byte address 0x4 - core index']
  #allocation1 [shape = 'u32[144,128]{1,0:T(1,128)}', space=vmem, size = 0x12000, scoped, tag = 'internal scratch']
  #allocation2 [shape = 'f32[2,4,18,18]{3,2,1,0:T(8,128)}', space=vmem, size = 0x18000, scoped, tag = 'scratch operand']
  %s0 = inlined_call_operand.hbm [shape: f32[2,4,16,16], index: 0, kind: input, shape index: {}]
  %s1 = inlined_call_operand.vmem [shape: f32[16,36], index: 1, kind: input, shape index: {}]
  %s2 = inlined_call_operand.vmem [shape: f32[16,1], index: 2, kind: input, shape index: {}]
  %s3 = inlined_call_operand.hbm [shape: f32[2,16,256], index: 3, kind: output, shape index: {}]
  %s4 = sld [smem:[#allocation0]]
  $region26: #{tpu_custom_call.1} parent=0
    _
  %s6 = ssub.s32 1, %s4
  %s7 = scalar_select 0, %s6, %s4
  $region1: #{tpu_custom_call.1} parent=0
    #allocation3 [shape = 'u8[65536]{0}', space=vmem, size = 0x10000, scoped, tag = 'input window, operand 0, single buffered']
    #allocation4 [shape = 's32[1]{0}', space=sflag, size = 0x4, scoped, tag = 'scoped memory for tpu_custom_call.1']
    #allocation5 [shape = 's32[1]{0}', space=sflag, size = 0x4, scoped, tag = 'scoped memory for tpu_custom_call.1']
    #allocation6 [shape = 'u8[32768]{0}', space=vmem, size = 0x8000, scoped, tag = 'output window, operand 0, single buffered']
    %8 = vsyncpa [#allocation4], 0
    %9 = vsyncpa [#allocation5], 0
    // Predicated region
    $region2: #{tpu_custom_call.1} parent=1 // pred_check
      _
    $region3: #{tpu_custom_call.1} parent=1 // pred_check_branch
      %11 = sbr.rel (0) target = $region5
    $region4: #{tpu_custom_call.1} parent=1 // pred_region
      %s13 = ssub.s32 2048, 2048
      %14 = vsyncadd [#allocation4], %s13
      %s15 = sshll.u32 [#allocation3], 4
      %s16 = int_to_ptr.vmem [resolvable:$true] %s15
      %21 = dma.hbm_to_vmem [thread:$0]  %s0, 2048, %s16, [#allocation4], 128, 128, 8
    $region5: #{tpu_custom_call.1} parent=1 // pred_fallthru
      _
    // Predicated region
    $region6: #{tpu_custom_call.1} parent=1 // pred_check
      _
    $region7: #{tpu_custom_call.1} parent=1 // pred_check_branch
      %23 = sbr.rel (0) target = $region9
    $region8: #{tpu_custom_call.1} parent=1 // pred_region
      _
    $region9: #{tpu_custom_call.1} parent=1 // pred_fallthru
      _
    // Predicated region
    $region10: #{tpu_custom_call.1} parent=1 // pred_check
      _
    $region11: #{tpu_custom_call.1} parent=1 // pred_check_branch
      %25 = sbr.rel (0) target = $region13
    $region12: #{tpu_custom_call.1} parent=1 // pred_region
      _
    $region13: #{tpu_custom_call.1} parent=1 // pred_fallthru
      _
    // Predicated region
    $region14: #{tpu_custom_call.1} parent=1 // pred_check
      _
    $region15: #{tpu_custom_call.1} parent=1 // pred_check_branch
      %27 = sbr.rel (0) target = $region17
    $region16: #{tpu_custom_call.1} parent=1 // pred_region
      %28 = dma.done [#allocation4], 2048
    $region17: #{tpu_custom_call.1} parent=1 // pred_fallthru
      _
    %vm29 = vcmask 146432
    %30 = vst.msk [vmem:[#allocation2] sm:$0xff] %vm29, 0.0
    %31 = vst.msk [vmem:[#allocation2 + $0x8] sm:$0xff] %vm29, 0.0
    %vm32 = vcmask 140288
    %33 = vst.msk [vmem:[#allocation2 + $0x10] sm:$0x3] %vm32, 0.0
    %34 = vst.msk [vmem:[#allocation2 + $0x18] sm:$0xff] %vm29, 0.0
    %35 = vst.msk [vmem:[#allocation2 + $0x20] sm:$0xff] %vm29, 0.0
    %36 = vst.msk [vmem:[#allocation2 + $0x28] sm:$0x3] %vm32, 0.0
    %37 = vst.msk [vmem:[#allocation2 + $0x30] sm:$0xff] %vm29, 0.0
    %38 = vst.msk [vmem:[#allocation2 + $0x38] sm:$0xff] %vm29, 0.0
    %39 = vst.msk [vmem:[#allocation2 + $0x40] sm:$0x3] %vm32, 0.0
    %40 = vst.msk [vmem:[#allocation2 + $0x48] sm:$0xff] %vm29, 0.0
    %41 = vst.msk [vmem:[#allocation2 + $0x50] sm:$0xff] %vm29, 0.0
    %42 = vst.msk [vmem:[#allocation2 + $0x58] sm:$0x3] %vm32, 0.0
    %43 = vst.msk [vmem:[#allocation2 + $0x60] sm:$0xff] %vm29, 0.0
    %44 = vst.msk [vmem:[#allocation2 + $0x68] sm:$0xff] %vm29, 0.0
    %45 = vst.msk [vmem:[#allocation2 + $0x70] sm:$0x3] %vm32, 0.0
    %46 = vst.msk [vmem:[#allocation2 + $0x78] sm:$0xff] %vm29, 0.0
    %47 = vst.msk [vmem:[#allocation2 + $0x80] sm:$0xff] %vm29, 0.0
    %48 = vst.msk [vmem:[#allocation2 + $0x88] sm:$0x3] %vm32, 0.0
    %49 = vst.msk [vmem:[#allocation2 + $0x90] sm:$0xff] %vm29, 0.0
    %50 = vst.msk [vmem:[#allocation2 + $0x98] sm:$0xff] %vm29, 0.0
    %51 = vst.msk [vmem:[#allocation2 + $0xa0] sm:$0x3] %vm32, 0.0
    %52 = vst.msk [vmem:[#allocation2 + $0xa8] sm:$0xff] %vm29, 0.0
    %53 = vst.msk [vmem:[#allocation2 + $0xb0] sm:$0xff] %vm29, 0.0
    %54 = vst.msk [vmem:[#allocation2 + $0xb8] sm:$0x3] %vm32, 0.0
    %v55 = vld [vmem:[#allocation3] sm:$0xff]
    %v56 = vld [vmem:[#allocation3 + $0x8] sm:$0xff]
    %v57 = vld [vmem:[#allocation3 + $0x10] sm:$0xff]
    %v58 = vld [vmem:[#allocation3 + $0x18] sm:$0xff]
    %v59 = vld [vmem:[#allocation3 + $0x20] sm:$0xff]
    %v60 = vld [vmem:[#allocation3 + $0x28] sm:$0xff]
    %v61 = vld [vmem:[#allocation3 + $0x30] sm:$0xff]
    %v62 = vld [vmem:[#allocation3 + $0x38] sm:$0xff]
    %v63 = vld [vmem:[#allocation3 + $0x40] sm:$0xff]
    %v64 = vld [vmem:[#allocation3 + $0x48] sm:$0xff]
    %v65 = vld [vmem:[#allocation3 + $0x50] sm:$0xff]
    %v66 = vld [vmem:[#allocation3 + $0x58] sm:$0xff]
    %v67 = vld [vmem:[#allocation3 + $0x60] sm:$0xff]
    %v68 = vld [vmem:[#allocation3 + $0x68] sm:$0xff]
    %v69 = vld [vmem:[#allocation3 + $0x70] sm:$0xff]
    %v70 = vld [vmem:[#allocation3 + $0x78] sm:$0xff]
    %87 = vrot.lane.b32.xlu0 %v55, 1
    %v88 = vpop.permute.xlu0 %87
    %89 = vrot.lane.b32.xlu0 %v56, 1
    %v90 = vpop.permute.xlu0 %89
    %91 = vrot.lane.b32.xlu0 %v57, 1
    %v92 = vpop.permute.xlu0 %91
    %93 = vrot.lane.b32.xlu0 %v58, 1
    %v94 = vpop.permute.xlu0 %93
    %95 = vrot.lane.b32.xlu0 %v59, 1
    %v96 = vpop.permute.xlu0 %95
    %97 = vrot.lane.b32.xlu0 %v60, 1
    %v98 = vpop.permute.xlu0 %97
    %99 = vrot.lane.b32.xlu0 %v61, 1
    %v100 = vpop.permute.xlu0 %99
    %101 = vrot.lane.b32.xlu0 %v62, 1
    %v102 = vpop.permute.xlu0 %101
    %103 = vrot.lane.b32.xlu0 %v63, 1
    %v104 = vpop.permute.xlu0 %103
    %105 = vrot.lane.b32.xlu0 %v64, 1
    %v106 = vpop.permute.xlu0 %105
    %107 = vrot.lane.b32.xlu0 %v65, 1
    %v108 = vpop.permute.xlu0 %107
    %109 = vrot.lane.b32.xlu0 %v66, 1
    %v110 = vpop.permute.xlu0 %109
    %111 = vrot.lane.b32.xlu0 %v67, 1
    %v112 = vpop.permute.xlu0 %111
    %113 = vrot.lane.b32.xlu0 %v68, 1
    %v114 = vpop.permute.xlu0 %113
    %115 = vrot.lane.b32.xlu0 %v69, 1
    %v116 = vpop.permute.xlu0 %115
    %117 = vrot.lane.b32.xlu0 %v70, 1
    %v118 = vpop.permute.xlu0 %117
    %vm135 = vcmask 138248
    %136 = vst.msk [vmem:[#allocation2 + $0x1] sm:$0xff] %vm135, %v88
    %137 = vst.msk [vmem:[#allocation2 + $0x9] sm:$0xff] %vm135, %v90
    %138 = vst.msk [vmem:[#allocation2 + $0x19] sm:$0xff] %vm135, %v92
    %139 = vst.msk [vmem:[#allocation2 + $0x21] sm:$0xff] %vm135, %v94
    %140 = vst.msk [vmem:[#allocation2 + $0x31] sm:$0xff] %vm135, %v96
    %141 = vst.msk [vmem:[#allocation2 + $0x39] sm:$0xff] %vm135, %v98
    %142 = vst.msk [vmem:[#allocation2 + $0x49] sm:$0xff] %vm135, %v100
    %143 = vst.msk [vmem:[#allocation2 + $0x51] sm:$0xff] %vm135, %v102
    %144 = vst.msk [vmem:[#allocation2 + $0x61] sm:$0xff] %vm135, %v104
    %145 = vst.msk [vmem:[#allocation2 + $0x69] sm:$0xff] %vm135, %v106
    %146 = vst.msk [vmem:[#allocation2 + $0x79] sm:$0xff] %vm135, %v108
    %147 = vst.msk [vmem:[#allocation2 + $0x81] sm:$0xff] %vm135, %v110
    %148 = vst.msk [vmem:[#allocation2 + $0x91] sm:$0xff] %vm135, %v112
    %149 = vst.msk [vmem:[#allocation2 + $0x99] sm:$0xff] %vm135, %v114
    %150 = vst.msk [vmem:[#allocation2 + $0xa9] sm:$0xff] %vm135, %v116
    %151 = vst.msk [vmem:[#allocation2 + $0xb1] sm:$0xff] %vm135, %v118
    %v152 = vld [vmem:[#allocation2] sm:$0xff]
    %v153 = vld [vmem:[#allocation2 + $0x8] sm:$0xff]
    %v154 = vld [vmem:[#allocation2 + $0x10] sm:$0x3]
    %v155 = vld [vmem:[#allocation2 + $0x18] sm:$0xff]
    %v156 = vld [vmem:[#allocation2 + $0x20] sm:$0xff]
    %v157 = vld [vmem:[#allocation2 + $0x28] sm:$0x3]
    %v158 = vld [vmem:[#allocation2 + $0x30] sm:$0xff]
    %v159 = vld [vmem:[#allocation2 + $0x38] sm:$0xff]
    %v160 = vld [vmem:[#allocation2 + $0x40] sm:$0x3]
    %v161 = vld [vmem:[#allocation2 + $0x48] sm:$0xff]
    %v162 = vld [vmem:[#allocation2 + $0x50] sm:$0xff]
    %v163 = vld [vmem:[#allocation2 + $0x58] sm:$0x3]
    %v164 = vld [vmem:[#allocation2 + $0x60] sm:$0xff]
    %v165 = vld [vmem:[#allocation2 + $0x68] sm:$0xff]
    %v166 = vld [vmem:[#allocation2 + $0x70] sm:$0x3]
    %v167 = vld [vmem:[#allocation2 + $0x78] sm:$0xff]
    %v168 = vld [vmem:[#allocation2 + $0x80] sm:$0xff]
    %v169 = vld [vmem:[#allocation2 + $0x88] sm:$0x3]
    %v170 = vld [vmem:[#allocation2 + $0x90] sm:$0xff]
    %v171 = vld [vmem:[#allocation2 + $0x98] sm:$0xff]
    %v172 = vld [vmem:[#allocation2 + $0xa0] sm:$0x3]
    %v173 = vld [vmem:[#allocation2 + $0xa8] sm:$0xff]
    %v174 = vld [vmem:[#allocation2 + $0xb0] sm:$0xff]
    %v175 = vld [vmem:[#allocation2 + $0xb8] sm:$0x3]
    %v176 = vcombine.low %v152, %v158
    %v177 = vcombine.high %v152, %v158
    %v179 = vunpack.c.l.s4 1983009808
    %v180 = vunpack.c.0.s8 %v179
    %v181 = vlaneseq
    %v182 = vshrl.u32 %v181, 7
    %v183 = vsub.s32 %v180, %v182
    %v184 = vrot.slane %v176, %v183
    %v186 = vunpack.c.l.s4 1983009808
    %v187 = vunpack.c.0.s8 %v186
    %v188 = vlaneseq
    %v189 = vshrl.u32 %v188, 7
    %v190 = vsub.s32 %v187, %v189
    %v191 = vrot.slane %v177, %v190
    %v192 = vcombine.low %v155, %v161
    %v193 = vcombine.high %v155, %v161
    %v195 = vunpack.c.l.s4 1983009808
    %v196 = vunpack.c.0.s8 %v195
    %v197 = vlaneseq
    %v198 = vshrl.u32 %v197, 7
    %v199 = vsub.s32 %v196, %v198
    %v200 = vrot.slane %v192, %v199
    %v202 = vunpack.c.l.s4 1983009808
    %v203 = vunpack.c.0.s8 %v202
    %v204 = vlaneseq
    %v205 = vshrl.u32 %v204, 7
    %v206 = vsub.s32 %v203, %v205
    %v207 = vrot.slane %v193, %v206
    %v208 = vcombine.low %v184, %v200
    %v209 = vcombine.high %v184, %v200
    %v211 = vunpack.c.l.s4 1934713408
    %v212 = vunpack.c.0.s8 %v211
    %v213 = vlaneseq
    %v214 = vshrl.u32 %v213, 7
    %v215 = vsub.s32 %v212, %v214
    %v216 = vrot.slane %v208, %v215
    %v218 = vunpack.c.l.s4 1934713408
    %v219 = vunpack.c.0.s8 %v218
    %v220 = vlaneseq
    %v221 = vshrl.u32 %v220, 7
    %v222 = vsub.s32 %v219, %v221
    %v223 = vrot.slane %v209, %v222
    %v224 = vcombine.low %v191, %v207
    %v225 = vcombine.high %v191, %v207
    %v227 = vunpack.c.l.s4 1934713408
    %v228 = vunpack.c.0.s8 %v227
    %v229 = vlaneseq
    %v230 = vshrl.u32 %v229, 7
    %v231 = vsub.s32 %v228, %v230
    %v232 = vrot.slane %v224, %v231
    %v234 = vunpack.c.l.s4 1934713408
    %v235 = vunpack.c.0.s8 %v234
    %v236 = vlaneseq
    %v237 = vshrl.u32 %v236, 7
    %v238 = vsub.s32 %v235, %v237
    %v239 = vrot.slane %v225, %v238
    %v240 = vcombine.high %v216, 0.0
    %v241 = vcombine.high %v223, 0.0
    %v242 = vcombine.high %v232, 0.0
    %v243 = vcombine.high %v239, 0.0
    %v244 = vcombine.low %v153, %v159
    %v245 = vcombine.high %v153, %v159
    %v247 = vunpack.c.l.s4 1983009808
    %v248 = vunpack.c.0.s8 %v247
    %v249 = vlaneseq
    %v250 = vshrl.u32 %v249, 7
    %v251 = vsub.s32 %v248, %v250
    %v252 = vrot.slane %v244, %v251
    %v254 = vunpack.c.l.s4 1983009808
    %v255 = vunpack.c.0.s8 %v254
    %v256 = vlaneseq
    %v257 = vshrl.u32 %v256, 7
    %v258 = vsub.s32 %v255, %v257
    %v259 = vrot.slane %v245, %v258
    %v260 = vcombine.low %v156, %v162
    %v261 = vcombine.high %v156, %v162
    %v263 = vunpack.c.l.s4 1983009808
    %v264 = vunpack.c.0.s8 %v263
    %v265 = vlaneseq
    %v266 = vshrl.u32 %v265, 7
    %v267 = vsub.s32 %v264, %v266
    %v268 = vrot.slane %v260, %v267
    %v270 = vunpack.c.l.s4 1983009808
    %v271 = vunpack.c.0.s8 %v270
    %v272 = vlaneseq
    %v273 = vshrl.u32 %v272, 7
    %v274 = vsub.s32 %v271, %v273
    %v275 = vrot.slane %v261, %v274
    %v276 = vcombine.low %v252, %v268
    %v277 = vcombine.high %v252, %v268
    %v279 = vunpack.c.l.s4 1934713408
    %v280 = vunpack.c.0.s8 %v279
    %v281 = vlaneseq
    %v282 = vshrl.u32 %v281, 7
    %v283 = vsub.s32 %v280, %v282
    %v284 = vrot.slane %v276, %v283
    %v286 = vunpack.c.l.s4 1934713408
    %v287 = vunpack.c.0.s8 %v286
    %v288 = vlaneseq
    %v289 = vshrl.u32 %v288, 7
    %v290 = vsub.s32 %v287, %v289
    %v291 = vrot.slane %v277, %v290
    %v292 = vcombine.low %v259, %v275
    %v293 = vcombine.high %v259, %v275
    %v295 = vunpack.c.l.s4 1934713408
    %v296 = vunpack.c.0.s8 %v295
    %v297 = vlaneseq
    %v298 = vshrl.u32 %v297, 7
    %v299 = vsub.s32 %v296, %v298
    %v300 = vrot.slane %v292, %v299
    %v302 = vunpack.c.l.s4 1934713408
    %v303 = vunpack.c.0.s8 %v302
    %v304 = vlaneseq
    %v305 = vshrl.u32 %v304, 7
    %v306 = vsub.s32 %v303, %v305
    %v307 = vrot.slane %v293, %v306
    %v308 = vcombine.high %v284, 0.0
    %v309 = vcombine.high %v291, 0.0
    %v310 = vcombine.high %v300, 0.0
    %v311 = vcombine.high %v307, 0.0
    %313 = vrot.lane.b32.xlu0 %v240, 16
    %v314 = vpop.permute.xlu0 %313
    %317 = vrot.lane.b32.xlu0 %v223, 32
    %v318 = vpop.permute.xlu0 %317
    %321 = vrot.lane.b32.xlu0 %v241, 48
    %v322 = vpop.permute.xlu0 %321
    %325 = vrot.lane.b32.xlu0 %v232, 64
    %v326 = vpop.permute.xlu0 %325
    %329 = vrot.lane.b32.xlu0 %v242, 80
    %v330 = vpop.permute.xlu0 %329
    %333 = vrot.lane.b32.xlu0 %v239, 96
    %v334 = vpop.permute.xlu0 %333
    %337 = vrot.lane.b32.xlu0 %v243, 112
    %v338 = vpop.permute.xlu0 %337
    %341 = vrot.lane.b32.xlu0 %v308, 16
    %v342 = vpop.permute.xlu0 %341
    %345 = vrot.lane.b32.xlu0 %v291, 32
    %v346 = vpop.permute.xlu0 %345
    %349 = vrot.lane.b32.xlu0 %v309, 48
    %v350 = vpop.permute.xlu0 %349
    %353 = vrot.lane.b32.xlu0 %v300, 64
    %v354 = vpop.permute.xlu0 %353
    %357 = vrot.lane.b32.xlu0 %v310, 80
    %v358 = vpop.permute.xlu0 %357
    %361 = vrot.lane.b32.xlu0 %v307, 96
    %v362 = vpop.permute.xlu0 %361
    %365 = vrot.lane.b32.xlu0 %v311, 112
    %v366 = vpop.permute.xlu0 %365
    %vm368 = vcmask 130048
    %v369 = vsel %vm368, %v216, %v314
    %vm370 = vcmask 261120
    %v371 = vsel %vm370, %v369, %v318
    %vm372 = vcmask 392192
    %v373 = vsel %vm372, %v371, %v322
    %vm374 = vcmask 523264
    %v375 = vsel %vm374, %v373, %v326
    %vm376 = vcmask 654336
    %v377 = vsel %vm376, %v375, %v330
    %vm378 = vcmask 785408
    %v379 = vsel %vm378, %v377, %v334
    %vm380 = vcmask 916480
    %v381 = vsel %vm380, %v379, %v338
    %v382 = vsel %vm368, %v284, %v342
    %v383 = vsel %vm370, %v382, %v346
    %v384 = vsel %vm372, %v383, %v350
    %v385 = vsel %vm374, %v384, %v354
    %v386 = vsel %vm376, %v385, %v358
    %v387 = vsel %vm378, %v386, %v362
    %v388 = vsel %vm380, %v387, %v366
    %v389 = vcombine.low %v164, %v170
    %v390 = vcombine.high %v164, %v170
    %v392 = vunpack.c.l.s4 1983009808
    %v393 = vunpack.c.0.s8 %v392
    %v394 = vlaneseq
    %v395 = vshrl.u32 %v394, 7
    %v396 = vsub.s32 %v393, %v395
    %v397 = vrot.slane %v389, %v396
    %v399 = vunpack.c.l.s4 1983009808
    %v400 = vunpack.c.0.s8 %v399
    %v401 = vlaneseq
    %v402 = vshrl.u32 %v401, 7
    %v403 = vsub.s32 %v400, %v402
    %v404 = vrot.slane %v390, %v403
    %v405 = vcombine.low %v167, %v173
    %v406 = vcombine.high %v167, %v173
    %v408 = vunpack.c.l.s4 1983009808
    %v409 = vunpack.c.0.s8 %v408
    %v410 = vlaneseq
    %v411 = vshrl.u32 %v410, 7
    %v412 = vsub.s32 %v409, %v411
    %v413 = vrot.slane %v405, %v412
    %v415 = vunpack.c.l.s4 1983009808
    %v416 = vunpack.c.0.s8 %v415
    %v417 = vlaneseq
    %v418 = vshrl.u32 %v417, 7
    %v419 = vsub.s32 %v416, %v418
    %v420 = vrot.slane %v406, %v419
    %v421 = vcombine.low %v397, %v413
    %v422 = vcombine.high %v397, %v413
    %v424 = vunpack.c.l.s4 1934713408
    %v425 = vunpack.c.0.s8 %v424
    %v426 = vlaneseq
    %v427 = vshrl.u32 %v426, 7
    %v428 = vsub.s32 %v425, %v427
    %v429 = vrot.slane %v421, %v428
    %v431 = vunpack.c.l.s4 1934713408
    %v432 = vunpack.c.0.s8 %v431
    %v433 = vlaneseq
    %v434 = vshrl.u32 %v433, 7
    %v435 = vsub.s32 %v432, %v434
    %v436 = vrot.slane %v422, %v435
    %v437 = vcombine.low %v404, %v420
    %v438 = vcombine.high %v404, %v420
    %v440 = vunpack.c.l.s4 1934713408
    %v441 = vunpack.c.0.s8 %v440
    %v442 = vlaneseq
    %v443 = vshrl.u32 %v442, 7
    %v444 = vsub.s32 %v441, %v443
    %v445 = vrot.slane %v437, %v444
    %v447 = vunpack.c.l.s4 1934713408
    %v448 = vunpack.c.0.s8 %v447
    %v449 = vlaneseq
    %v450 = vshrl.u32 %v449, 7
    %v451 = vsub.s32 %v448, %v450
    %v452 = vrot.slane %v438, %v451
    %v453 = vcombine.high %v429, 0.0
    %v454 = vcombine.high %v436, 0.0
    %v455 = vcombine.high %v445, 0.0
    %v456 = vcombine.high %v452, 0.0
    %v457 = vcombine.low %v165, %v171
    %v458 = vcombine.high %v165, %v171
    %v460 = vunpack.c.l.s4 1983009808
    %v461 = vunpack.c.0.s8 %v460
    %v462 = vlaneseq
    %v463 = vshrl.u32 %v462, 7
    %v464 = vsub.s32 %v461, %v463
    %v465 = vrot.slane %v457, %v464
    %v467 = vunpack.c.l.s4 1983009808
    %v468 = vunpack.c.0.s8 %v467
    %v469 = vlaneseq
    %v470 = vshrl.u32 %v469, 7
    %v471 = vsub.s32 %v468, %v470
    %v472 = vrot.slane %v458, %v471
    %v473 = vcombine.low %v168, %v174
    %v474 = vcombine.high %v168, %v174
    %v476 = vunpack.c.l.s4 1983009808
    %v477 = vunpack.c.0.s8 %v476
    %v478 = vlaneseq
    %v479 = vshrl.u32 %v478, 7
    %v480 = vsub.s32 %v477, %v479
    %v481 = vrot.slane %v473, %v480
    %v483 = vunpack.c.l.s4 1983009808
    %v484 = vunpack.c.0.s8 %v483
    %v485 = vlaneseq
    %v486 = vshrl.u32 %v485, 7
    %v487 = vsub.s32 %v484, %v486
    %v488 = vrot.slane %v474, %v487
    %v489 = vcombine.low %v465, %v481
    %v490 = vcombine.high %v465, %v481
    %v492 = vunpack.c.l.s4 1934713408
    %v493 = vunpack.c.0.s8 %v492
    %v494 = vlaneseq
    %v495 = vshrl.u32 %v494, 7
    %v496 = vsub.s32 %v493, %v495
    %v497 = vrot.slane %v489, %v496
    %v499 = vunpack.c.l.s4 1934713408
    %v500 = vunpack.c.0.s8 %v499
    %v501 = vlaneseq
    %v502 = vshrl.u32 %v501, 7
    %v503 = vsub.s32 %v500, %v502
    %v504 = vrot.slane %v490, %v503
    %v505 = vcombine.low %v472, %v488
    %v506 = vcombine.high %v472, %v488
    %v508 = vunpack.c.l.s4 1934713408
    %v509 = vunpack.c.0.s8 %v508
    %v510 = vlaneseq
    %v511 = vshrl.u32 %v510, 7
    %v512 = vsub.s32 %v509, %v511
    %v513 = vrot.slane %v505, %v512
    %v515 = vunpack.c.l.s4 1934713408
    %v516 = vunpack.c.0.s8 %v515
    %v517 = vlaneseq
    %v518 = vshrl.u32 %v517, 7
    %v519 = vsub.s32 %v516, %v518
    %v520 = vrot.slane %v506, %v519
    %v521 = vcombine.high %v497, 0.0
    %v522 = vcombine.high %v504, 0.0
    %v523 = vcombine.high %v513, 0.0
    %v524 = vcombine.high %v520, 0.0
    %526 = vrot.lane.b32.xlu0 %v453, 16
    %v527 = vpop.permute.xlu0 %526
    %530 = vrot.lane.b32.xlu0 %v436, 32
    %v531 = vpop.permute.xlu0 %530
    %534 = vrot.lane.b32.xlu0 %v454, 48
    %v535 = vpop.permute.xlu0 %534
    %538 = vrot.lane.b32.xlu0 %v445, 64
    %v539 = vpop.permute.xlu0 %538
    %542 = vrot.lane.b32.xlu0 %v455, 80
    %v543 = vpop.permute.xlu0 %542
    %546 = vrot.lane.b32.xlu0 %v452, 96
    %v547 = vpop.permute.xlu0 %546
    %550 = vrot.lane.b32.xlu0 %v456, 112
    %v551 = vpop.permute.xlu0 %550
    %554 = vrot.lane.b32.xlu0 %v521, 16
    %v555 = vpop.permute.xlu0 %554
    %558 = vrot.lane.b32.xlu0 %v504, 32
    %v559 = vpop.permute.xlu0 %558
    %562 = vrot.lane.b32.xlu0 %v522, 48
    %v563 = vpop.permute.xlu0 %562
    %566 = vrot.lane.b32.xlu0 %v513, 64
    %v567 = vpop.permute.xlu0 %566
    %570 = vrot.lane.b32.xlu0 %v523, 80
    %v571 = vpop.permute.xlu0 %570
    %574 = vrot.lane.b32.xlu0 %v520, 96
    %v575 = vpop.permute.xlu0 %574
    %578 = vrot.lane.b32.xlu0 %v524, 112
    %v579 = vpop.permute.xlu0 %578
    %v581 = vsel %vm368, %v429, %v527
    %v582 = vsel %vm370, %v581, %v531
    %v583 = vsel %vm372, %v582, %v535
    %v584 = vsel %vm374, %v583, %v539
    %v585 = vsel %vm376, %v584, %v543
    %v586 = vsel %vm378, %v585, %v547
    %v587 = vsel %vm380, %v586, %v551
    %v588 = vsel %vm368, %v497, %v555
    %v589 = vsel %vm370, %v588, %v559
    %v590 = vsel %vm372, %v589, %v563
    %v591 = vsel %vm374, %v590, %v567
    %v592 = vsel %vm376, %v591, %v571
    %v593 = vsel %vm378, %v592, %v575
    %v594 = vsel %vm380, %v593, %v579
    %603 = vrot.lane.b32.xlu0 %v152, 127
    %v604 = vpop.permute.xlu0 %603
    %605 = vrot.lane.b32.xlu0 %v153, 127
    %v606 = vpop.permute.xlu0 %605
    %607 = vrot.lane.b32.xlu0 %v155, 127
    %v608 = vpop.permute.xlu0 %607
    %609 = vrot.lane.b32.xlu0 %v156, 127
    %v610 = vpop.permute.xlu0 %609
    %611 = vrot.lane.b32.xlu0 %v158, 127
    %v612 = vpop.permute.xlu0 %611
    %613 = vrot.lane.b32.xlu0 %v159, 127
    %v614 = vpop.permute.xlu0 %613
    %615 = vrot.lane.b32.xlu0 %v161, 127
    %v616 = vpop.permute.xlu0 %615
    %617 = vrot.lane.b32.xlu0 %v162, 127
    %v618 = vpop.permute.xlu0 %617
    %v627 = vcombine.low %v604, %v612
    %v628 = vcombine.high %v604, %v612
    %v630 = vunpack.c.l.s4 1983009808
    %v631 = vunpack.c.0.s8 %v630
    %v632 = vlaneseq
    %v633 = vshrl.u32 %v632, 7
    %v634 = vsub.s32 %v631, %v633
    %v635 = vrot.slane %v627, %v634
    %v637 = vunpack.c.l.s4 1983009808
    %v638 = vunpack.c.0.s8 %v637
    %v639 = vlaneseq
    %v640 = vshrl.u32 %v639, 7
    %v641 = vsub.s32 %v638, %v640
    %v642 = vrot.slane %v628, %v641
    %v643 = vcombine.low %v608, %v616
    %v644 = vcombine.high %v608, %v616
    %v646 = vunpack.c.l.s4 1983009808
    %v647 = vunpack.c.0.s8 %v646
    %v648 = vlaneseq
    %v649 = vshrl.u32 %v648, 7
    %v650 = vsub.s32 %v647, %v649
    %v651 = vrot.slane %v643, %v650
    %v653 = vunpack.c.l.s4 1983009808
    %v654 = vunpack.c.0.s8 %v653
    %v655 = vlaneseq
    %v656 = vshrl.u32 %v655, 7
    %v657 = vsub.s32 %v654, %v656
    %v658 = vrot.slane %v644, %v657
    %v659 = vcombine.low %v635, %v651
    %v660 = vcombine.high %v635, %v651
    %v662 = vunpack.c.l.s4 1934713408
    %v663 = vunpack.c.0.s8 %v662
    %v664 = vlaneseq
    %v665 = vshrl.u32 %v664, 7
    %v666 = vsub.s32 %v663, %v665
    %v667 = vrot.slane %v659, %v666
    %v669 = vunpack.c.l.s4 1934713408
    %v670 = vunpack.c.0.s8 %v669
    %v671 = vlaneseq
    %v672 = vshrl.u32 %v671, 7
    %v673 = vsub.s32 %v670, %v672
    %v674 = vrot.slane %v660, %v673
    %v675 = vcombine.low %v642, %v658
    %v676 = vcombine.high %v642, %v658
    %v678 = vunpack.c.l.s4 1934713408
    %v679 = vunpack.c.0.s8 %v678
    %v680 = vlaneseq
    %v681 = vshrl.u32 %v680, 7
    %v682 = vsub.s32 %v679, %v681
    %v683 = vrot.slane %v675, %v682
    %v685 = vunpack.c.l.s4 1934713408
    %v686 = vunpack.c.0.s8 %v685
    %v687 = vlaneseq
    %v688 = vshrl.u32 %v687, 7
    %v689 = vsub.s32 %v686, %v688
    %v690 = vrot.slane %v676, %v689
    %v691 = vcombine.high %v667, 0.0
    %v692 = vcombine.high %v674, 0.0
    %v693 = vcombine.high %v683, 0.0
    %v694 = vcombine.high %v690, 0.0
    %v695 = vcombine.low %v606, %v614
    %v696 = vcombine.high %v606, %v614
    %v698 = vunpack.c.l.s4 1983009808
    %v699 = vunpack.c.0.s8 %v698
    %v700 = vlaneseq
    %v701 = vshrl.u32 %v700, 7
    %v702 = vsub.s32 %v699, %v701
    %v703 = vrot.slane %v695, %v702
    %v705 = vunpack.c.l.s4 1983009808
    %v706 = vunpack.c.0.s8 %v705
    %v707 = vlaneseq
    %v708 = vshrl.u32 %v707, 7
    %v709 = vsub.s32 %v706, %v708
    %v710 = vrot.slane %v696, %v709
    %v711 = vcombine.low %v610, %v618
    %v712 = vcombine.high %v610, %v618
    %v714 = vunpack.c.l.s4 1983009808
    %v715 = vunpack.c.0.s8 %v714
    %v716 = vlaneseq
    %v717 = vshrl.u32 %v716, 7
    %v718 = vsub.s32 %v715, %v717
    %v719 = vrot.slane %v711, %v718
    %v721 = vunpack.c.l.s4 1983009808
    %v722 = vunpack.c.0.s8 %v721
    %v723 = vlaneseq
    %v724 = vshrl.u32 %v723, 7
    %v725 = vsub.s32 %v722, %v724
    %v726 = vrot.slane %v712, %v725
    %v727 = vcombine.low %v703, %v719
    %v728 = vcombine.high %v703, %v719
    %v730 = vunpack.c.l.s4 1934713408
    %v731 = vunpack.c.0.s8 %v730
    %v732 = vlaneseq
    %v733 = vshrl.u32 %v732, 7
    %v734 = vsub.s32 %v731, %v733
    %v735 = vrot.slane %v727, %v734
    %v737 = vunpack.c.l.s4 1934713408
    %v738 = vunpack.c.0.s8 %v737
    %v739 = vlaneseq
    %v740 = vshrl.u32 %v739, 7
    %v741 = vsub.s32 %v738, %v740
    %v742 = vrot.slane %v728, %v741
    %v743 = vcombine.low %v710, %v726
    %v744 = vcombine.high %v710, %v726
    %v746 = vunpack.c.l.s4 1934713408
    %v747 = vunpack.c.0.s8 %v746
    %v748 = vlaneseq
    %v749 = vshrl.u32 %v748, 7
    %v750 = vsub.s32 %v747, %v749
    %v751 = vrot.slane %v743, %v750
    %v753 = vunpack.c.l.s4 1934713408
    %v754 = vunpack.c.0.s8 %v753
    %v755 = vlaneseq
    %v756 = vshrl.u32 %v755, 7
    %v757 = vsub.s32 %v754, %v756
    %v758 = vrot.slane %v744, %v757
    %v759 = vcombine.high %v735, 0.0
    %v760 = vcombine.high %v742, 0.0
    %v761 = vcombine.high %v751, 0.0
    %v762 = vcombine.high %v758, 0.0
    %764 = vrot.lane.b32.xlu0 %v691, 16
    %v765 = vpop.permute.xlu0 %764
    %768 = vrot.lane.b32.xlu0 %v674, 32
    %v769 = vpop.permute.xlu0 %768
    %772 = vrot.lane.b32.xlu0 %v692, 48
    %v773 = vpop.permute.xlu0 %772
    %776 = vrot.lane.b32.xlu0 %v683, 64
    %v777 = vpop.permute.xlu0 %776
    %780 = vrot.lane.b32.xlu0 %v693, 80
    %v781 = vpop.permute.xlu0 %780
    %784 = vrot.lane.b32.xlu0 %v690, 96
    %v785 = vpop.permute.xlu0 %784
    %788 = vrot.lane.b32.xlu0 %v694, 112
    %v789 = vpop.permute.xlu0 %788
    %792 = vrot.lane.b32.xlu0 %v759, 16
    %v793 = vpop.permute.xlu0 %792
    %796 = vrot.lane.b32.xlu0 %v742, 32
    %v797 = vpop.permute.xlu0 %796
    %800 = vrot.lane.b32.xlu0 %v760, 48
    %v801 = vpop.permute.xlu0 %800
    %804 = vrot.lane.b32.xlu0 %v751, 64
    %v805 = vpop.permute.xlu0 %804
    %808 = vrot.lane.b32.xlu0 %v761, 80
    %v809 = vpop.permute.xlu0 %808
    %812 = vrot.lane.b32.xlu0 %v758, 96
    %v813 = vpop.permute.xlu0 %812
    %816 = vrot.lane.b32.xlu0 %v762, 112
    %v817 = vpop.permute.xlu0 %816
    %v819 = vsel %vm368, %v667, %v765
    %v820 = vsel %vm370, %v819, %v769
    %v821 = vsel %vm372, %v820, %v773
    %v822 = vsel %vm374, %v821, %v777
    %v823 = vsel %vm376, %v822, %v781
    %v824 = vsel %vm378, %v823, %v785
    %v825 = vsel %vm380, %v824, %v789
    %v826 = vsel %vm368, %v735, %v793
    %v827 = vsel %vm370, %v826, %v797
    %v828 = vsel %vm372, %v827, %v801
    %v829 = vsel %vm374, %v828, %v805
    %v830 = vsel %vm376, %v829, %v809
    %v831 = vsel %vm378, %v830, %v813
    %v832 = vsel %vm380, %v831, %v817
    %841 = vrot.lane.b32.xlu0 %v164, 127
    %v842 = vpop.permute.xlu0 %841
    %843 = vrot.lane.b32.xlu0 %v165, 127
    %v844 = vpop.permute.xlu0 %843
    %845 = vrot.lane.b32.xlu0 %v167, 127
    %v846 = vpop.permute.xlu0 %845
    %847 = vrot.lane.b32.xlu0 %v168, 127
    %v848 = vpop.permute.xlu0 %847
    %849 = vrot.lane.b32.xlu0 %v170, 127
    %v850 = vpop.permute.xlu0 %849
    %851 = vrot.lane.b32.xlu0 %v171, 127
    %v852 = vpop.permute.xlu0 %851
    %853 = vrot.lane.b32.xlu0 %v173, 127
    %v854 = vpop.permute.xlu0 %853
    %855 = vrot.lane.b32.xlu0 %v174, 127
    %v856 = vpop.permute.xlu0 %855
    %v865 = vcombine.low %v842, %v850
    %v866 = vcombine.high %v842, %v850
    %v868 = vunpack.c.l.s4 1983009808
    %v869 = vunpack.c.0.s8 %v868
    %v870 = vlaneseq
    %v871 = vshrl.u32 %v870, 7
    %v872 = vsub.s32 %v869, %v871
    %v873 = vrot.slane %v865, %v872
    %v875 = vunpack.c.l.s4 1983009808
    %v876 = vunpack.c.0.s8 %v875
    %v877 = vlaneseq
    %v878 = vshrl.u32 %v877, 7
    %v879 = vsub.s32 %v876, %v878
    %v880 = vrot.slane %v866, %v879
    %v881 = vcombine.low %v846, %v854
    %v882 = vcombine.high %v846, %v854
    %v884 = vunpack.c.l.s4 1983009808
    %v885 = vunpack.c.0.s8 %v884
    %v886 = vlaneseq
    %v887 = vshrl.u32 %v886, 7
    %v888 = vsub.s32 %v885, %v887
    %v889 = vrot.slane %v881, %v888
    %v891 = vunpack.c.l.s4 1983009808
    %v892 = vunpack.c.0.s8 %v891
    %v893 = vlaneseq
    %v894 = vshrl.u32 %v893, 7
    %v895 = vsub.s32 %v892, %v894
    %v896 = vrot.slane %v882, %v895
    %v897 = vcombine.low %v873, %v889
    %v898 = vcombine.high %v873, %v889
    %v900 = vunpack.c.l.s4 1934713408
    %v901 = vunpack.c.0.s8 %v900
    %v902 = vlaneseq
    %v903 = vshrl.u32 %v902, 7
    %v904 = vsub.s32 %v901, %v903
    %v905 = vrot.slane %v897, %v904
    %v907 = vunpack.c.l.s4 1934713408
    %v908 = vunpack.c.0.s8 %v907
    %v909 = vlaneseq
    %v910 = vshrl.u32 %v909, 7
    %v911 = vsub.s32 %v908, %v910
    %v912 = vrot.slane %v898, %v911
    %v913 = vcombine.low %v880, %v896
    %v914 = vcombine.high %v880, %v896
    %v916 = vunpack.c.l.s4 1934713408
    %v917 = vunpack.c.0.s8 %v916
    %v918 = vlaneseq
    %v919 = vshrl.u32 %v918, 7
    %v920 = vsub.s32 %v917, %v919
    %v921 = vrot.slane %v913, %v920
    %v923 = vunpack.c.l.s4 1934713408
    %v924 = vunpack.c.0.s8 %v923
    %v925 = vlaneseq
    %v926 = vshrl.u32 %v925, 7
    %v927 = vsub.s32 %v924, %v926
    %v928 = vrot.slane %v914, %v927
    %v929 = vcombine.high %v905, 0.0
    %v930 = vcombine.high %v912, 0.0
    %v931 = vcombine.high %v921, 0.0
    %v932 = vcombine.high %v928, 0.0
    %v933 = vcombine.low %v844, %v852
    %v934 = vcombine.high %v844, %v852
    %v936 = vunpack.c.l.s4 1983009808
    %v937 = vunpack.c.0.s8 %v936
    %v938 = vlaneseq
    %v939 = vshrl.u32 %v938, 7
    %v940 = vsub.s32 %v937, %v939
    %v941 = vrot.slane %v933, %v940
    %v943 = vunpack.c.l.s4 1983009808
    %v944 = vunpack.c.0.s8 %v943
    %v945 = vlaneseq
    %v946 = vshrl.u32 %v945, 7
    %v947 = vsub.s32 %v944, %v946
    %v948 = vrot.slane %v934, %v947
    %v949 = vcombine.low %v848, %v856
    %v950 = vcombine.high %v848, %v856
    %v952 = vunpack.c.l.s4 1983009808
    %v953 = vunpack.c.0.s8 %v952
    %v954 = vlaneseq
    %v955 = vshrl.u32 %v954, 7
    %v956 = vsub.s32 %v953, %v955
    %v957 = vrot.slane %v949, %v956
    %v959 = vunpack.c.l.s4 1983009808
    %v960 = vunpack.c.0.s8 %v959
    %v961 = vlaneseq
    %v962 = vshrl.u32 %v961, 7
    %v963 = vsub.s32 %v960, %v962
    %v964 = vrot.slane %v950, %v963
    %v965 = vcombine.low %v941, %v957
    %v966 = vcombine.high %v941, %v957
    %v968 = vunpack.c.l.s4 1934713408
    %v969 = vunpack.c.0.s8 %v968
    %v970 = vlaneseq
    %v971 = vshrl.u32 %v970, 7
    %v972 = vsub.s32 %v969, %v971
    %v973 = vrot.slane %v965, %v972
    %v975 = vunpack.c.l.s4 1934713408
    %v976 = vunpack.c.0.s8 %v975
    %v977 = vlaneseq
    %v978 = vshrl.u32 %v977, 7
    %v979 = vsub.s32 %v976, %v978
    %v980 = vrot.slane %v966, %v979
    %v981 = vcombine.low %v948, %v964
    %v982 = vcombine.high %v948, %v964
    %v984 = vunpack.c.l.s4 1934713408
    %v985 = vunpack.c.0.s8 %v984
    %v986 = vlaneseq
    %v987 = vshrl.u32 %v986, 7
    %v988 = vsub.s32 %v985, %v987
    %v989 = vrot.slane %v981, %v988
    %v991 = vunpack.c.l.s4 1934713408
    %v992 = vunpack.c.0.s8 %v991
    %v993 = vlaneseq
    %v994 = vshrl.u32 %v993, 7
    %v995 = vsub.s32 %v992, %v994
    %v996 = vrot.slane %v982, %v995
    %v997 = vcombine.high %v973, 0.0
    %v998 = vcombine.high %v980, 0.0
    %v999 = vcombine.high %v989, 0.0
    %v1000 = vcombine.high %v996, 0.0
    %1002 = vrot.lane.b32.xlu0 %v929, 16
    %v1003 = vpop.permute.xlu0 %1002
    %1006 = vrot.lane.b32.xlu0 %v912, 32
    %v1007 = vpop.permute.xlu0 %1006
    %1010 = vrot.lane.b32.xlu0 %v930, 48
    %v1011 = vpop.permute.xlu0 %1010
    %1014 = vrot.lane.b32.xlu0 %v921, 64
    %v1015 = vpop.permute.xlu0 %1014
    %1018 = vrot.lane.b32.xlu0 %v931, 80
    %v1019 = vpop.permute.xlu0 %1018
    %1022 = vrot.lane.b32.xlu0 %v928, 96
    %v1023 = vpop.permute.xlu0 %1022
    %1026 = vrot.lane.b32.xlu0 %v932, 112
    %v1027 = vpop.permute.xlu0 %1026
    %1030 = vrot.lane.b32.xlu0 %v997, 16
    %v1031 = vpop.permute.xlu0 %1030
    %1034 = vrot.lane.b32.xlu0 %v980, 32
    %v1035 = vpop.permute.xlu0 %1034
    %1038 = vrot.lane.b32.xlu0 %v998, 48
    %v1039 = vpop.permute.xlu0 %1038
    %1042 = vrot.lane.b32.xlu0 %v989, 64
    %v1043 = vpop.permute.xlu0 %1042
    %1046 = vrot.lane.b32.xlu0 %v999, 80
    %v1047 = vpop.permute.xlu0 %1046
    %1050 = vrot.lane.b32.xlu0 %v996, 96
    %v1051 = vpop.permute.xlu0 %1050
    %1054 = vrot.lane.b32.xlu0 %v1000, 112
    %v1055 = vpop.permute.xlu0 %1054
    %v1057 = vsel %vm368, %v905, %v1003
    %v1058 = vsel %vm370, %v1057, %v1007
    %v1059 = vsel %vm372, %v1058, %v1011
    %v1060 = vsel %vm374, %v1059, %v1015
    %v1061 = vsel %vm376, %v1060, %v1019
    %v1062 = vsel %vm378, %v1061, %v1023
    %v1063 = vsel %vm380, %v1062, %v1027
    %v1064 = vsel %vm368, %v973, %v1031
    %v1065 = vsel %vm370, %v1064, %v1035
    %v1066 = vsel %vm372, %v1065, %v1039
    %v1067 = vsel %vm374, %v1066, %v1043
    %v1068 = vsel %vm376, %v1067, %v1047
    %v1069 = vsel %vm378, %v1068, %v1051
    %v1070 = vsel %vm380, %v1069, %v1055
    %1071 = vrot.lane.b32.xlu0 %v152, 126
    %v1072 = vpop.permute.xlu0 %1071
    %1073 = vrot.lane.b32.xlu0 %v153, 126
    %v1074 = vpop.permute.xlu0 %1073
    %1075 = vrot.lane.b32.xlu0 %v155, 126
    %v1076 = vpop.permute.xlu0 %1075
    %1077 = vrot.lane.b32.xlu0 %v156, 126
    %v1078 = vpop.permute.xlu0 %1077
    %1079 = vrot.lane.b32.xlu0 %v158, 126
    %v1080 = vpop.permute.xlu0 %1079
    %1081 = vrot.lane.b32.xlu0 %v159, 126
    %v1082 = vpop.permute.xlu0 %1081
    %1083 = vrot.lane.b32.xlu0 %v161, 126
    %v1084 = vpop.permute.xlu0 %1083
    %1085 = vrot.lane.b32.xlu0 %v162, 126
    %v1086 = vpop.permute.xlu0 %1085
    %v1095 = vcombine.low %v1072, %v1080
    %v1096 = vcombine.high %v1072, %v1080
    %v1098 = vunpack.c.l.s4 1983009808
    %v1099 = vunpack.c.0.s8 %v1098
    %v1100 = vlaneseq
    %v1101 = vshrl.u32 %v1100, 7
    %v1102 = vsub.s32 %v1099, %v1101
    %v1103 = vrot.slane %v1095, %v1102
    %v1105 = vunpack.c.l.s4 1983009808
    %v1106 = vunpack.c.0.s8 %v1105
    %v1107 = vlaneseq
    %v1108 = vshrl.u32 %v1107, 7
    %v1109 = vsub.s32 %v1106, %v1108
    %v1110 = vrot.slane %v1096, %v1109
    %v1111 = vcombine.low %v1076, %v1084
    %v1112 = vcombine.high %v1076, %v1084
    %v1114 = vunpack.c.l.s4 1983009808
    %v1115 = vunpack.c.0.s8 %v1114
    %v1116 = vlaneseq
    %v1117 = vshrl.u32 %v1116, 7
    %v1118 = vsub.s32 %v1115, %v1117
    %v1119 = vrot.slane %v1111, %v1118
    %v1121 = vunpack.c.l.s4 1983009808
    %v1122 = vunpack.c.0.s8 %v1121
    %v1123 = vlaneseq
    %v1124 = vshrl.u32 %v1123, 7
    %v1125 = vsub.s32 %v1122, %v1124
    %v1126 = vrot.slane %v1112, %v1125
    %v1127 = vcombine.low %v1103, %v1119
    %v1128 = vcombine.high %v1103, %v1119
    %v1130 = vunpack.c.l.s4 1934713408
    %v1131 = vunpack.c.0.s8 %v1130
    %v1132 = vlaneseq
    %v1133 = vshrl.u32 %v1132, 7
    %v1134 = vsub.s32 %v1131, %v1133
    %v1135 = vrot.slane %v1127, %v1134
    %v1137 = vunpack.c.l.s4 1934713408
    %v1138 = vunpack.c.0.s8 %v1137
    %v1139 = vlaneseq
    %v1140 = vshrl.u32 %v1139, 7
    %v1141 = vsub.s32 %v1138, %v1140
    %v1142 = vrot.slane %v1128, %v1141
    %v1143 = vcombine.low %v1110, %v1126
    %v1144 = vcombine.high %v1110, %v1126
    %v1146 = vunpack.c.l.s4 1934713408
    %v1147 = vunpack.c.0.s8 %v1146
    %v1148 = vlaneseq
    %v1149 = vshrl.u32 %v1148, 7
    %v1150 = vsub.s32 %v1147, %v1149
    %v1151 = vrot.slane %v1143, %v1150
    %v1153 = vunpack.c.l.s4 1934713408
    %v1154 = vunpack.c.0.s8 %v1153
    %v1155 = vlaneseq
    %v1156 = vshrl.u32 %v1155, 7
    %v1157 = vsub.s32 %v1154, %v1156
    %v1158 = vrot.slane %v1144, %v1157
    %v1159 = vcombine.high %v1135, 0.0
    %v1160 = vcombine.high %v1142, 0.0
    %v1161 = vcombine.high %v1151, 0.0
    %v1162 = vcombine.high %v1158, 0.0
    %v1163 = vcombine.low %v1074, %v1082
    %v1164 = vcombine.high %v1074, %v1082
    %v1166 = vunpack.c.l.s4 1983009808
    %v1167 = vunpack.c.0.s8 %v1166
    %v1168 = vlaneseq
    %v1169 = vshrl.u32 %v1168, 7
    %v1170 = vsub.s32 %v1167, %v1169
    %v1171 = vrot.slane %v1163, %v1170
    %v1173 = vunpack.c.l.s4 1983009808
    %v1174 = vunpack.c.0.s8 %v1173
    %v1175 = vlaneseq
    %v1176 = vshrl.u32 %v1175, 7
    %v1177 = vsub.s32 %v1174, %v1176
    %v1178 = vrot.slane %v1164, %v1177
    %v1179 = vcombine.low %v1078, %v1086
    %v1180 = vcombine.high %v1078, %v1086
    %v1182 = vunpack.c.l.s4 1983009808
    %v1183 = vunpack.c.0.s8 %v1182
    %v1184 = vlaneseq
    %v1185 = vshrl.u32 %v1184, 7
    %v1186 = vsub.s32 %v1183, %v1185
    %v1187 = vrot.slane %v1179, %v1186
    %v1189 = vunpack.c.l.s4 1983009808
    %v1190 = vunpack.c.0.s8 %v1189
    %v1191 = vlaneseq
    %v1192 = vshrl.u32 %v1191, 7
    %v1193 = vsub.s32 %v1190, %v1192
    %v1194 = vrot.slane %v1180, %v1193
    %v1195 = vcombine.low %v1171, %v1187
    %v1196 = vcombine.high %v1171, %v1187
    %v1198 = vunpack.c.l.s4 1934713408
    %v1199 = vunpack.c.0.s8 %v1198
    %v1200 = vlaneseq
    %v1201 = vshrl.u32 %v1200, 7
    %v1202 = vsub.s32 %v1199, %v1201
    %v1203 = vrot.slane %v1195, %v1202
    %v1205 = vunpack.c.l.s4 1934713408
    %v1206 = vunpack.c.0.s8 %v1205
    %v1207 = vlaneseq
    %v1208 = vshrl.u32 %v1207, 7
    %v1209 = vsub.s32 %v1206, %v1208
    %v1210 = vrot.slane %v1196, %v1209
    %v1211 = vcombine.low %v1178, %v1194
    %v1212 = vcombine.high %v1178, %v1194
    %v1214 = vunpack.c.l.s4 1934713408
    %v1215 = vunpack.c.0.s8 %v1214
    %v1216 = vlaneseq
    %v1217 = vshrl.u32 %v1216, 7
    %v1218 = vsub.s32 %v1215, %v1217
    %v1219 = vrot.slane %v1211, %v1218
    %v1221 = vunpack.c.l.s4 1934713408
    %v1222 = vunpack.c.0.s8 %v1221
    %v1223 = vlaneseq
    %v1224 = vshrl.u32 %v1223, 7
    %v1225 = vsub.s32 %v1222, %v1224
    %v1226 = vrot.slane %v1212, %v1225
    %v1227 = vcombine.high %v1203, 0.0
    %v1228 = vcombine.high %v1210, 0.0
    %v1229 = vcombine.high %v1219, 0.0
    %v1230 = vcombine.high %v1226, 0.0
    %1232 = vrot.lane.b32.xlu0 %v1159, 16
    %v1233 = vpop.permute.xlu0 %1232
    %1236 = vrot.lane.b32.xlu0 %v1142, 32
    %v1237 = vpop.permute.xlu0 %1236
    %1240 = vrot.lane.b32.xlu0 %v1160, 48
    %v1241 = vpop.permute.xlu0 %1240
    %1244 = vrot.lane.b32.xlu0 %v1151, 64
    %v1245 = vpop.permute.xlu0 %1244
    %1248 = vrot.lane.b32.xlu0 %v1161, 80
    %v1249 = vpop.permute.xlu0 %1248
    %1252 = vrot.lane.b32.xlu0 %v1158, 96
    %v1253 = vpop.permute.xlu0 %1252
    %1256 = vrot.lane.b32.xlu0 %v1162, 112
    %v1257 = vpop.permute.xlu0 %1256
    %1260 = vrot.lane.b32.xlu0 %v1227, 16
    %v1261 = vpop.permute.xlu0 %1260
    %1264 = vrot.lane.b32.xlu0 %v1210, 32
    %v1265 = vpop.permute.xlu0 %1264
    %1268 = vrot.lane.b32.xlu0 %v1228, 48
    %v1269 = vpop.permute.xlu0 %1268
    %1272 = vrot.lane.b32.xlu0 %v1219, 64
    %v1273 = vpop.permute.xlu0 %1272
    %1276 = vrot.lane.b32.xlu0 %v1229, 80
    %v1277 = vpop.permute.xlu0 %1276
    %1280 = vrot.lane.b32.xlu0 %v1226, 96
    %v1281 = vpop.permute.xlu0 %1280
    %1284 = vrot.lane.b32.xlu0 %v1230, 112
    %v1285 = vpop.permute.xlu0 %1284
    %v1287 = vsel %vm368, %v1135, %v1233
    %v1288 = vsel %vm370, %v1287, %v1237
    %v1289 = vsel %vm372, %v1288, %v1241
    %v1290 = vsel %vm374, %v1289, %v1245
    %v1291 = vsel %vm376, %v1290, %v1249
    %v1292 = vsel %vm378, %v1291, %v1253
    %v1293 = vsel %vm380, %v1292, %v1257
    %v1294 = vsel %vm368, %v1203, %v1261
    %v1295 = vsel %vm370, %v1294, %v1265
    %v1296 = vsel %vm372, %v1295, %v1269
    %v1297 = vsel %vm374, %v1296, %v1273
    %v1298 = vsel %vm376, %v1297, %v1277
    %v1299 = vsel %vm378, %v1298, %v1281
    %v1300 = vsel %vm380, %v1299, %v1285
    %1301 = vrot.lane.b32.xlu0 %v164, 126
    %v1302 = vpop.permute.xlu0 %1301
    %1303 = vrot.lane.b32.xlu0 %v165, 126
    %v1304 = vpop.permute.xlu0 %1303
    %1305 = vrot.lane.b32.xlu0 %v167, 126
    %v1306 = vpop.permute.xlu0 %1305
    %1307 = vrot.lane.b32.xlu0 %v168, 126
    %v1308 = vpop.permute.xlu0 %1307
    %1309 = vrot.lane.b32.xlu0 %v170, 126
    %v1310 = vpop.permute.xlu0 %1309
    %1311 = vrot.lane.b32.xlu0 %v171, 126
    %v1312 = vpop.permute.xlu0 %1311
    %1313 = vrot.lane.b32.xlu0 %v173, 126
    %v1314 = vpop.permute.xlu0 %1313
    %1315 = vrot.lane.b32.xlu0 %v174, 126
    %v1316 = vpop.permute.xlu0 %1315
    %v1325 = vcombine.low %v1302, %v1310
    %v1326 = vcombine.high %v1302, %v1310
    %v1328 = vunpack.c.l.s4 1983009808
    %v1329 = vunpack.c.0.s8 %v1328
    %v1330 = vlaneseq
    %v1331 = vshrl.u32 %v1330, 7
    %v1332 = vsub.s32 %v1329, %v1331
    %v1333 = vrot.slane %v1325, %v1332
    %v1335 = vunpack.c.l.s4 1983009808
    %v1336 = vunpack.c.0.s8 %v1335
    %v1337 = vlaneseq
    %v1338 = vshrl.u32 %v1337, 7
    %v1339 = vsub.s32 %v1336, %v1338
    %v1340 = vrot.slane %v1326, %v1339
    %v1341 = vcombine.low %v1306, %v1314
    %v1342 = vcombine.high %v1306, %v1314
    %v1344 = vunpack.c.l.s4 1983009808
    %v1345 = vunpack.c.0.s8 %v1344
    %v1346 = vlaneseq
    %v1347 = vshrl.u32 %v1346, 7
    %v1348 = vsub.s32 %v1345, %v1347
    %v1349 = vrot.slane %v1341, %v1348
    %v1351 = vunpack.c.l.s4 1983009808
    %v1352 = vunpack.c.0.s8 %v1351
    %v1353 = vlaneseq
    %v1354 = vshrl.u32 %v1353, 7
    %v1355 = vsub.s32 %v1352, %v1354
    %v1356 = vrot.slane %v1342, %v1355
    %v1357 = vcombine.low %v1333, %v1349
    %v1358 = vcombine.high %v1333, %v1349
    %v1360 = vunpack.c.l.s4 1934713408
    %v1361 = vunpack.c.0.s8 %v1360
    %v1362 = vlaneseq
    %v1363 = vshrl.u32 %v1362, 7
    %v1364 = vsub.s32 %v1361, %v1363
    %v1365 = vrot.slane %v1357, %v1364
    %v1367 = vunpack.c.l.s4 1934713408
    %v1368 = vunpack.c.0.s8 %v1367
    %v1369 = vlaneseq
    %v1370 = vshrl.u32 %v1369, 7
    %v1371 = vsub.s32 %v1368, %v1370
    %v1372 = vrot.slane %v1358, %v1371
    %v1373 = vcombine.low %v1340, %v1356
    %v1374 = vcombine.high %v1340, %v1356
    %v1376 = vunpack.c.l.s4 1934713408
    %v1377 = vunpack.c.0.s8 %v1376
    %v1378 = vlaneseq
    %v1379 = vshrl.u32 %v1378, 7
    %v1380 = vsub.s32 %v1377, %v1379
    %v1381 = vrot.slane %v1373, %v1380
    %v1383 = vunpack.c.l.s4 1934713408
    %v1384 = vunpack.c.0.s8 %v1383
    %v1385 = vlaneseq
    %v1386 = vshrl.u32 %v1385, 7
    %v1387 = vsub.s32 %v1384, %v1386
    %v1388 = vrot.slane %v1374, %v1387
    %v1389 = vcombine.high %v1365, 0.0
    %v1390 = vcombine.high %v1372, 0.0
    %v1391 = vcombine.high %v1381, 0.0
    %v1392 = vcombine.high %v1388, 0.0
    %v1393 = vcombine.low %v1304, %v1312
    %v1394 = vcombine.high %v1304, %v1312
    %v1396 = vunpack.c.l.s4 1983009808
    %v1397 = vunpack.c.0.s8 %v1396
    %v1398 = vlaneseq
    %v1399 = vshrl.u32 %v1398, 7
    %v1400 = vsub.s32 %v1397, %v1399
    %v1401 = vrot.slane %v1393, %v1400
    %v1403 = vunpack.c.l.s4 1983009808
    %v1404 = vunpack.c.0.s8 %v1403
    %v1405 = vlaneseq
    %v1406 = vshrl.u32 %v1405, 7
    %v1407 = vsub.s32 %v1404, %v1406
    %v1408 = vrot.slane %v1394, %v1407
    %v1409 = vcombine.low %v1308, %v1316
    %v1410 = vcombine.high %v1308, %v1316
    %v1412 = vunpack.c.l.s4 1983009808
    %v1413 = vunpack.c.0.s8 %v1412
    %v1414 = vlaneseq
    %v1415 = vshrl.u32 %v1414, 7
    %v1416 = vsub.s32 %v1413, %v1415
    %v1417 = vrot.slane %v1409, %v1416
    %v1419 = vunpack.c.l.s4 1983009808
    %v1420 = vunpack.c.0.s8 %v1419
    %v1421 = vlaneseq
    %v1422 = vshrl.u32 %v1421, 7
    %v1423 = vsub.s32 %v1420, %v1422
    %v1424 = vrot.slane %v1410, %v1423
    %v1425 = vcombine.low %v1401, %v1417
    %v1426 = vcombine.high %v1401, %v1417
    %v1428 = vunpack.c.l.s4 1934713408
    %v1429 = vunpack.c.0.s8 %v1428
    %v1430 = vlaneseq
    %v1431 = vshrl.u32 %v1430, 7
    %v1432 = vsub.s32 %v1429, %v1431
    %v1433 = vrot.slane %v1425, %v1432
    %v1435 = vunpack.c.l.s4 1934713408
    %v1436 = vunpack.c.0.s8 %v1435
    %v1437 = vlaneseq
    %v1438 = vshrl.u32 %v1437, 7
    %v1439 = vsub.s32 %v1436, %v1438
    %v1440 = vrot.slane %v1426, %v1439
    %v1441 = vcombine.low %v1408, %v1424
    %v1442 = vcombine.high %v1408, %v1424
    %v1444 = vunpack.c.l.s4 1934713408
    %v1445 = vunpack.c.0.s8 %v1444
    %v1446 = vlaneseq
    %v1447 = vshrl.u32 %v1446, 7
    %v1448 = vsub.s32 %v1445, %v1447
    %v1449 = vrot.slane %v1441, %v1448
    %v1451 = vunpack.c.l.s4 1934713408
    %v1452 = vunpack.c.0.s8 %v1451
    %v1453 = vlaneseq
    %v1454 = vshrl.u32 %v1453, 7
    %v1455 = vsub.s32 %v1452, %v1454
    %v1456 = vrot.slane %v1442, %v1455
    %v1457 = vcombine.high %v1433, 0.0
    %v1458 = vcombine.high %v1440, 0.0
    %v1459 = vcombine.high %v1449, 0.0
    %v1460 = vcombine.high %v1456, 0.0
    %1462 = vrot.lane.b32.xlu0 %v1389, 16
    %v1463 = vpop.permute.xlu0 %1462
    %1466 = vrot.lane.b32.xlu0 %v1372, 32
    %v1467 = vpop.permute.xlu0 %1466
    %1470 = vrot.lane.b32.xlu0 %v1390, 48
    %v1471 = vpop.permute.xlu0 %1470
    %1474 = vrot.lane.b32.xlu0 %v1381, 64
    %v1475 = vpop.permute.xlu0 %1474
    %1478 = vrot.lane.b32.xlu0 %v1391, 80
    %v1479 = vpop.permute.xlu0 %1478
    %1482 = vrot.lane.b32.xlu0 %v1388, 96
    %v1483 = vpop.permute.xlu0 %1482
    %1486 = vrot.lane.b32.xlu0 %v1392, 112
    %v1487 = vpop.permute.xlu0 %1486
    %1490 = vrot.lane.b32.xlu0 %v1457, 16
    %v1491 = vpop.permute.xlu0 %1490
    %1494 = vrot.lane.b32.xlu0 %v1440, 32
    %v1495 = vpop.permute.xlu0 %1494
    %1498 = vrot.lane.b32.xlu0 %v1458, 48
    %v1499 = vpop.permute.xlu0 %1498
    %1502 = vrot.lane.b32.xlu0 %v1449, 64
    %v1503 = vpop.permute.xlu0 %1502
    %1506 = vrot.lane.b32.xlu0 %v1459, 80
    %v1507 = vpop.permute.xlu0 %1506
    %1510 = vrot.lane.b32.xlu0 %v1456, 96
    %v1511 = vpop.permute.xlu0 %1510
    %1514 = vrot.lane.b32.xlu0 %v1460, 112
    %v1515 = vpop.permute.xlu0 %1514
    %v1517 = vsel %vm368, %v1365, %v1463
    %v1518 = vsel %vm370, %v1517, %v1467
    %v1519 = vsel %vm372, %v1518, %v1471
    %v1520 = vsel %vm374, %v1519, %v1475
    %v1521 = vsel %vm376, %v1520, %v1479
    %v1522 = vsel %vm378, %v1521, %v1483
    %v1523 = vsel %vm380, %v1522, %v1487
    %v1524 = vsel %vm368, %v1433, %v1491
    %v1525 = vsel %vm370, %v1524, %v1495
    %v1526 = vsel %vm372, %v1525, %v1499
    %v1527 = vsel %vm374, %v1526, %v1503
    %v1528 = vsel %vm376, %v1527, %v1507
    %v1529 = vsel %vm378, %v1528, %v1511
    %v1530 = vsel %vm380, %v1529, %v1515
    %vm1535 = vcmask 1046528
    %v1536 = vrot.slane %v152, 1
    %v1537 = vrot.slane %v153, 1
    %v1538 = vsel %vm1535, %v1536, %v1537
    %v1539 = vrot.slane %v154, 1
    %v1540 = vsel %vm1535, %v1537, %v1539
    %v1541 = vrot.slane %v155, 1
    %v1542 = vrot.slane %v156, 1
    %v1543 = vsel %vm1535, %v1541, %v1542
    %v1544 = vrot.slane %v157, 1
    %v1545 = vsel %vm1535, %v1542, %v1544
    %v1546 = vrot.slane %v158, 1
    %v1547 = vrot.slane %v159, 1
    %v1548 = vsel %vm1535, %v1546, %v1547
    %v1549 = vrot.slane %v160, 1
    %v1550 = vsel %vm1535, %v1547, %v1549
    %v1551 = vrot.slane %v161, 1
    %v1552 = vrot.slane %v162, 1
    %v1553 = vsel %vm1535, %v1551, %v1552
    %v1554 = vrot.slane %v163, 1
    %v1555 = vsel %vm1535, %v1552, %v1554
    %v1564 = vcombine.low %v1538, %v1548
    %v1565 = vcombine.high %v1538, %v1548
    %v1567 = vunpack.c.l.s4 1983009808
    %v1568 = vunpack.c.0.s8 %v1567
    %v1569 = vlaneseq
    %v1570 = vshrl.u32 %v1569, 7
    %v1571 = vsub.s32 %v1568, %v1570
    %v1572 = vrot.slane %v1564, %v1571
    %v1574 = vunpack.c.l.s4 1983009808
    %v1575 = vunpack.c.0.s8 %v1574
    %v1576 = vlaneseq
    %v1577 = vshrl.u32 %v1576, 7
    %v1578 = vsub.s32 %v1575, %v1577
    %v1579 = vrot.slane %v1565, %v1578
    %v1580 = vcombine.low %v1543, %v1553
    %v1581 = vcombine.high %v1543, %v1553
    %v1583 = vunpack.c.l.s4 1983009808
    %v1584 = vunpack.c.0.s8 %v1583
    %v1585 = vlaneseq
    %v1586 = vshrl.u32 %v1585, 7
    %v1587 = vsub.s32 %v1584, %v1586
    %v1588 = vrot.slane %v1580, %v1587
    %v1590 = vunpack.c.l.s4 1983009808
    %v1591 = vunpack.c.0.s8 %v1590
    %v1592 = vlaneseq
    %v1593 = vshrl.u32 %v1592, 7
    %v1594 = vsub.s32 %v1591, %v1593
    %v1595 = vrot.slane %v1581, %v1594
    %v1596 = vcombine.low %v1572, %v1588
    %v1597 = vcombine.high %v1572, %v1588
    %v1599 = vunpack.c.l.s4 1934713408
    %v1600 = vunpack.c.0.s8 %v1599
    %v1601 = vlaneseq
    %v1602 = vshrl.u32 %v1601, 7
    %v1603 = vsub.s32 %v1600, %v1602
    %v1604 = vrot.slane %v1596, %v1603
    %v1606 = vunpack.c.l.s4 1934713408
    %v1607 = vunpack.c.0.s8 %v1606
    %v1608 = vlaneseq
    %v1609 = vshrl.u32 %v1608, 7
    %v1610 = vsub.s32 %v1607, %v1609
    %v1611 = vrot.slane %v1597, %v1610
    %v1612 = vcombine.low %v1579, %v1595
    %v1613 = vcombine.high %v1579, %v1595
    %v1615 = vunpack.c.l.s4 1934713408
    %v1616 = vunpack.c.0.s8 %v1615
    %v1617 = vlaneseq
    %v1618 = vshrl.u32 %v1617, 7
    %v1619 = vsub.s32 %v1616, %v1618
    %v1620 = vrot.slane %v1612, %v1619
    %v1622 = vunpack.c.l.s4 1934713408
    %v1623 = vunpack.c.0.s8 %v1622
    %v1624 = vlaneseq
    %v1625 = vshrl.u32 %v1624, 7
    %v1626 = vsub.s32 %v1623, %v1625
    %v1627 = vrot.slane %v1613, %v1626
    %v1628 = vcombine.high %v1604, 0.0
    %v1629 = vcombine.high %v1611, 0.0
    %v1630 = vcombine.high %v1620, 0.0
    %v1631 = vcombine.high %v1627, 0.0
    %v1632 = vcombine.low %v1540, %v1550
    %v1633 = vcombine.high %v1540, %v1550
    %v1635 = vunpack.c.l.s4 1983009808
    %v1636 = vunpack.c.0.s8 %v1635
    %v1637 = vlaneseq
    %v1638 = vshrl.u32 %v1637, 7
    %v1639 = vsub.s32 %v1636, %v1638
    %v1640 = vrot.slane %v1632, %v1639
    %v1642 = vunpack.c.l.s4 1983009808
    %v1643 = vunpack.c.0.s8 %v1642
    %v1644 = vlaneseq
    %v1645 = vshrl.u32 %v1644, 7
    %v1646 = vsub.s32 %v1643, %v1645
    %v1647 = vrot.slane %v1633, %v1646
    %v1648 = vcombine.low %v1545, %v1555
    %v1649 = vcombine.high %v1545, %v1555
    %v1651 = vunpack.c.l.s4 1983009808
    %v1652 = vunpack.c.0.s8 %v1651
    %v1653 = vlaneseq
    %v1654 = vshrl.u32 %v1653, 7
    %v1655 = vsub.s32 %v1652, %v1654
    %v1656 = vrot.slane %v1648, %v1655
    %v1658 = vunpack.c.l.s4 1983009808
    %v1659 = vunpack.c.0.s8 %v1658
    %v1660 = vlaneseq
    %v1661 = vshrl.u32 %v1660, 7
    %v1662 = vsub.s32 %v1659, %v1661
    %v1663 = vrot.slane %v1649, %v1662
    %v1664 = vcombine.low %v1640, %v1656
    %v1665 = vcombine.high %v1640, %v1656
    %v1667 = vunpack.c.l.s4 1934713408
    %v1668 = vunpack.c.0.s8 %v1667
    %v1669 = vlaneseq
    %v1670 = vshrl.u32 %v1669, 7
    %v1671 = vsub.s32 %v1668, %v1670
    %v1672 = vrot.slane %v1664, %v1671
    %v1674 = vunpack.c.l.s4 1934713408
    %v1675 = vunpack.c.0.s8 %v1674
    %v1676 = vlaneseq
    %v1677 = vshrl.u32 %v1676, 7
    %v1678 = vsub.s32 %v1675, %v1677
    %v1679 = vrot.slane %v1665, %v1678
    %v1680 = vcombine.low %v1647, %v1663
    %v1681 = vcombine.high %v1647, %v1663
    %v1683 = vunpack.c.l.s4 1934713408
    %v1684 = vunpack.c.0.s8 %v1683
    %v1685 = vlaneseq
    %v1686 = vshrl.u32 %v1685, 7
    %v1687 = vsub.s32 %v1684, %v1686
    %v1688 = vrot.slane %v1680, %v1687
    %v1690 = vunpack.c.l.s4 1934713408
    %v1691 = vunpack.c.0.s8 %v1690
    %v1692 = vlaneseq
    %v1693 = vshrl.u32 %v1692, 7
    %v1694 = vsub.s32 %v1691, %v1693
    %v1695 = vrot.slane %v1681, %v1694
    %v1696 = vcombine.high %v1672, 0.0
    %v1697 = vcombine.high %v1679, 0.0
    %v1698 = vcombine.high %v1688, 0.0
    %v1699 = vcombine.high %v1695, 0.0
    %1701 = vrot.lane.b32.xlu0 %v1628, 16
    %v1702 = vpop.permute.xlu0 %1701
    %1705 = vrot.lane.b32.xlu0 %v1611, 32
    %v1706 = vpop.permute.xlu0 %1705
    %1709 = vrot.lane.b32.xlu0 %v1629, 48
    %v1710 = vpop.permute.xlu0 %1709
    %1713 = vrot.lane.b32.xlu0 %v1620, 64
    %v1714 = vpop.permute.xlu0 %1713
    %1717 = vrot.lane.b32.xlu0 %v1630, 80
    %v1718 = vpop.permute.xlu0 %1717
    %1721 = vrot.lane.b32.xlu0 %v1627, 96
    %v1722 = vpop.permute.xlu0 %1721
    %1725 = vrot.lane.b32.xlu0 %v1631, 112
    %v1726 = vpop.permute.xlu0 %1725
    %1729 = vrot.lane.b32.xlu0 %v1696, 16
    %v1730 = vpop.permute.xlu0 %1729
    %1733 = vrot.lane.b32.xlu0 %v1679, 32
    %v1734 = vpop.permute.xlu0 %1733
    %1737 = vrot.lane.b32.xlu0 %v1697, 48
    %v1738 = vpop.permute.xlu0 %1737
    %1741 = vrot.lane.b32.xlu0 %v1688, 64
    %v1742 = vpop.permute.xlu0 %1741
    %1745 = vrot.lane.b32.xlu0 %v1698, 80
    %v1746 = vpop.permute.xlu0 %1745
    %1749 = vrot.lane.b32.xlu0 %v1695, 96
    %v1750 = vpop.permute.xlu0 %1749
    %1753 = vrot.lane.b32.xlu0 %v1699, 112
    %v1754 = vpop.permute.xlu0 %1753
    %v1756 = vsel %vm368, %v1604, %v1702
    %v1757 = vsel %vm370, %v1756, %v1706
    %v1758 = vsel %vm372, %v1757, %v1710
    %v1759 = vsel %vm374, %v1758, %v1714
    %v1760 = vsel %vm376, %v1759, %v1718
    %v1761 = vsel %vm378, %v1760, %v1722
    %v1762 = vsel %vm380, %v1761, %v1726
    %v1763 = vsel %vm368, %v1672, %v1730
    %v1764 = vsel %vm370, %v1763, %v1734
    %v1765 = vsel %vm372, %v1764, %v1738
    %v1766 = vsel %vm374, %v1765, %v1742
    %v1767 = vsel %vm376, %v1766, %v1746
    %v1768 = vsel %vm378, %v1767, %v1750
    %v1769 = vsel %vm380, %v1768, %v1754
    %v1774 = vrot.slane %v164, 1
    %v1775 = vrot.slane %v165, 1
    %v1776 = vsel %vm1535, %v1774, %v1775
    %v1777 = vrot.slane %v166, 1
    %v1778 = vsel %vm1535, %v1775, %v1777
    %v1779 = vrot.slane %v167, 1
    %v1780 = vrot.slane %v168, 1
    %v1781 = vsel %vm1535, %v1779, %v1780
    %v1782 = vrot.slane %v169, 1
    %v1783 = vsel %vm1535, %v1780, %v1782
    %v1784 = vrot.slane %v170, 1
    %v1785 = vrot.slane %v171, 1
    %v1786 = vsel %vm1535, %v1784, %v1785
    %v1787 = vrot.slane %v172, 1
    %v1788 = vsel %vm1535, %v1785, %v1787
    %v1789 = vrot.slane %v173, 1
    %v1790 = vrot.slane %v174, 1
    %v1791 = vsel %vm1535, %v1789, %v1790
    %v1792 = vrot.slane %v175, 1
    %v1793 = vsel %vm1535, %v1790, %v1792
    %v1802 = vcombine.low %v1776, %v1786
    %v1803 = vcombine.high %v1776, %v1786
    %v1805 = vunpack.c.l.s4 1983009808
    %v1806 = vunpack.c.0.s8 %v1805
    %v1807 = vlaneseq
    %v1808 = vshrl.u32 %v1807, 7
    %v1809 = vsub.s32 %v1806, %v1808
    %v1810 = vrot.slane %v1802, %v1809
    %v1812 = vunpack.c.l.s4 1983009808
    %v1813 = vunpack.c.0.s8 %v1812
    %v1814 = vlaneseq
    %v1815 = vshrl.u32 %v1814, 7
    %v1816 = vsub.s32 %v1813, %v1815
    %v1817 = vrot.slane %v1803, %v1816
    %v1818 = vcombine.low %v1781, %v1791
    %v1819 = vcombine.high %v1781, %v1791
    %v1821 = vunpack.c.l.s4 1983009808
    %v1822 = vunpack.c.0.s8 %v1821
    %v1823 = vlaneseq
    %v1824 = vshrl.u32 %v1823, 7
    %v1825 = vsub.s32 %v1822, %v1824
    %v1826 = vrot.slane %v1818, %v1825
    %v1828 = vunpack.c.l.s4 1983009808
    %v1829 = vunpack.c.0.s8 %v1828
    %v1830 = vlaneseq
    %v1831 = vshrl.u32 %v1830, 7
    %v1832 = vsub.s32 %v1829, %v1831
    %v1833 = vrot.slane %v1819, %v1832
    %v1834 = vcombine.low %v1810, %v1826
    %v1835 = vcombine.high %v1810, %v1826
    %v1837 = vunpack.c.l.s4 1934713408
    %v1838 = vunpack.c.0.s8 %v1837
    %v1839 = vlaneseq
    %v1840 = vshrl.u32 %v1839, 7
    %v1841 = vsub.s32 %v1838, %v1840
    %v1842 = vrot.slane %v1834, %v1841
    %v1844 = vunpack.c.l.s4 1934713408
    %v1845 = vunpack.c.0.s8 %v1844
    %v1846 = vlaneseq
    %v1847 = vshrl.u32 %v1846, 7
    %v1848 = vsub.s32 %v1845, %v1847
    %v1849 = vrot.slane %v1835, %v1848
    %v1850 = vcombine.low %v1817, %v1833
    %v1851 = vcombine.high %v1817, %v1833
    %v1853 = vunpack.c.l.s4 1934713408
    %v1854 = vunpack.c.0.s8 %v1853
    %v1855 = vlaneseq
    %v1856 = vshrl.u32 %v1855, 7
    %v1857 = vsub.s32 %v1854, %v1856
    %v1858 = vrot.slane %v1850, %v1857
    %v1860 = vunpack.c.l.s4 1934713408
    %v1861 = vunpack.c.0.s8 %v1860
    %v1862 = vlaneseq
    %v1863 = vshrl.u32 %v1862, 7
    %v1864 = vsub.s32 %v1861, %v1863
    %v1865 = vrot.slane %v1851, %v1864
    %v1866 = vcombine.high %v1842, 0.0
    %v1867 = vcombine.high %v1849, 0.0
    %v1868 = vcombine.high %v1858, 0.0
    %v1869 = vcombine.high %v1865, 0.0
    %v1870 = vcombine.low %v1778, %v1788
    %v1871 = vcombine.high %v1778, %v1788
    %v1873 = vunpack.c.l.s4 1983009808
    %v1874 = vunpack.c.0.s8 %v1873
    %v1875 = vlaneseq
    %v1876 = vshrl.u32 %v1875, 7
    %v1877 = vsub.s32 %v1874, %v1876
    %v1878 = vrot.slane %v1870, %v1877
    %v1880 = vunpack.c.l.s4 1983009808
    %v1881 = vunpack.c.0.s8 %v1880
    %v1882 = vlaneseq
    %v1883 = vshrl.u32 %v1882, 7
    %v1884 = vsub.s32 %v1881, %v1883
    %v1885 = vrot.slane %v1871, %v1884
    %v1886 = vcombine.low %v1783, %v1793
    %v1887 = vcombine.high %v1783, %v1793
    %v1889 = vunpack.c.l.s4 1983009808
    %v1890 = vunpack.c.0.s8 %v1889
    %v1891 = vlaneseq
    %v1892 = vshrl.u32 %v1891, 7
    %v1893 = vsub.s32 %v1890, %v1892
    %v1894 = vrot.slane %v1886, %v1893
    %v1896 = vunpack.c.l.s4 1983009808
    %v1897 = vunpack.c.0.s8 %v1896
    %v1898 = vlaneseq
    %v1899 = vshrl.u32 %v1898, 7
    %v1900 = vsub.s32 %v1897, %v1899
    %v1901 = vrot.slane %v1887, %v1900
    %v1902 = vcombine.low %v1878, %v1894
    %v1903 = vcombine.high %v1878, %v1894
    %v1905 = vunpack.c.l.s4 1934713408
    %v1906 = vunpack.c.0.s8 %v1905
    %v1907 = vlaneseq
    %v1908 = vshrl.u32 %v1907, 7
    %v1909 = vsub.s32 %v1906, %v1908
    %v1910 = vrot.slane %v1902, %v1909
    %v1912 = vunpack.c.l.s4 1934713408
    %v1913 = vunpack.c.0.s8 %v1912
    %v1914 = vlaneseq
    %v1915 = vshrl.u32 %v1914, 7
    %v1916 = vsub.s32 %v1913, %v1915
    %v1917 = vrot.slane %v1903, %v1916
    %v1918 = vcombine.low %v1885, %v1901
    %v1919 = vcombine.high %v1885, %v1901
    %v1921 = vunpack.c.l.s4 1934713408
    %v1922 = vunpack.c.0.s8 %v1921
    %v1923 = vlaneseq
    %v1924 = vshrl.u32 %v1923, 7
    %v1925 = vsub.s32 %v1922, %v1924
    %v1926 = vrot.slane %v1918, %v1925
    %v1928 = vunpack.c.l.s4 1934713408
    %v1929 = vunpack.c.0.s8 %v1928
    %v1930 = vlaneseq
    %v1931 = vshrl.u32 %v1930, 7
    %v1932 = vsub.s32 %v1929, %v1931
    %v1933 = vrot.slane %v1919, %v1932
    %v1934 = vcombine.high %v1910, 0.0
    %v1935 = vcombine.high %v1917, 0.0
    %v1936 = vcombine.high %v1926, 0.0
    %v1937 = vcombine.high %v1933, 0.0
    %1939 = vrot.lane.b32.xlu0 %v1866, 16
    %v1940 = vpop.permute.xlu0 %1939
    %1943 = vrot.lane.b32.xlu0 %v1849, 32
    %v1944 = vpop.permute.xlu0 %1943
    %1947 = vrot.lane.b32.xlu0 %v1867, 48
    %v1948 = vpop.permute.xlu0 %1947
    %1951 = vrot.lane.b32.xlu0 %v1858, 64
    %v1952 = vpop.permute.xlu0 %1951
    %1955 = vrot.lane.b32.xlu0 %v1868, 80
    %v1956 = vpop.permute.xlu0 %1955
    %1959 = vrot.lane.b32.xlu0 %v1865, 96
    %v1960 = vpop.permute.xlu0 %1959
    %1963 = vrot.lane.b32.xlu0 %v1869, 112
    %v1964 = vpop.permute.xlu0 %1963
    %1967 = vrot.lane.b32.xlu0 %v1934, 16
    %v1968 = vpop.permute.xlu0 %1967
    %1971 = vrot.lane.b32.xlu0 %v1917, 32
    %v1972 = vpop.permute.xlu0 %1971
    %1975 = vrot.lane.b32.xlu0 %v1935, 48
    %v1976 = vpop.permute.xlu0 %1975
    %1979 = vrot.lane.b32.xlu0 %v1926, 64
    %v1980 = vpop.permute.xlu0 %1979
    %1983 = vrot.lane.b32.xlu0 %v1936, 80
    %v1984 = vpop.permute.xlu0 %1983
    %1987 = vrot.lane.b32.xlu0 %v1933, 96
    %v1988 = vpop.permute.xlu0 %1987
    %1991 = vrot.lane.b32.xlu0 %v1937, 112
    %v1992 = vpop.permute.xlu0 %1991
    %v1994 = vsel %vm368, %v1842, %v1940
    %v1995 = vsel %vm370, %v1994, %v1944
    %v1996 = vsel %vm372, %v1995, %v1948
    %v1997 = vsel %vm374, %v1996, %v1952
    %v1998 = vsel %vm376, %v1997, %v1956
    %v1999 = vsel %vm378, %v1998, %v1960
    %v2000 = vsel %vm380, %v1999, %v1964
    %v2001 = vsel %vm368, %v1910, %v1968
    %v2002 = vsel %vm370, %v2001, %v1972
    %v2003 = vsel %vm372, %v2002, %v1976
    %v2004 = vsel %vm374, %v2003, %v1980
    %v2005 = vsel %vm376, %v2004, %v1984
    %v2006 = vsel %vm378, %v2005, %v1988
    %v2007 = vsel %vm380, %v2006, %v1992
    %2008 = vrot.lane.b32.xlu0 %v1538, 127
    %v2009 = vpop.permute.xlu0 %2008
    %2010 = vrot.lane.b32.xlu0 %v1540, 127
    %v2011 = vpop.permute.xlu0 %2010
    %2012 = vrot.lane.b32.xlu0 %v1543, 127
    %v2013 = vpop.permute.xlu0 %2012
    %2014 = vrot.lane.b32.xlu0 %v1545, 127
    %v2015 = vpop.permute.xlu0 %2014
    %2016 = vrot.lane.b32.xlu0 %v1548, 127
    %v2017 = vpop.permute.xlu0 %2016
    %2018 = vrot.lane.b32.xlu0 %v1550, 127
    %v2019 = vpop.permute.xlu0 %2018
    %2020 = vrot.lane.b32.xlu0 %v1553, 127
    %v2021 = vpop.permute.xlu0 %2020
    %2022 = vrot.lane.b32.xlu0 %v1555, 127
    %v2023 = vpop.permute.xlu0 %2022
    %v2032 = vcombine.low %v2009, %v2017
    %v2033 = vcombine.high %v2009, %v2017
    %v2035 = vunpack.c.l.s4 1983009808
    %v2036 = vunpack.c.0.s8 %v2035
    %v2037 = vlaneseq
    %v2038 = vshrl.u32 %v2037, 7
    %v2039 = vsub.s32 %v2036, %v2038
    %v2040 = vrot.slane %v2032, %v2039
    %v2042 = vunpack.c.l.s4 1983009808
    %v2043 = vunpack.c.0.s8 %v2042
    %v2044 = vlaneseq
    %v2045 = vshrl.u32 %v2044, 7
    %v2046 = vsub.s32 %v2043, %v2045
    %v2047 = vrot.slane %v2033, %v2046
    %v2048 = vcombine.low %v2013, %v2021
    %v2049 = vcombine.high %v2013, %v2021
    %v2051 = vunpack.c.l.s4 1983009808
    %v2052 = vunpack.c.0.s8 %v2051
    %v2053 = vlaneseq
    %v2054 = vshrl.u32 %v2053, 7
    %v2055 = vsub.s32 %v2052, %v2054
    %v2056 = vrot.slane %v2048, %v2055
    %v2058 = vunpack.c.l.s4 1983009808
    %v2059 = vunpack.c.0.s8 %v2058
    %v2060 = vlaneseq
    %v2061 = vshrl.u32 %v2060, 7
    %v2062 = vsub.s32 %v2059, %v2061
    %v2063 = vrot.slane %v2049, %v2062
    %v2064 = vcombine.low %v2040, %v2056
    %v2065 = vcombine.high %v2040, %v2056
    %v2067 = vunpack.c.l.s4 1934713408
    %v2068 = vunpack.c.0.s8 %v2067
    %v2069 = vlaneseq
    %v2070 = vshrl.u32 %v2069, 7
    %v2071 = vsub.s32 %v2068, %v2070
    %v2072 = vrot.slane %v2064, %v2071
    %v2074 = vunpack.c.l.s4 1934713408
    %v2075 = vunpack.c.0.s8 %v2074
    %v2076 = vlaneseq
    %v2077 = vshrl.u32 %v2076, 7
    %v2078 = vsub.s32 %v2075, %v2077
    %v2079 = vrot.slane %v2065, %v2078
    %v2080 = vcombine.low %v2047, %v2063
    %v2081 = vcombine.high %v2047, %v2063
    %v2083 = vunpack.c.l.s4 1934713408
    %v2084 = vunpack.c.0.s8 %v2083
    %v2085 = vlaneseq
    %v2086 = vshrl.u32 %v2085, 7
    %v2087 = vsub.s32 %v2084, %v2086
    %v2088 = vrot.slane %v2080, %v2087
    %v2090 = vunpack.c.l.s4 1934713408
    %v2091 = vunpack.c.0.s8 %v2090
    %v2092 = vlaneseq
    %v2093 = vshrl.u32 %v2092, 7
    %v2094 = vsub.s32 %v2091, %v2093
    %v2095 = vrot.slane %v2081, %v2094
    %v2096 = vcombine.high %v2072, 0.0
    %v2097 = vcombine.high %v2079, 0.0
    %v2098 = vcombine.high %v2088, 0.0
    %v2099 = vcombine.high %v2095, 0.0
    %v2100 = vcombine.low %v2011, %v2019
    %v2101 = vcombine.high %v2011, %v2019
    %v2103 = vunpack.c.l.s4 1983009808
    %v2104 = vunpack.c.0.s8 %v2103
    %v2105 = vlaneseq
    %v2106 = vshrl.u32 %v2105, 7
    %v2107 = vsub.s32 %v2104, %v2106
    %v2108 = vrot.slane %v2100, %v2107
    %v2110 = vunpack.c.l.s4 1983009808
    %v2111 = vunpack.c.0.s8 %v2110
    %v2112 = vlaneseq
    %v2113 = vshrl.u32 %v2112, 7
    %v2114 = vsub.s32 %v2111, %v2113
    %v2115 = vrot.slane %v2101, %v2114
    %v2116 = vcombine.low %v2015, %v2023
    %v2117 = vcombine.high %v2015, %v2023
    %v2119 = vunpack.c.l.s4 1983009808
    %v2120 = vunpack.c.0.s8 %v2119
    %v2121 = vlaneseq
    %v2122 = vshrl.u32 %v2121, 7
    %v2123 = vsub.s32 %v2120, %v2122
    %v2124 = vrot.slane %v2116, %v2123
    %v2126 = vunpack.c.l.s4 1983009808
    %v2127 = vunpack.c.0.s8 %v2126
    %v2128 = vlaneseq
    %v2129 = vshrl.u32 %v2128, 7
    %v2130 = vsub.s32 %v2127, %v2129
    %v2131 = vrot.slane %v2117, %v2130
    %v2132 = vcombine.low %v2108, %v2124
    %v2133 = vcombine.high %v2108, %v2124
    %v2135 = vunpack.c.l.s4 1934713408
    %v2136 = vunpack.c.0.s8 %v2135
    %v2137 = vlaneseq
    %v2138 = vshrl.u32 %v2137, 7
    %v2139 = vsub.s32 %v2136, %v2138
    %v2140 = vrot.slane %v2132, %v2139
    %v2142 = vunpack.c.l.s4 1934713408
    %v2143 = vunpack.c.0.s8 %v2142
    %v2144 = vlaneseq
    %v2145 = vshrl.u32 %v2144, 7
    %v2146 = vsub.s32 %v2143, %v2145
    %v2147 = vrot.slane %v2133, %v2146
    %v2148 = vcombine.low %v2115, %v2131
    %v2149 = vcombine.high %v2115, %v2131
    %v2151 = vunpack.c.l.s4 1934713408
    %v2152 = vunpack.c.0.s8 %v2151
    %v2153 = vlaneseq
    %v2154 = vshrl.u32 %v2153, 7
    %v2155 = vsub.s32 %v2152, %v2154
    %v2156 = vrot.slane %v2148, %v2155
    %v2158 = vunpack.c.l.s4 1934713408
    %v2159 = vunpack.c.0.s8 %v2158
    %v2160 = vlaneseq
    %v2161 = vshrl.u32 %v2160, 7
    %v2162 = vsub.s32 %v2159, %v2161
    %v2163 = vrot.slane %v2149, %v2162
    %v2164 = vcombine.high %v2140, 0.0
    %v2165 = vcombine.high %v2147, 0.0
    %v2166 = vcombine.high %v2156, 0.0
    %v2167 = vcombine.high %v2163, 0.0
    %2169 = vrot.lane.b32.xlu0 %v2096, 16
    %v2170 = vpop.permute.xlu0 %2169
    %2173 = vrot.lane.b32.xlu0 %v2079, 32
    %v2174 = vpop.permute.xlu0 %2173
    %2177 = vrot.lane.b32.xlu0 %v2097, 48
    %v2178 = vpop.permute.xlu0 %2177
    %2181 = vrot.lane.b32.xlu0 %v2088, 64
    %v2182 = vpop.permute.xlu0 %2181
    %2185 = vrot.lane.b32.xlu0 %v2098, 80
    %v2186 = vpop.permute.xlu0 %2185
    %2189 = vrot.lane.b32.xlu0 %v2095, 96
    %v2190 = vpop.permute.xlu0 %2189
    %2193 = vrot.lane.b32.xlu0 %v2099, 112
    %v2194 = vpop.permute.xlu0 %2193
    %2197 = vrot.lane.b32.xlu0 %v2164, 16
    %v2198 = vpop.permute.xlu0 %2197
    %2201 = vrot.lane.b32.xlu0 %v2147, 32
    %v2202 = vpop.permute.xlu0 %2201
    %2205 = vrot.lane.b32.xlu0 %v2165, 48
    %v2206 = vpop.permute.xlu0 %2205
    %2209 = vrot.lane.b32.xlu0 %v2156, 64
    %v2210 = vpop.permute.xlu0 %2209
    %2213 = vrot.lane.b32.xlu0 %v2166, 80
    %v2214 = vpop.permute.xlu0 %2213
    %2217 = vrot.lane.b32.xlu0 %v2163, 96
    %v2218 = vpop.permute.xlu0 %2217
    %2221 = vrot.lane.b32.xlu0 %v2167, 112
    %v2222 = vpop.permute.xlu0 %2221
    %v2224 = vsel %vm368, %v2072, %v2170
    %v2225 = vsel %vm370, %v2224, %v2174
    %v2226 = vsel %vm372, %v2225, %v2178
    %v2227 = vsel %vm374, %v2226, %v2182
    %v2228 = vsel %vm376, %v2227, %v2186
    %v2229 = vsel %vm378, %v2228, %v2190
    %v2230 = vsel %vm380, %v2229, %v2194
    %v2231 = vsel %vm368, %v2140, %v2198
    %v2232 = vsel %vm370, %v2231, %v2202
    %v2233 = vsel %vm372, %v2232, %v2206
    %v2234 = vsel %vm374, %v2233, %v2210
    %v2235 = vsel %vm376, %v2234, %v2214
    %v2236 = vsel %vm378, %v2235, %v2218
    %v2237 = vsel %vm380, %v2236, %v2222
    %2238 = vrot.lane.b32.xlu0 %v1776, 127
    %v2239 = vpop.permute.xlu0 %2238
    %2240 = vrot.lane.b32.xlu0 %v1778, 127
    %v2241 = vpop.permute.xlu0 %2240
    %2242 = vrot.lane.b32.xlu0 %v1781, 127
    %v2243 = vpop.permute.xlu0 %2242
    %2244 = vrot.lane.b32.xlu0 %v1783, 127
    %v2245 = vpop.permute.xlu0 %2244
    %2246 = vrot.lane.b32.xlu0 %v1786, 127
    %v2247 = vpop.permute.xlu0 %2246
    %2248 = vrot.lane.b32.xlu0 %v1788, 127
    %v2249 = vpop.permute.xlu0 %2248
    %2250 = vrot.lane.b32.xlu0 %v1791, 127
    %v2251 = vpop.permute.xlu0 %2250
    %2252 = vrot.lane.b32.xlu0 %v1793, 127
    %v2253 = vpop.permute.xlu0 %2252
    %v2262 = vcombine.low %v2239, %v2247
    %v2263 = vcombine.high %v2239, %v2247
    %v2265 = vunpack.c.l.s4 1983009808
    %v2266 = vunpack.c.0.s8 %v2265
    %v2267 = vlaneseq
    %v2268 = vshrl.u32 %v2267, 7
    %v2269 = vsub.s32 %v2266, %v2268
    %v2270 = vrot.slane %v2262, %v2269
    %v2272 = vunpack.c.l.s4 1983009808
    %v2273 = vunpack.c.0.s8 %v2272
    %v2274 = vlaneseq
    %v2275 = vshrl.u32 %v2274, 7
    %v2276 = vsub.s32 %v2273, %v2275
    %v2277 = vrot.slane %v2263, %v2276
    %v2278 = vcombine.low %v2243, %v2251
    %v2279 = vcombine.high %v2243, %v2251
    %v2281 = vunpack.c.l.s4 1983009808
    %v2282 = vunpack.c.0.s8 %v2281
    %v2283 = vlaneseq
    %v2284 = vshrl.u32 %v2283, 7
    %v2285 = vsub.s32 %v2282, %v2284
    %v2286 = vrot.slane %v2278, %v2285
    %v2288 = vunpack.c.l.s4 1983009808
    %v2289 = vunpack.c.0.s8 %v2288
    %v2290 = vlaneseq
    %v2291 = vshrl.u32 %v2290, 7
    %v2292 = vsub.s32 %v2289, %v2291
    %v2293 = vrot.slane %v2279, %v2292
    %v2294 = vcombine.low %v2270, %v2286
    %v2295 = vcombine.high %v2270, %v2286
    %v2297 = vunpack.c.l.s4 1934713408
    %v2298 = vunpack.c.0.s8 %v2297
    %v2299 = vlaneseq
    %v2300 = vshrl.u32 %v2299, 7
    %v2301 = vsub.s32 %v2298, %v2300
    %v2302 = vrot.slane %v2294, %v2301
    %v2304 = vunpack.c.l.s4 1934713408
    %v2305 = vunpack.c.0.s8 %v2304
    %v2306 = vlaneseq
    %v2307 = vshrl.u32 %v2306, 7
    %v2308 = vsub.s32 %v2305, %v2307
    %v2309 = vrot.slane %v2295, %v2308
    %v2310 = vcombine.low %v2277, %v2293
    %v2311 = vcombine.high %v2277, %v2293
    %v2313 = vunpack.c.l.s4 1934713408
    %v2314 = vunpack.c.0.s8 %v2313
    %v2315 = vlaneseq
    %v2316 = vshrl.u32 %v2315, 7
    %v2317 = vsub.s32 %v2314, %v2316
    %v2318 = vrot.slane %v2310, %v2317
    %v2320 = vunpack.c.l.s4 1934713408
    %v2321 = vunpack.c.0.s8 %v2320
    %v2322 = vlaneseq
    %v2323 = vshrl.u32 %v2322, 7
    %v2324 = vsub.s32 %v2321, %v2323
    %v2325 = vrot.slane %v2311, %v2324
    %v2326 = vcombine.high %v2302, 0.0
    %v2327 = vcombine.high %v2309, 0.0
    %v2328 = vcombine.high %v2318, 0.0
    %v2329 = vcombine.high %v2325, 0.0
    %v2330 = vcombine.low %v2241, %v2249
    %v2331 = vcombine.high %v2241, %v2249
    %v2333 = vunpack.c.l.s4 1983009808
    %v2334 = vunpack.c.0.s8 %v2333
    %v2335 = vlaneseq
    %v2336 = vshrl.u32 %v2335, 7
    %v2337 = vsub.s32 %v2334, %v2336
    %v2338 = vrot.slane %v2330, %v2337
    %v2340 = vunpack.c.l.s4 1983009808
    %v2341 = vunpack.c.0.s8 %v2340
    %v2342 = vlaneseq
    %v2343 = vshrl.u32 %v2342, 7
    %v2344 = vsub.s32 %v2341, %v2343
    %v2345 = vrot.slane %v2331, %v2344
    %v2346 = vcombine.low %v2245, %v2253
    %v2347 = vcombine.high %v2245, %v2253
    %v2349 = vunpack.c.l.s4 1983009808
    %v2350 = vunpack.c.0.s8 %v2349
    %v2351 = vlaneseq
    %v2352 = vshrl.u32 %v2351, 7
    %v2353 = vsub.s32 %v2350, %v2352
    %v2354 = vrot.slane %v2346, %v2353
    %v2356 = vunpack.c.l.s4 1983009808
    %v2357 = vunpack.c.0.s8 %v2356
    %v2358 = vlaneseq
    %v2359 = vshrl.u32 %v2358, 7
    %v2360 = vsub.s32 %v2357, %v2359
    %v2361 = vrot.slane %v2347, %v2360
    %v2362 = vcombine.low %v2338, %v2354
    %v2363 = vcombine.high %v2338, %v2354
    %v2365 = vunpack.c.l.s4 1934713408
    %v2366 = vunpack.c.0.s8 %v2365
    %v2367 = vlaneseq
    %v2368 = vshrl.u32 %v2367, 7
    %v2369 = vsub.s32 %v2366, %v2368
    %v2370 = vrot.slane %v2362, %v2369
    %v2372 = vunpack.c.l.s4 1934713408
    %v2373 = vunpack.c.0.s8 %v2372
    %v2374 = vlaneseq
    %v2375 = vshrl.u32 %v2374, 7
    %v2376 = vsub.s32 %v2373, %v2375
    %v2377 = vrot.slane %v2363, %v2376
    %v2378 = vcombine.low %v2345, %v2361
    %v2379 = vcombine.high %v2345, %v2361
    %v2381 = vunpack.c.l.s4 1934713408
    %v2382 = vunpack.c.0.s8 %v2381
    %v2383 = vlaneseq
    %v2384 = vshrl.u32 %v2383, 7
    %v2385 = vsub.s32 %v2382, %v2384
    %v2386 = vrot.slane %v2378, %v2385
    %v2388 = vunpack.c.l.s4 1934713408
    %v2389 = vunpack.c.0.s8 %v2388
    %v2390 = vlaneseq
    %v2391 = vshrl.u32 %v2390, 7
    %v2392 = vsub.s32 %v2389, %v2391
    %v2393 = vrot.slane %v2379, %v2392
    %v2394 = vcombine.high %v2370, 0.0
    %v2395 = vcombine.high %v2377, 0.0
    %v2396 = vcombine.high %v2386, 0.0
    %v2397 = vcombine.high %v2393, 0.0
    %2399 = vrot.lane.b32.xlu0 %v2326, 16
    %v2400 = vpop.permute.xlu0 %2399
    %2403 = vrot.lane.b32.xlu0 %v2309, 32
    %v2404 = vpop.permute.xlu0 %2403
    %2407 = vrot.lane.b32.xlu0 %v2327, 48
    %v2408 = vpop.permute.xlu0 %2407
    %2411 = vrot.lane.b32.xlu0 %v2318, 64
    %v2412 = vpop.permute.xlu0 %2411
    %2415 = vrot.lane.b32.xlu0 %v2328, 80
    %v2416 = vpop.permute.xlu0 %2415
    %2419 = vrot.lane.b32.xlu0 %v2325, 96
    %v2420 = vpop.permute.xlu0 %2419
    %2423 = vrot.lane.b32.xlu0 %v2329, 112
    %v2424 = vpop.permute.xlu0 %2423
    %2427 = vrot.lane.b32.xlu0 %v2394, 16
    %v2428 = vpop.permute.xlu0 %2427
    %2431 = vrot.lane.b32.xlu0 %v2377, 32
    %v2432 = vpop.permute.xlu0 %2431
    %2435 = vrot.lane.b32.xlu0 %v2395, 48
    %v2436 = vpop.permute.xlu0 %2435
    %2439 = vrot.lane.b32.xlu0 %v2386, 64
    %v2440 = vpop.permute.xlu0 %2439
    %2443 = vrot.lane.b32.xlu0 %v2396, 80
    %v2444 = vpop.permute.xlu0 %2443
    %2447 = vrot.lane.b32.xlu0 %v2393, 96
    %v2448 = vpop.permute.xlu0 %2447
    %2451 = vrot.lane.b32.xlu0 %v2397, 112
    %v2452 = vpop.permute.xlu0 %2451
    %v2454 = vsel %vm368, %v2302, %v2400
    %v2455 = vsel %vm370, %v2454, %v2404
    %v2456 = vsel %vm372, %v2455, %v2408
    %v2457 = vsel %vm374, %v2456, %v2412
    %v2458 = vsel %vm376, %v2457, %v2416
    %v2459 = vsel %vm378, %v2458, %v2420
    %v2460 = vsel %vm380, %v2459, %v2424
    %v2461 = vsel %vm368, %v2370, %v2428
    %v2462 = vsel %vm370, %v2461, %v2432
    %v2463 = vsel %vm372, %v2462, %v2436
    %v2464 = vsel %vm374, %v2463, %v2440
    %v2465 = vsel %vm376, %v2464, %v2444
    %v2466 = vsel %vm378, %v2465, %v2448
    %v2467 = vsel %vm380, %v2466, %v2452
    %2468 = vrot.lane.b32.xlu0 %v1538, 126
    %v2469 = vpop.permute.xlu0 %2468
    %2470 = vrot.lane.b32.xlu0 %v1540, 126
    %v2471 = vpop.permute.xlu0 %2470
    %2472 = vrot.lane.b32.xlu0 %v1543, 126
    %v2473 = vpop.permute.xlu0 %2472
    %2474 = vrot.lane.b32.xlu0 %v1545, 126
    %v2475 = vpop.permute.xlu0 %2474
    %2476 = vrot.lane.b32.xlu0 %v1548, 126
    %v2477 = vpop.permute.xlu0 %2476
    %2478 = vrot.lane.b32.xlu0 %v1550, 126
    %v2479 = vpop.permute.xlu0 %2478
    %2480 = vrot.lane.b32.xlu0 %v1553, 126
    %v2481 = vpop.permute.xlu0 %2480
    %2482 = vrot.lane.b32.xlu0 %v1555, 126
    %v2483 = vpop.permute.xlu0 %2482
    %v2492 = vcombine.low %v2469, %v2477
    %v2493 = vcombine.high %v2469, %v2477
    %v2495 = vunpack.c.l.s4 1983009808
    %v2496 = vunpack.c.0.s8 %v2495
    %v2497 = vlaneseq
    %v2498 = vshrl.u32 %v2497, 7
    %v2499 = vsub.s32 %v2496, %v2498
    %v2500 = vrot.slane %v2492, %v2499
    %v2502 = vunpack.c.l.s4 1983009808
    %v2503 = vunpack.c.0.s8 %v2502
    %v2504 = vlaneseq
    %v2505 = vshrl.u32 %v2504, 7
    %v2506 = vsub.s32 %v2503, %v2505
    %v2507 = vrot.slane %v2493, %v2506
    %v2508 = vcombine.low %v2473, %v2481
    %v2509 = vcombine.high %v2473, %v2481
    %v2511 = vunpack.c.l.s4 1983009808
    %v2512 = vunpack.c.0.s8 %v2511
    %v2513 = vlaneseq
    %v2514 = vshrl.u32 %v2513, 7
    %v2515 = vsub.s32 %v2512, %v2514
    %v2516 = vrot.slane %v2508, %v2515
    %v2518 = vunpack.c.l.s4 1983009808
    %v2519 = vunpack.c.0.s8 %v2518
    %v2520 = vlaneseq
    %v2521 = vshrl.u32 %v2520, 7
    %v2522 = vsub.s32 %v2519, %v2521
    %v2523 = vrot.slane %v2509, %v2522
    %v2524 = vcombine.low %v2500, %v2516
    %v2525 = vcombine.high %v2500, %v2516
    %v2527 = vunpack.c.l.s4 1934713408
    %v2528 = vunpack.c.0.s8 %v2527
    %v2529 = vlaneseq
    %v2530 = vshrl.u32 %v2529, 7
    %v2531 = vsub.s32 %v2528, %v2530
    %v2532 = vrot.slane %v2524, %v2531
    %v2534 = vunpack.c.l.s4 1934713408
    %v2535 = vunpack.c.0.s8 %v2534
    %v2536 = vlaneseq
    %v2537 = vshrl.u32 %v2536, 7
    %v2538 = vsub.s32 %v2535, %v2537
    %v2539 = vrot.slane %v2525, %v2538
    %v2540 = vcombine.low %v2507, %v2523
    %v2541 = vcombine.high %v2507, %v2523
    %v2543 = vunpack.c.l.s4 1934713408
    %v2544 = vunpack.c.0.s8 %v2543
    %v2545 = vlaneseq
    %v2546 = vshrl.u32 %v2545, 7
    %v2547 = vsub.s32 %v2544, %v2546
    %v2548 = vrot.slane %v2540, %v2547
    %v2550 = vunpack.c.l.s4 1934713408
    %v2551 = vunpack.c.0.s8 %v2550
    %v2552 = vlaneseq
    %v2553 = vshrl.u32 %v2552, 7
    %v2554 = vsub.s32 %v2551, %v2553
    %v2555 = vrot.slane %v2541, %v2554
    %v2556 = vcombine.high %v2532, 0.0
    %v2557 = vcombine.high %v2539, 0.0
    %v2558 = vcombine.high %v2548, 0.0
    %v2559 = vcombine.high %v2555, 0.0
    %v2560 = vcombine.low %v2471, %v2479
    %v2561 = vcombine.high %v2471, %v2479
    %v2563 = vunpack.c.l.s4 1983009808
    %v2564 = vunpack.c.0.s8 %v2563
    %v2565 = vlaneseq
    %v2566 = vshrl.u32 %v2565, 7
    %v2567 = vsub.s32 %v2564, %v2566
    %v2568 = vrot.slane %v2560, %v2567
    %v2570 = vunpack.c.l.s4 1983009808
    %v2571 = vunpack.c.0.s8 %v2570
    %v2572 = vlaneseq
    %v2573 = vshrl.u32 %v2572, 7
    %v2574 = vsub.s32 %v2571, %v2573
    %v2575 = vrot.slane %v2561, %v2574
    %v2576 = vcombine.low %v2475, %v2483
    %v2577 = vcombine.high %v2475, %v2483
    %v2579 = vunpack.c.l.s4 1983009808
    %v2580 = vunpack.c.0.s8 %v2579
    %v2581 = vlaneseq
    %v2582 = vshrl.u32 %v2581, 7
    %v2583 = vsub.s32 %v2580, %v2582
    %v2584 = vrot.slane %v2576, %v2583
    %v2586 = vunpack.c.l.s4 1983009808
    %v2587 = vunpack.c.0.s8 %v2586
    %v2588 = vlaneseq
    %v2589 = vshrl.u32 %v2588, 7
    %v2590 = vsub.s32 %v2587, %v2589
    %v2591 = vrot.slane %v2577, %v2590
    %v2592 = vcombine.low %v2568, %v2584
    %v2593 = vcombine.high %v2568, %v2584
    %v2595 = vunpack.c.l.s4 1934713408
    %v2596 = vunpack.c.0.s8 %v2595
    %v2597 = vlaneseq
    %v2598 = vshrl.u32 %v2597, 7
    %v2599 = vsub.s32 %v2596, %v2598
    %v2600 = vrot.slane %v2592, %v2599
    %v2602 = vunpack.c.l.s4 1934713408
    %v2603 = vunpack.c.0.s8 %v2602
    %v2604 = vlaneseq
    %v2605 = vshrl.u32 %v2604, 7
    %v2606 = vsub.s32 %v2603, %v2605
    %v2607 = vrot.slane %v2593, %v2606
    %v2608 = vcombine.low %v2575, %v2591
    %v2609 = vcombine.high %v2575, %v2591
    %v2611 = vunpack.c.l.s4 1934713408
    %v2612 = vunpack.c.0.s8 %v2611
    %v2613 = vlaneseq
    %v2614 = vshrl.u32 %v2613, 7
    %v2615 = vsub.s32 %v2612, %v2614
    %v2616 = vrot.slane %v2608, %v2615
    %v2618 = vunpack.c.l.s4 1934713408
    %v2619 = vunpack.c.0.s8 %v2618
    %v2620 = vlaneseq
    %v2621 = vshrl.u32 %v2620, 7
    %v2622 = vsub.s32 %v2619, %v2621
    %v2623 = vrot.slane %v2609, %v2622
    %v2624 = vcombine.high %v2600, 0.0
    %v2625 = vcombine.high %v2607, 0.0
    %v2626 = vcombine.high %v2616, 0.0
    %v2627 = vcombine.high %v2623, 0.0
    %2629 = vrot.lane.b32.xlu0 %v2556, 16
    %v2630 = vpop.permute.xlu0 %2629
    %2633 = vrot.lane.b32.xlu0 %v2539, 32
    %v2634 = vpop.permute.xlu0 %2633
    %2637 = vrot.lane.b32.xlu0 %v2557, 48
    %v2638 = vpop.permute.xlu0 %2637
    %2641 = vrot.lane.b32.xlu0 %v2548, 64
    %v2642 = vpop.permute.xlu0 %2641
    %2645 = vrot.lane.b32.xlu0 %v2558, 80
    %v2646 = vpop.permute.xlu0 %2645
    %2649 = vrot.lane.b32.xlu0 %v2555, 96
    %v2650 = vpop.permute.xlu0 %2649
    %2653 = vrot.lane.b32.xlu0 %v2559, 112
    %v2654 = vpop.permute.xlu0 %2653
    %2657 = vrot.lane.b32.xlu0 %v2624, 16
    %v2658 = vpop.permute.xlu0 %2657
    %2661 = vrot.lane.b32.xlu0 %v2607, 32
    %v2662 = vpop.permute.xlu0 %2661
    %2665 = vrot.lane.b32.xlu0 %v2625, 48
    %v2666 = vpop.permute.xlu0 %2665
    %2669 = vrot.lane.b32.xlu0 %v2616, 64
    %v2670 = vpop.permute.xlu0 %2669
    %2673 = vrot.lane.b32.xlu0 %v2626, 80
    %v2674 = vpop.permute.xlu0 %2673
    %2677 = vrot.lane.b32.xlu0 %v2623, 96
    %v2678 = vpop.permute.xlu0 %2677
    %2681 = vrot.lane.b32.xlu0 %v2627, 112
    %v2682 = vpop.permute.xlu0 %2681
    %v2684 = vsel %vm368, %v2532, %v2630
    %v2685 = vsel %vm370, %v2684, %v2634
    %v2686 = vsel %vm372, %v2685, %v2638
    %v2687 = vsel %vm374, %v2686, %v2642
    %v2688 = vsel %vm376, %v2687, %v2646
    %v2689 = vsel %vm378, %v2688, %v2650
    %v2690 = vsel %vm380, %v2689, %v2654
    %v2691 = vsel %vm368, %v2600, %v2658
    %v2692 = vsel %vm370, %v2691, %v2662
    %v2693 = vsel %vm372, %v2692, %v2666
    %v2694 = vsel %vm374, %v2693, %v2670
    %v2695 = vsel %vm376, %v2694, %v2674
    %v2696 = vsel %vm378, %v2695, %v2678
    %v2697 = vsel %vm380, %v2696, %v2682
    %2698 = vrot.lane.b32.xlu0 %v1776, 126
    %v2699 = vpop.permute.xlu0 %2698
    %2700 = vrot.lane.b32.xlu0 %v1778, 126
    %v2701 = vpop.permute.xlu0 %2700
    %2702 = vrot.lane.b32.xlu0 %v1781, 126
    %v2703 = vpop.permute.xlu0 %2702
    %2704 = vrot.lane.b32.xlu0 %v1783, 126
    %v2705 = vpop.permute.xlu0 %2704
    %2706 = vrot.lane.b32.xlu0 %v1786, 126
    %v2707 = vpop.permute.xlu0 %2706
    %2708 = vrot.lane.b32.xlu0 %v1788, 126
    %v2709 = vpop.permute.xlu0 %2708
    %2710 = vrot.lane.b32.xlu0 %v1791, 126
    %v2711 = vpop.permute.xlu0 %2710
    %2712 = vrot.lane.b32.xlu0 %v1793, 126
    %v2713 = vpop.permute.xlu0 %2712
    %v2722 = vcombine.low %v2699, %v2707
    %v2723 = vcombine.high %v2699, %v2707
    %v2725 = vunpack.c.l.s4 1983009808
    %v2726 = vunpack.c.0.s8 %v2725
    %v2727 = vlaneseq
    %v2728 = vshrl.u32 %v2727, 7
    %v2729 = vsub.s32 %v2726, %v2728
    %v2730 = vrot.slane %v2722, %v2729
    %v2732 = vunpack.c.l.s4 1983009808
    %v2733 = vunpack.c.0.s8 %v2732
    %v2734 = vlaneseq
    %v2735 = vshrl.u32 %v2734, 7
    %v2736 = vsub.s32 %v2733, %v2735
    %v2737 = vrot.slane %v2723, %v2736
    %v2738 = vcombine.low %v2703, %v2711
    %v2739 = vcombine.high %v2703, %v2711
    %v2741 = vunpack.c.l.s4 1983009808
    %v2742 = vunpack.c.0.s8 %v2741
    %v2743 = vlaneseq
    %v2744 = vshrl.u32 %v2743, 7
    %v2745 = vsub.s32 %v2742, %v2744
    %v2746 = vrot.slane %v2738, %v2745
    %v2748 = vunpack.c.l.s4 1983009808
    %v2749 = vunpack.c.0.s8 %v2748
    %v2750 = vlaneseq
    %v2751 = vshrl.u32 %v2750, 7
    %v2752 = vsub.s32 %v2749, %v2751
    %v2753 = vrot.slane %v2739, %v2752
    %v2754 = vcombine.low %v2730, %v2746
    %v2755 = vcombine.high %v2730, %v2746
    %v2757 = vunpack.c.l.s4 1934713408
    %v2758 = vunpack.c.0.s8 %v2757
    %v2759 = vlaneseq
    %v2760 = vshrl.u32 %v2759, 7
    %v2761 = vsub.s32 %v2758, %v2760
    %v2762 = vrot.slane %v2754, %v2761
    %v2764 = vunpack.c.l.s4 1934713408
    %v2765 = vunpack.c.0.s8 %v2764
    %v2766 = vlaneseq
    %v2767 = vshrl.u32 %v2766, 7
    %v2768 = vsub.s32 %v2765, %v2767
    %v2769 = vrot.slane %v2755, %v2768
    %v2770 = vcombine.low %v2737, %v2753
    %v2771 = vcombine.high %v2737, %v2753
    %v2773 = vunpack.c.l.s4 1934713408
    %v2774 = vunpack.c.0.s8 %v2773
    %v2775 = vlaneseq
    %v2776 = vshrl.u32 %v2775, 7
    %v2777 = vsub.s32 %v2774, %v2776
    %v2778 = vrot.slane %v2770, %v2777
    %v2780 = vunpack.c.l.s4 1934713408
    %v2781 = vunpack.c.0.s8 %v2780
    %v2782 = vlaneseq
    %v2783 = vshrl.u32 %v2782, 7
    %v2784 = vsub.s32 %v2781, %v2783
    %v2785 = vrot.slane %v2771, %v2784
    %v2786 = vcombine.high %v2762, 0.0
    %v2787 = vcombine.high %v2769, 0.0
    %v2788 = vcombine.high %v2778, 0.0
    %v2789 = vcombine.high %v2785, 0.0
    %v2790 = vcombine.low %v2701, %v2709
    %v2791 = vcombine.high %v2701, %v2709
    %v2793 = vunpack.c.l.s4 1983009808
    %v2794 = vunpack.c.0.s8 %v2793
    %v2795 = vlaneseq
    %v2796 = vshrl.u32 %v2795, 7
    %v2797 = vsub.s32 %v2794, %v2796
    %v2798 = vrot.slane %v2790, %v2797
    %v2800 = vunpack.c.l.s4 1983009808
    %v2801 = vunpack.c.0.s8 %v2800
    %v2802 = vlaneseq
    %v2803 = vshrl.u32 %v2802, 7
    %v2804 = vsub.s32 %v2801, %v2803
    %v2805 = vrot.slane %v2791, %v2804
    %v2806 = vcombine.low %v2705, %v2713
    %v2807 = vcombine.high %v2705, %v2713
    %v2809 = vunpack.c.l.s4 1983009808
    %v2810 = vunpack.c.0.s8 %v2809
    %v2811 = vlaneseq
    %v2812 = vshrl.u32 %v2811, 7
    %v2813 = vsub.s32 %v2810, %v2812
    %v2814 = vrot.slane %v2806, %v2813
    %v2816 = vunpack.c.l.s4 1983009808
    %v2817 = vunpack.c.0.s8 %v2816
    %v2818 = vlaneseq
    %v2819 = vshrl.u32 %v2818, 7
    %v2820 = vsub.s32 %v2817, %v2819
    %v2821 = vrot.slane %v2807, %v2820
    %v2822 = vcombine.low %v2798, %v2814
    %v2823 = vcombine.high %v2798, %v2814
    %v2825 = vunpack.c.l.s4 1934713408
    %v2826 = vunpack.c.0.s8 %v2825
    %v2827 = vlaneseq
    %v2828 = vshrl.u32 %v2827, 7
    %v2829 = vsub.s32 %v2826, %v2828
    %v2830 = vrot.slane %v2822, %v2829
    %v2832 = vunpack.c.l.s4 1934713408
    %v2833 = vunpack.c.0.s8 %v2832
    %v2834 = vlaneseq
    %v2835 = vshrl.u32 %v2834, 7
    %v2836 = vsub.s32 %v2833, %v2835
    %v2837 = vrot.slane %v2823, %v2836
    %v2838 = vcombine.low %v2805, %v2821
    %v2839 = vcombine.high %v2805, %v2821
    %v2841 = vunpack.c.l.s4 1934713408
    %v2842 = vunpack.c.0.s8 %v2841
    %v2843 = vlaneseq
    %v2844 = vshrl.u32 %v2843, 7
    %v2845 = vsub.s32 %v2842, %v2844
    %v2846 = vrot.slane %v2838, %v2845
    %v2848 = vunpack.c.l.s4 1934713408
    %v2849 = vunpack.c.0.s8 %v2848
    %v2850 = vlaneseq
    %v2851 = vshrl.u32 %v2850, 7
    %v2852 = vsub.s32 %v2849, %v2851
    %v2853 = vrot.slane %v2839, %v2852
    %v2854 = vcombine.high %v2830, 0.0
    %v2855 = vcombine.high %v2837, 0.0
    %v2856 = vcombine.high %v2846, 0.0
    %v2857 = vcombine.high %v2853, 0.0
    %2859 = vrot.lane.b32.xlu0 %v2786, 16
    %v2860 = vpop.permute.xlu0 %2859
    %2863 = vrot.lane.b32.xlu0 %v2769, 32
    %v2864 = vpop.permute.xlu0 %2863
    %2867 = vrot.lane.b32.xlu0 %v2787, 48
    %v2868 = vpop.permute.xlu0 %2867
    %2871 = vrot.lane.b32.xlu0 %v2778, 64
    %v2872 = vpop.permute.xlu0 %2871
    %2875 = vrot.lane.b32.xlu0 %v2788, 80
    %v2876 = vpop.permute.xlu0 %2875
    %2879 = vrot.lane.b32.xlu0 %v2785, 96
    %v2880 = vpop.permute.xlu0 %2879
    %2883 = vrot.lane.b32.xlu0 %v2789, 112
    %v2884 = vpop.permute.xlu0 %2883
    %2887 = vrot.lane.b32.xlu0 %v2854, 16
    %v2888 = vpop.permute.xlu0 %2887
    %2891 = vrot.lane.b32.xlu0 %v2837, 32
    %v2892 = vpop.permute.xlu0 %2891
    %2895 = vrot.lane.b32.xlu0 %v2855, 48
    %v2896 = vpop.permute.xlu0 %2895
    %2899 = vrot.lane.b32.xlu0 %v2846, 64
    %v2900 = vpop.permute.xlu0 %2899
    %2903 = vrot.lane.b32.xlu0 %v2856, 80
    %v2904 = vpop.permute.xlu0 %2903
    %2907 = vrot.lane.b32.xlu0 %v2853, 96
    %v2908 = vpop.permute.xlu0 %2907
    %2911 = vrot.lane.b32.xlu0 %v2857, 112
    %v2912 = vpop.permute.xlu0 %2911
    %v2914 = vsel %vm368, %v2762, %v2860
    %v2915 = vsel %vm370, %v2914, %v2864
    %v2916 = vsel %vm372, %v2915, %v2868
    %v2917 = vsel %vm374, %v2916, %v2872
    %v2918 = vsel %vm376, %v2917, %v2876
    %v2919 = vsel %vm378, %v2918, %v2880
    %v2920 = vsel %vm380, %v2919, %v2884
    %v2921 = vsel %vm368, %v2830, %v2888
    %v2922 = vsel %vm370, %v2921, %v2892
    %v2923 = vsel %vm372, %v2922, %v2896
    %v2924 = vsel %vm374, %v2923, %v2900
    %v2925 = vsel %vm376, %v2924, %v2904
    %v2926 = vsel %vm378, %v2925, %v2908
    %v2927 = vsel %vm380, %v2926, %v2912
    %vm2928 = vcmask 1045504
    %v2929 = vrot.slane %v152, 2
    %v2930 = vrot.slane %v153, 2
    %v2931 = vsel %vm2928, %v2929, %v2930
    %v2932 = vrot.slane %v154, 2
    %v2933 = vsel %vm2928, %v2930, %v2932
    %v2934 = vrot.slane %v155, 2
    %v2935 = vrot.slane %v156, 2
    %v2936 = vsel %vm2928, %v2934, %v2935
    %v2937 = vrot.slane %v157, 2
    %v2938 = vsel %vm2928, %v2935, %v2937
    %v2939 = vrot.slane %v158, 2
    %v2940 = vrot.slane %v159, 2
    %v2941 = vsel %vm2928, %v2939, %v2940
    %v2942 = vrot.slane %v160, 2
    %v2943 = vsel %vm2928, %v2940, %v2942
    %v2944 = vrot.slane %v161, 2
    %v2945 = vrot.slane %v162, 2
    %v2946 = vsel %vm2928, %v2944, %v2945
    %v2947 = vrot.slane %v163, 2
    %v2948 = vsel %vm2928, %v2945, %v2947
    %v2957 = vcombine.low %v2931, %v2941
    %v2958 = vcombine.high %v2931, %v2941
    %v2960 = vunpack.c.l.s4 1983009808
    %v2961 = vunpack.c.0.s8 %v2960
    %v2962 = vlaneseq
    %v2963 = vshrl.u32 %v2962, 7
    %v2964 = vsub.s32 %v2961, %v2963
    %v2965 = vrot.slane %v2957, %v2964
    %v2967 = vunpack.c.l.s4 1983009808
    %v2968 = vunpack.c.0.s8 %v2967
    %v2969 = vlaneseq
    %v2970 = vshrl.u32 %v2969, 7
    %v2971 = vsub.s32 %v2968, %v2970
    %v2972 = vrot.slane %v2958, %v2971
    %v2973 = vcombine.low %v2936, %v2946
    %v2974 = vcombine.high %v2936, %v2946
    %v2976 = vunpack.c.l.s4 1983009808
    %v2977 = vunpack.c.0.s8 %v2976
    %v2978 = vlaneseq
    %v2979 = vshrl.u32 %v2978, 7
    %v2980 = vsub.s32 %v2977, %v2979
    %v2981 = vrot.slane %v2973, %v2980
    %v2983 = vunpack.c.l.s4 1983009808
    %v2984 = vunpack.c.0.s8 %v2983
    %v2985 = vlaneseq
    %v2986 = vshrl.u32 %v2985, 7
    %v2987 = vsub.s32 %v2984, %v2986
    %v2988 = vrot.slane %v2974, %v2987
    %v2989 = vcombine.low %v2965, %v2981
    %v2990 = vcombine.high %v2965, %v2981
    %v2992 = vunpack.c.l.s4 1934713408
    %v2993 = vunpack.c.0.s8 %v2992
    %v2994 = vlaneseq
    %v2995 = vshrl.u32 %v2994, 7
    %v2996 = vsub.s32 %v2993, %v2995
    %v2997 = vrot.slane %v2989, %v2996
    %v2999 = vunpack.c.l.s4 1934713408
    %v3000 = vunpack.c.0.s8 %v2999
    %v3001 = vlaneseq
    %v3002 = vshrl.u32 %v3001, 7
    %v3003 = vsub.s32 %v3000, %v3002
    %v3004 = vrot.slane %v2990, %v3003
    %v3005 = vcombine.low %v2972, %v2988
    %v3006 = vcombine.high %v2972, %v2988
    %v3008 = vunpack.c.l.s4 1934713408
    %v3009 = vunpack.c.0.s8 %v3008
    %v3010 = vlaneseq
    %v3011 = vshrl.u32 %v3010, 7
    %v3012 = vsub.s32 %v3009, %v3011
    %v3013 = vrot.slane %v3005, %v3012
    %v3015 = vunpack.c.l.s4 1934713408
    %v3016 = vunpack.c.0.s8 %v3015
    %v3017 = vlaneseq
    %v3018 = vshrl.u32 %v3017, 7
    %v3019 = vsub.s32 %v3016, %v3018
    %v3020 = vrot.slane %v3006, %v3019
    %v3021 = vcombine.high %v2997, 0.0
    %v3022 = vcombine.high %v3004, 0.0
    %v3023 = vcombine.high %v3013, 0.0
    %v3024 = vcombine.high %v3020, 0.0
    %v3025 = vcombine.low %v2933, %v2943
    %v3026 = vcombine.high %v2933, %v2943
    %v3028 = vunpack.c.l.s4 1983009808
    %v3029 = vunpack.c.0.s8 %v3028
    %v3030 = vlaneseq
    %v3031 = vshrl.u32 %v3030, 7
    %v3032 = vsub.s32 %v3029, %v3031
    %v3033 = vrot.slane %v3025, %v3032
    %v3035 = vunpack.c.l.s4 1983009808
    %v3036 = vunpack.c.0.s8 %v3035
    %v3037 = vlaneseq
    %v3038 = vshrl.u32 %v3037, 7
    %v3039 = vsub.s32 %v3036, %v3038
    %v3040 = vrot.slane %v3026, %v3039
    %v3041 = vcombine.low %v2938, %v2948
    %v3042 = vcombine.high %v2938, %v2948
    %v3044 = vunpack.c.l.s4 1983009808
    %v3045 = vunpack.c.0.s8 %v3044
    %v3046 = vlaneseq
    %v3047 = vshrl.u32 %v3046, 7
    %v3048 = vsub.s32 %v3045, %v3047
    %v3049 = vrot.slane %v3041, %v3048
    %v3051 = vunpack.c.l.s4 1983009808
    %v3052 = vunpack.c.0.s8 %v3051
    %v3053 = vlaneseq
    %v3054 = vshrl.u32 %v3053, 7
    %v3055 = vsub.s32 %v3052, %v3054
    %v3056 = vrot.slane %v3042, %v3055
    %v3057 = vcombine.low %v3033, %v3049
    %v3058 = vcombine.high %v3033, %v3049
    %v3060 = vunpack.c.l.s4 1934713408
    %v3061 = vunpack.c.0.s8 %v3060
    %v3062 = vlaneseq
    %v3063 = vshrl.u32 %v3062, 7
    %v3064 = vsub.s32 %v3061, %v3063
    %v3065 = vrot.slane %v3057, %v3064
    %v3067 = vunpack.c.l.s4 1934713408
    %v3068 = vunpack.c.0.s8 %v3067
    %v3069 = vlaneseq
    %v3070 = vshrl.u32 %v3069, 7
    %v3071 = vsub.s32 %v3068, %v3070
    %v3072 = vrot.slane %v3058, %v3071
    %v3073 = vcombine.low %v3040, %v3056
    %v3074 = vcombine.high %v3040, %v3056
    %v3076 = vunpack.c.l.s4 1934713408
    %v3077 = vunpack.c.0.s8 %v3076
    %v3078 = vlaneseq
    %v3079 = vshrl.u32 %v3078, 7
    %v3080 = vsub.s32 %v3077, %v3079
    %v3081 = vrot.slane %v3073, %v3080
    %v3083 = vunpack.c.l.s4 1934713408
    %v3084 = vunpack.c.0.s8 %v3083
    %v3085 = vlaneseq
    %v3086 = vshrl.u32 %v3085, 7
    %v3087 = vsub.s32 %v3084, %v3086
    %v3088 = vrot.slane %v3074, %v3087
    %v3089 = vcombine.high %v3065, 0.0
    %v3090 = vcombine.high %v3072, 0.0
    %v3091 = vcombine.high %v3081, 0.0
    %v3092 = vcombine.high %v3088, 0.0
    %3094 = vrot.lane.b32.xlu0 %v3021, 16
    %v3095 = vpop.permute.xlu0 %3094
    %3098 = vrot.lane.b32.xlu0 %v3004, 32
    %v3099 = vpop.permute.xlu0 %3098
    %3102 = vrot.lane.b32.xlu0 %v3022, 48
    %v3103 = vpop.permute.xlu0 %3102
    %3106 = vrot.lane.b32.xlu0 %v3013, 64
    %v3107 = vpop.permute.xlu0 %3106
    %3110 = vrot.lane.b32.xlu0 %v3023, 80
    %v3111 = vpop.permute.xlu0 %3110
    %3114 = vrot.lane.b32.xlu0 %v3020, 96
    %v3115 = vpop.permute.xlu0 %3114
    %3118 = vrot.lane.b32.xlu0 %v3024, 112
    %v3119 = vpop.permute.xlu0 %3118
    %3122 = vrot.lane.b32.xlu0 %v3089, 16
    %v3123 = vpop.permute.xlu0 %3122
    %3126 = vrot.lane.b32.xlu0 %v3072, 32
    %v3127 = vpop.permute.xlu0 %3126
    %3130 = vrot.lane.b32.xlu0 %v3090, 48
    %v3131 = vpop.permute.xlu0 %3130
    %3134 = vrot.lane.b32.xlu0 %v3081, 64
    %v3135 = vpop.permute.xlu0 %3134
    %3138 = vrot.lane.b32.xlu0 %v3091, 80
    %v3139 = vpop.permute.xlu0 %3138
    %3142 = vrot.lane.b32.xlu0 %v3088, 96
    %v3143 = vpop.permute.xlu0 %3142
    %3146 = vrot.lane.b32.xlu0 %v3092, 112
    %v3147 = vpop.permute.xlu0 %3146
    %v3149 = vsel %vm368, %v2997, %v3095
    %v3150 = vsel %vm370, %v3149, %v3099
    %v3151 = vsel %vm372, %v3150, %v3103
    %v3152 = vsel %vm374, %v3151, %v3107
    %v3153 = vsel %vm376, %v3152, %v3111
    %v3154 = vsel %vm378, %v3153, %v3115
    %v3155 = vsel %vm380, %v3154, %v3119
    %v3156 = vsel %vm368, %v3065, %v3123
    %v3157 = vsel %vm370, %v3156, %v3127
    %v3158 = vsel %vm372, %v3157, %v3131
    %v3159 = vsel %vm374, %v3158, %v3135
    %v3160 = vsel %vm376, %v3159, %v3139
    %v3161 = vsel %vm378, %v3160, %v3143
    %v3162 = vsel %vm380, %v3161, %v3147
    %v3163 = vrot.slane %v164, 2
    %v3164 = vrot.slane %v165, 2
    %v3165 = vsel %vm2928, %v3163, %v3164
    %v3166 = vrot.slane %v166, 2
    %v3167 = vsel %vm2928, %v3164, %v3166
    %v3168 = vrot.slane %v167, 2
    %v3169 = vrot.slane %v168, 2
    %v3170 = vsel %vm2928, %v3168, %v3169
    %v3171 = vrot.slane %v169, 2
    %v3172 = vsel %vm2928, %v3169, %v3171
    %v3173 = vrot.slane %v170, 2
    %v3174 = vrot.slane %v171, 2
    %v3175 = vsel %vm2928, %v3173, %v3174
    %v3176 = vrot.slane %v172, 2
    %v3177 = vsel %vm2928, %v3174, %v3176
    %v3178 = vrot.slane %v173, 2
    %v3179 = vrot.slane %v174, 2
    %v3180 = vsel %vm2928, %v3178, %v3179
    %v3181 = vrot.slane %v175, 2
    %v3182 = vsel %vm2928, %v3179, %v3181
    %v3191 = vcombine.low %v3165, %v3175
    %v3192 = vcombine.high %v3165, %v3175
    %v3194 = vunpack.c.l.s4 1983009808
    %v3195 = vunpack.c.0.s8 %v3194
    %v3196 = vlaneseq
    %v3197 = vshrl.u32 %v3196, 7
    %v3198 = vsub.s32 %v3195, %v3197
    %v3199 = vrot.slane %v3191, %v3198
    %v3201 = vunpack.c.l.s4 1983009808
    %v3202 = vunpack.c.0.s8 %v3201
    %v3203 = vlaneseq
    %v3204 = vshrl.u32 %v3203, 7
    %v3205 = vsub.s32 %v3202, %v3204
    %v3206 = vrot.slane %v3192, %v3205
    %v3207 = vcombine.low %v3170, %v3180
    %v3208 = vcombine.high %v3170, %v3180
    %v3210 = vunpack.c.l.s4 1983009808
    %v3211 = vunpack.c.0.s8 %v3210
    %v3212 = vlaneseq
    %v3213 = vshrl.u32 %v3212, 7
    %v3214 = vsub.s32 %v3211, %v3213
    %v3215 = vrot.slane %v3207, %v3214
    %v3217 = vunpack.c.l.s4 1983009808
    %v3218 = vunpack.c.0.s8 %v3217
    %v3219 = vlaneseq
    %v3220 = vshrl.u32 %v3219, 7
    %v3221 = vsub.s32 %v3218, %v3220
    %v3222 = vrot.slane %v3208, %v3221
    %v3223 = vcombine.low %v3199, %v3215
    %v3224 = vcombine.high %v3199, %v3215
    %v3226 = vunpack.c.l.s4 1934713408
    %v3227 = vunpack.c.0.s8 %v3226
    %v3228 = vlaneseq
    %v3229 = vshrl.u32 %v3228, 7
    %v3230 = vsub.s32 %v3227, %v3229
    %v3231 = vrot.slane %v3223, %v3230
    %v3233 = vunpack.c.l.s4 1934713408
    %v3234 = vunpack.c.0.s8 %v3233
    %v3235 = vlaneseq
    %v3236 = vshrl.u32 %v3235, 7
    %v3237 = vsub.s32 %v3234, %v3236
    %v3238 = vrot.slane %v3224, %v3237
    %v3239 = vcombine.low %v3206, %v3222
    %v3240 = vcombine.high %v3206, %v3222
    %v3242 = vunpack.c.l.s4 1934713408
    %v3243 = vunpack.c.0.s8 %v3242
    %v3244 = vlaneseq
    %v3245 = vshrl.u32 %v3244, 7
    %v3246 = vsub.s32 %v3243, %v3245
    %v3247 = vrot.slane %v3239, %v3246
    %v3249 = vunpack.c.l.s4 1934713408
    %v3250 = vunpack.c.0.s8 %v3249
    %v3251 = vlaneseq
    %v3252 = vshrl.u32 %v3251, 7
    %v3253 = vsub.s32 %v3250, %v3252
    %v3254 = vrot.slane %v3240, %v3253
    %v3255 = vcombine.high %v3231, 0.0
    %v3256 = vcombine.high %v3238, 0.0
    %v3257 = vcombine.high %v3247, 0.0
    %v3258 = vcombine.high %v3254, 0.0
    %v3259 = vcombine.low %v3167, %v3177
    %v3260 = vcombine.high %v3167, %v3177
    %v3262 = vunpack.c.l.s4 1983009808
    %v3263 = vunpack.c.0.s8 %v3262
    %v3264 = vlaneseq
    %v3265 = vshrl.u32 %v3264, 7
    %v3266 = vsub.s32 %v3263, %v3265
    %v3267 = vrot.slane %v3259, %v3266
    %v3269 = vunpack.c.l.s4 1983009808
    %v3270 = vunpack.c.0.s8 %v3269
    %v3271 = vlaneseq
    %v3272 = vshrl.u32 %v3271, 7
    %v3273 = vsub.s32 %v3270, %v3272
    %v3274 = vrot.slane %v3260, %v3273
    %v3275 = vcombine.low %v3172, %v3182
    %v3276 = vcombine.high %v3172, %v3182
    %v3278 = vunpack.c.l.s4 1983009808
    %v3279 = vunpack.c.0.s8 %v3278
    %v3280 = vlaneseq
    %v3281 = vshrl.u32 %v3280, 7
    %v3282 = vsub.s32 %v3279, %v3281
    %v3283 = vrot.slane %v3275, %v3282
    %v3285 = vunpack.c.l.s4 1983009808
    %v3286 = vunpack.c.0.s8 %v3285
    %v3287 = vlaneseq
    %v3288 = vshrl.u32 %v3287, 7
    %v3289 = vsub.s32 %v3286, %v3288
    %v3290 = vrot.slane %v3276, %v3289
    %v3291 = vcombine.low %v3267, %v3283
    %v3292 = vcombine.high %v3267, %v3283
    %v3294 = vunpack.c.l.s4 1934713408
    %v3295 = vunpack.c.0.s8 %v3294
    %v3296 = vlaneseq
    %v3297 = vshrl.u32 %v3296, 7
    %v3298 = vsub.s32 %v3295, %v3297
    %v3299 = vrot.slane %v3291, %v3298
    %v3301 = vunpack.c.l.s4 1934713408
    %v3302 = vunpack.c.0.s8 %v3301
    %v3303 = vlaneseq
    %v3304 = vshrl.u32 %v3303, 7
    %v3305 = vsub.s32 %v3302, %v3304
    %v3306 = vrot.slane %v3292, %v3305
    %v3307 = vcombine.low %v3274, %v3290
    %v3308 = vcombine.high %v3274, %v3290
    %v3310 = vunpack.c.l.s4 1934713408
    %v3311 = vunpack.c.0.s8 %v3310
    %v3312 = vlaneseq
    %v3313 = vshrl.u32 %v3312, 7
    %v3314 = vsub.s32 %v3311, %v3313
    %v3315 = vrot.slane %v3307, %v3314
    %v3317 = vunpack.c.l.s4 1934713408
    %v3318 = vunpack.c.0.s8 %v3317
    %v3319 = vlaneseq
    %v3320 = vshrl.u32 %v3319, 7
    %v3321 = vsub.s32 %v3318, %v3320
    %v3322 = vrot.slane %v3308, %v3321
    %v3323 = vcombine.high %v3299, 0.0
    %v3324 = vcombine.high %v3306, 0.0
    %v3325 = vcombine.high %v3315, 0.0
    %v3326 = vcombine.high %v3322, 0.0
    %3328 = vrot.lane.b32.xlu0 %v3255, 16
    %v3329 = vpop.permute.xlu0 %3328
    %3332 = vrot.lane.b32.xlu0 %v3238, 32
    %v3333 = vpop.permute.xlu0 %3332
    %3336 = vrot.lane.b32.xlu0 %v3256, 48
    %v3337 = vpop.permute.xlu0 %3336
    %3340 = vrot.lane.b32.xlu0 %v3247, 64
    %v3341 = vpop.permute.xlu0 %3340
    %3344 = vrot.lane.b32.xlu0 %v3257, 80
    %v3345 = vpop.permute.xlu0 %3344
    %3348 = vrot.lane.b32.xlu0 %v3254, 96
    %v3349 = vpop.permute.xlu0 %3348
    %3352 = vrot.lane.b32.xlu0 %v3258, 112
    %v3353 = vpop.permute.xlu0 %3352
    %3356 = vrot.lane.b32.xlu0 %v3323, 16
    %v3357 = vpop.permute.xlu0 %3356
    %3360 = vrot.lane.b32.xlu0 %v3306, 32
    %v3361 = vpop.permute.xlu0 %3360
    %3364 = vrot.lane.b32.xlu0 %v3324, 48
    %v3365 = vpop.permute.xlu0 %3364
    %3368 = vrot.lane.b32.xlu0 %v3315, 64
    %v3369 = vpop.permute.xlu0 %3368
    %3372 = vrot.lane.b32.xlu0 %v3325, 80
    %v3373 = vpop.permute.xlu0 %3372
    %3376 = vrot.lane.b32.xlu0 %v3322, 96
    %v3377 = vpop.permute.xlu0 %3376
    %3380 = vrot.lane.b32.xlu0 %v3326, 112
    %v3381 = vpop.permute.xlu0 %3380
    %v3383 = vsel %vm368, %v3231, %v3329
    %v3384 = vsel %vm370, %v3383, %v3333
    %v3385 = vsel %vm372, %v3384, %v3337
    %v3386 = vsel %vm374, %v3385, %v3341
    %v3387 = vsel %vm376, %v3386, %v3345
    %v3388 = vsel %vm378, %v3387, %v3349
    %v3389 = vsel %vm380, %v3388, %v3353
    %v3390 = vsel %vm368, %v3299, %v3357
    %v3391 = vsel %vm370, %v3390, %v3361
    %v3392 = vsel %vm372, %v3391, %v3365
    %v3393 = vsel %vm374, %v3392, %v3369
    %v3394 = vsel %vm376, %v3393, %v3373
    %v3395 = vsel %vm378, %v3394, %v3377
    %v3396 = vsel %vm380, %v3395, %v3381
    %3397 = vrot.lane.b32.xlu0 %v2931, 127
    %v3398 = vpop.permute.xlu0 %3397
    %3399 = vrot.lane.b32.xlu0 %v2933, 127
    %v3400 = vpop.permute.xlu0 %3399
    %3401 = vrot.lane.b32.xlu0 %v2936, 127
    %v3402 = vpop.permute.xlu0 %3401
    %3403 = vrot.lane.b32.xlu0 %v2938, 127
    %v3404 = vpop.permute.xlu0 %3403
    %3405 = vrot.lane.b32.xlu0 %v2941, 127
    %v3406 = vpop.permute.xlu0 %3405
    %3407 = vrot.lane.b32.xlu0 %v2943, 127
    %v3408 = vpop.permute.xlu0 %3407
    %3409 = vrot.lane.b32.xlu0 %v2946, 127
    %v3410 = vpop.permute.xlu0 %3409
    %3411 = vrot.lane.b32.xlu0 %v2948, 127
    %v3412 = vpop.permute.xlu0 %3411
    %v3421 = vcombine.low %v3398, %v3406
    %v3422 = vcombine.high %v3398, %v3406
    %v3424 = vunpack.c.l.s4 1983009808
    %v3425 = vunpack.c.0.s8 %v3424
    %v3426 = vlaneseq
    %v3427 = vshrl.u32 %v3426, 7
    %v3428 = vsub.s32 %v3425, %v3427
    %v3429 = vrot.slane %v3421, %v3428
    %v3431 = vunpack.c.l.s4 1983009808
    %v3432 = vunpack.c.0.s8 %v3431
    %v3433 = vlaneseq
    %v3434 = vshrl.u32 %v3433, 7
    %v3435 = vsub.s32 %v3432, %v3434
    %v3436 = vrot.slane %v3422, %v3435
    %v3437 = vcombine.low %v3402, %v3410
    %v3438 = vcombine.high %v3402, %v3410
    %v3440 = vunpack.c.l.s4 1983009808
    %v3441 = vunpack.c.0.s8 %v3440
    %v3442 = vlaneseq
    %v3443 = vshrl.u32 %v3442, 7
    %v3444 = vsub.s32 %v3441, %v3443
    %v3445 = vrot.slane %v3437, %v3444
    %v3447 = vunpack.c.l.s4 1983009808
    %v3448 = vunpack.c.0.s8 %v3447
    %v3449 = vlaneseq
    %v3450 = vshrl.u32 %v3449, 7
    %v3451 = vsub.s32 %v3448, %v3450
    %v3452 = vrot.slane %v3438, %v3451
    %v3453 = vcombine.low %v3429, %v3445
    %v3454 = vcombine.high %v3429, %v3445
    %v3456 = vunpack.c.l.s4 1934713408
    %v3457 = vunpack.c.0.s8 %v3456
    %v3458 = vlaneseq
    %v3459 = vshrl.u32 %v3458, 7
    %v3460 = vsub.s32 %v3457, %v3459
    %v3461 = vrot.slane %v3453, %v3460
    %v3463 = vunpack.c.l.s4 1934713408
    %v3464 = vunpack.c.0.s8 %v3463
    %v3465 = vlaneseq
    %v3466 = vshrl.u32 %v3465, 7
    %v3467 = vsub.s32 %v3464, %v3466
    %v3468 = vrot.slane %v3454, %v3467
    %v3469 = vcombine.low %v3436, %v3452
    %v3470 = vcombine.high %v3436, %v3452
    %v3472 = vunpack.c.l.s4 1934713408
    %v3473 = vunpack.c.0.s8 %v3472
    %v3474 = vlaneseq
    %v3475 = vshrl.u32 %v3474, 7
    %v3476 = vsub.s32 %v3473, %v3475
    %v3477 = vrot.slane %v3469, %v3476
    %v3479 = vunpack.c.l.s4 1934713408
    %v3480 = vunpack.c.0.s8 %v3479
    %v3481 = vlaneseq
    %v3482 = vshrl.u32 %v3481, 7
    %v3483 = vsub.s32 %v3480, %v3482
    %v3484 = vrot.slane %v3470, %v3483
    %v3485 = vcombine.high %v3461, 0.0
    %v3486 = vcombine.high %v3468, 0.0
    %v3487 = vcombine.high %v3477, 0.0
    %v3488 = vcombine.high %v3484, 0.0
    %v3489 = vcombine.low %v3400, %v3408
    %v3490 = vcombine.high %v3400, %v3408
    %v3492 = vunpack.c.l.s4 1983009808
    %v3493 = vunpack.c.0.s8 %v3492
    %v3494 = vlaneseq
    %v3495 = vshrl.u32 %v3494, 7
    %v3496 = vsub.s32 %v3493, %v3495
    %v3497 = vrot.slane %v3489, %v3496
    %v3499 = vunpack.c.l.s4 1983009808
    %v3500 = vunpack.c.0.s8 %v3499
    %v3501 = vlaneseq
    %v3502 = vshrl.u32 %v3501, 7
    %v3503 = vsub.s32 %v3500, %v3502
    %v3504 = vrot.slane %v3490, %v3503
    %v3505 = vcombine.low %v3404, %v3412
    %v3506 = vcombine.high %v3404, %v3412
    %v3508 = vunpack.c.l.s4 1983009808
    %v3509 = vunpack.c.0.s8 %v3508
    %v3510 = vlaneseq
    %v3511 = vshrl.u32 %v3510, 7
    %v3512 = vsub.s32 %v3509, %v3511
    %v3513 = vrot.slane %v3505, %v3512
    %v3515 = vunpack.c.l.s4 1983009808
    %v3516 = vunpack.c.0.s8 %v3515
    %v3517 = vlaneseq
    %v3518 = vshrl.u32 %v3517, 7
    %v3519 = vsub.s32 %v3516, %v3518
    %v3520 = vrot.slane %v3506, %v3519
    %v3521 = vcombine.low %v3497, %v3513
    %v3522 = vcombine.high %v3497, %v3513
    %v3524 = vunpack.c.l.s4 1934713408
    %v3525 = vunpack.c.0.s8 %v3524
    %v3526 = vlaneseq
    %v3527 = vshrl.u32 %v3526, 7
    %v3528 = vsub.s32 %v3525, %v3527
    %v3529 = vrot.slane %v3521, %v3528
    %v3531 = vunpack.c.l.s4 1934713408
    %v3532 = vunpack.c.0.s8 %v3531
    %v3533 = vlaneseq
    %v3534 = vshrl.u32 %v3533, 7
    %v3535 = vsub.s32 %v3532, %v3534
    %v3536 = vrot.slane %v3522, %v3535
    %v3537 = vcombine.low %v3504, %v3520
    %v3538 = vcombine.high %v3504, %v3520
    %v3540 = vunpack.c.l.s4 1934713408
    %v3541 = vunpack.c.0.s8 %v3540
    %v3542 = vlaneseq
    %v3543 = vshrl.u32 %v3542, 7
    %v3544 = vsub.s32 %v3541, %v3543
    %v3545 = vrot.slane %v3537, %v3544
    %v3547 = vunpack.c.l.s4 1934713408
    %v3548 = vunpack.c.0.s8 %v3547
    %v3549 = vlaneseq
    %v3550 = vshrl.u32 %v3549, 7
    %v3551 = vsub.s32 %v3548, %v3550
    %v3552 = vrot.slane %v3538, %v3551
    %v3553 = vcombine.high %v3529, 0.0
    %v3554 = vcombine.high %v3536, 0.0
    %v3555 = vcombine.high %v3545, 0.0
    %v3556 = vcombine.high %v3552, 0.0
    %3558 = vrot.lane.b32.xlu0 %v3485, 16
    %v3559 = vpop.permute.xlu0 %3558
    %3562 = vrot.lane.b32.xlu0 %v3468, 32
    %v3563 = vpop.permute.xlu0 %3562
    %3566 = vrot.lane.b32.xlu0 %v3486, 48
    %v3567 = vpop.permute.xlu0 %3566
    %3570 = vrot.lane.b32.xlu0 %v3477, 64
    %v3571 = vpop.permute.xlu0 %3570
    %3574 = vrot.lane.b32.xlu0 %v3487, 80
    %v3575 = vpop.permute.xlu0 %3574
    %3578 = vrot.lane.b32.xlu0 %v3484, 96
    %v3579 = vpop.permute.xlu0 %3578
    %3582 = vrot.lane.b32.xlu0 %v3488, 112
    %v3583 = vpop.permute.xlu0 %3582
    %3586 = vrot.lane.b32.xlu0 %v3553, 16
    %v3587 = vpop.permute.xlu0 %3586
    %3590 = vrot.lane.b32.xlu0 %v3536, 32
    %v3591 = vpop.permute.xlu0 %3590
    %3594 = vrot.lane.b32.xlu0 %v3554, 48
    %v3595 = vpop.permute.xlu0 %3594
    %3598 = vrot.lane.b32.xlu0 %v3545, 64
    %v3599 = vpop.permute.xlu0 %3598
    %3602 = vrot.lane.b32.xlu0 %v3555, 80
    %v3603 = vpop.permute.xlu0 %3602
    %3606 = vrot.lane.b32.xlu0 %v3552, 96
    %v3607 = vpop.permute.xlu0 %3606
    %3610 = vrot.lane.b32.xlu0 %v3556, 112
    %v3611 = vpop.permute.xlu0 %3610
    %v3613 = vsel %vm368, %v3461, %v3559
    %v3614 = vsel %vm370, %v3613, %v3563
    %v3615 = vsel %vm372, %v3614, %v3567
    %v3616 = vsel %vm374, %v3615, %v3571
    %v3617 = vsel %vm376, %v3616, %v3575
    %v3618 = vsel %vm378, %v3617, %v3579
    %v3619 = vsel %vm380, %v3618, %v3583
    %v3620 = vsel %vm368, %v3529, %v3587
    %v3621 = vsel %vm370, %v3620, %v3591
    %v3622 = vsel %vm372, %v3621, %v3595
    %v3623 = vsel %vm374, %v3622, %v3599
    %v3624 = vsel %vm376, %v3623, %v3603
    %v3625 = vsel %vm378, %v3624, %v3607
    %v3626 = vsel %vm380, %v3625, %v3611
    %3627 = vrot.lane.b32.xlu0 %v3165, 127
    %v3628 = vpop.permute.xlu0 %3627
    %3629 = vrot.lane.b32.xlu0 %v3167, 127
    %v3630 = vpop.permute.xlu0 %3629
    %3631 = vrot.lane.b32.xlu0 %v3170, 127
    %v3632 = vpop.permute.xlu0 %3631
    %3633 = vrot.lane.b32.xlu0 %v3172, 127
    %v3634 = vpop.permute.xlu0 %3633
    %3635 = vrot.lane.b32.xlu0 %v3175, 127
    %v3636 = vpop.permute.xlu0 %3635
    %3637 = vrot.lane.b32.xlu0 %v3177, 127
    %v3638 = vpop.permute.xlu0 %3637
    %3639 = vrot.lane.b32.xlu0 %v3180, 127
    %v3640 = vpop.permute.xlu0 %3639
    %3641 = vrot.lane.b32.xlu0 %v3182, 127
    %v3642 = vpop.permute.xlu0 %3641
    %v3651 = vcombine.low %v3628, %v3636
    %v3652 = vcombine.high %v3628, %v3636
    %v3654 = vunpack.c.l.s4 1983009808
    %v3655 = vunpack.c.0.s8 %v3654
    %v3656 = vlaneseq
    %v3657 = vshrl.u32 %v3656, 7
    %v3658 = vsub.s32 %v3655, %v3657
    %v3659 = vrot.slane %v3651, %v3658
    %v3661 = vunpack.c.l.s4 1983009808
    %v3662 = vunpack.c.0.s8 %v3661
    %v3663 = vlaneseq
    %v3664 = vshrl.u32 %v3663, 7
    %v3665 = vsub.s32 %v3662, %v3664
    %v3666 = vrot.slane %v3652, %v3665
    %v3667 = vcombine.low %v3632, %v3640
    %v3668 = vcombine.high %v3632, %v3640
    %v3670 = vunpack.c.l.s4 1983009808
    %v3671 = vunpack.c.0.s8 %v3670
    %v3672 = vlaneseq
    %v3673 = vshrl.u32 %v3672, 7
    %v3674 = vsub.s32 %v3671, %v3673
    %v3675 = vrot.slane %v3667, %v3674
    %v3677 = vunpack.c.l.s4 1983009808
    %v3678 = vunpack.c.0.s8 %v3677
    %v3679 = vlaneseq
    %v3680 = vshrl.u32 %v3679, 7
    %v3681 = vsub.s32 %v3678, %v3680
    %v3682 = vrot.slane %v3668, %v3681
    %v3683 = vcombine.low %v3659, %v3675
    %v3684 = vcombine.high %v3659, %v3675
    %v3686 = vunpack.c.l.s4 1934713408
    %v3687 = vunpack.c.0.s8 %v3686
    %v3688 = vlaneseq
    %v3689 = vshrl.u32 %v3688, 7
    %v3690 = vsub.s32 %v3687, %v3689
    %v3691 = vrot.slane %v3683, %v3690
    %v3693 = vunpack.c.l.s4 1934713408
    %v3694 = vunpack.c.0.s8 %v3693
    %v3695 = vlaneseq
    %v3696 = vshrl.u32 %v3695, 7
    %v3697 = vsub.s32 %v3694, %v3696
    %v3698 = vrot.slane %v3684, %v3697
    %v3699 = vcombine.low %v3666, %v3682
    %v3700 = vcombine.high %v3666, %v3682
    %v3702 = vunpack.c.l.s4 1934713408
    %v3703 = vunpack.c.0.s8 %v3702
    %v3704 = vlaneseq
    %v3705 = vshrl.u32 %v3704, 7
    %v3706 = vsub.s32 %v3703, %v3705
    %v3707 = vrot.slane %v3699, %v3706
    %v3709 = vunpack.c.l.s4 1934713408
    %v3710 = vunpack.c.0.s8 %v3709
    %v3711 = vlaneseq
    %v3712 = vshrl.u32 %v3711, 7
    %v3713 = vsub.s32 %v3710, %v3712
    %v3714 = vrot.slane %v3700, %v3713
    %v3715 = vcombine.high %v3691, 0.0
    %v3716 = vcombine.high %v3698, 0.0
    %v3717 = vcombine.high %v3707, 0.0
    %v3718 = vcombine.high %v3714, 0.0
    %v3719 = vcombine.low %v3630, %v3638
    %v3720 = vcombine.high %v3630, %v3638
    %v3722 = vunpack.c.l.s4 1983009808
    %v3723 = vunpack.c.0.s8 %v3722
    %v3724 = vlaneseq
    %v3725 = vshrl.u32 %v3724, 7
    %v3726 = vsub.s32 %v3723, %v3725
    %v3727 = vrot.slane %v3719, %v3726
    %v3729 = vunpack.c.l.s4 1983009808
    %v3730 = vunpack.c.0.s8 %v3729
    %v3731 = vlaneseq
    %v3732 = vshrl.u32 %v3731, 7
    %v3733 = vsub.s32 %v3730, %v3732
    %v3734 = vrot.slane %v3720, %v3733
    %v3735 = vcombine.low %v3634, %v3642
    %v3736 = vcombine.high %v3634, %v3642
    %v3738 = vunpack.c.l.s4 1983009808
    %v3739 = vunpack.c.0.s8 %v3738
    %v3740 = vlaneseq
    %v3741 = vshrl.u32 %v3740, 7
    %v3742 = vsub.s32 %v3739, %v3741
    %v3743 = vrot.slane %v3735, %v3742
    %v3745 = vunpack.c.l.s4 1983009808
    %v3746 = vunpack.c.0.s8 %v3745
    %v3747 = vlaneseq
    %v3748 = vshrl.u32 %v3747, 7
    %v3749 = vsub.s32 %v3746, %v3748
    %v3750 = vrot.slane %v3736, %v3749
    %v3751 = vcombine.low %v3727, %v3743
    %v3752 = vcombine.high %v3727, %v3743
    %v3754 = vunpack.c.l.s4 1934713408
    %v3755 = vunpack.c.0.s8 %v3754
    %v3756 = vlaneseq
    %v3757 = vshrl.u32 %v3756, 7
    %v3758 = vsub.s32 %v3755, %v3757
    %v3759 = vrot.slane %v3751, %v3758
    %v3761 = vunpack.c.l.s4 1934713408
    %v3762 = vunpack.c.0.s8 %v3761
    %v3763 = vlaneseq
    %v3764 = vshrl.u32 %v3763, 7
    %v3765 = vsub.s32 %v3762, %v3764
    %v3766 = vrot.slane %v3752, %v3765
    %v3767 = vcombine.low %v3734, %v3750
    %v3768 = vcombine.high %v3734, %v3750
    %v3770 = vunpack.c.l.s4 1934713408
    %v3771 = vunpack.c.0.s8 %v3770
    %v3772 = vlaneseq
    %v3773 = vshrl.u32 %v3772, 7
    %v3774 = vsub.s32 %v3771, %v3773
    %v3775 = vrot.slane %v3767, %v3774
    %v3777 = vunpack.c.l.s4 1934713408
    %v3778 = vunpack.c.0.s8 %v3777
    %v3779 = vlaneseq
    %v3780 = vshrl.u32 %v3779, 7
    %v3781 = vsub.s32 %v3778, %v3780
    %v3782 = vrot.slane %v3768, %v3781
    %v3783 = vcombine.high %v3759, 0.0
    %v3784 = vcombine.high %v3766, 0.0
    %v3785 = vcombine.high %v3775, 0.0
    %v3786 = vcombine.high %v3782, 0.0
    %3788 = vrot.lane.b32.xlu0 %v3715, 16
    %v3789 = vpop.permute.xlu0 %3788
    %3792 = vrot.lane.b32.xlu0 %v3698, 32
    %v3793 = vpop.permute.xlu0 %3792
    %3796 = vrot.lane.b32.xlu0 %v3716, 48
    %v3797 = vpop.permute.xlu0 %3796
    %3800 = vrot.lane.b32.xlu0 %v3707, 64
    %v3801 = vpop.permute.xlu0 %3800
    %3804 = vrot.lane.b32.xlu0 %v3717, 80
    %v3805 = vpop.permute.xlu0 %3804
    %3808 = vrot.lane.b32.xlu0 %v3714, 96
    %v3809 = vpop.permute.xlu0 %3808
    %3812 = vrot.lane.b32.xlu0 %v3718, 112
    %v3813 = vpop.permute.xlu0 %3812
    %3816 = vrot.lane.b32.xlu0 %v3783, 16
    %v3817 = vpop.permute.xlu0 %3816
    %3820 = vrot.lane.b32.xlu0 %v3766, 32
    %v3821 = vpop.permute.xlu0 %3820
    %3824 = vrot.lane.b32.xlu0 %v3784, 48
    %v3825 = vpop.permute.xlu0 %3824
    %3828 = vrot.lane.b32.xlu0 %v3775, 64
    %v3829 = vpop.permute.xlu0 %3828
    %3832 = vrot.lane.b32.xlu0 %v3785, 80
    %v3833 = vpop.permute.xlu0 %3832
    %3836 = vrot.lane.b32.xlu0 %v3782, 96
    %v3837 = vpop.permute.xlu0 %3836
    %3840 = vrot.lane.b32.xlu0 %v3786, 112
    %v3841 = vpop.permute.xlu0 %3840
    %v3843 = vsel %vm368, %v3691, %v3789
    %v3844 = vsel %vm370, %v3843, %v3793
    %v3845 = vsel %vm372, %v3844, %v3797
    %v3846 = vsel %vm374, %v3845, %v3801
    %v3847 = vsel %vm376, %v3846, %v3805
    %v3848 = vsel %vm378, %v3847, %v3809
    %v3849 = vsel %vm380, %v3848, %v3813
    %v3850 = vsel %vm368, %v3759, %v3817
    %v3851 = vsel %vm370, %v3850, %v3821
    %v3852 = vsel %vm372, %v3851, %v3825
    %v3853 = vsel %vm374, %v3852, %v3829
    %v3854 = vsel %vm376, %v3853, %v3833
    %v3855 = vsel %vm378, %v3854, %v3837
    %v3856 = vsel %vm380, %v3855, %v3841
    %3857 = vrot.lane.b32.xlu0 %v2931, 126
    %v3858 = vpop.permute.xlu0 %3857
    %3859 = vrot.lane.b32.xlu0 %v2933, 126
    %v3860 = vpop.permute.xlu0 %3859
    %3861 = vrot.lane.b32.xlu0 %v2936, 126
    %v3862 = vpop.permute.xlu0 %3861
    %3863 = vrot.lane.b32.xlu0 %v2938, 126
    %v3864 = vpop.permute.xlu0 %3863
    %3865 = vrot.lane.b32.xlu0 %v2941, 126
    %v3866 = vpop.permute.xlu0 %3865
    %3867 = vrot.lane.b32.xlu0 %v2943, 126
    %v3868 = vpop.permute.xlu0 %3867
    %3869 = vrot.lane.b32.xlu0 %v2946, 126
    %v3870 = vpop.permute.xlu0 %3869
    %3871 = vrot.lane.b32.xlu0 %v2948, 126
    %v3872 = vpop.permute.xlu0 %3871
    %v3881 = vcombine.low %v3858, %v3866
    %v3882 = vcombine.high %v3858, %v3866
    %v3884 = vunpack.c.l.s4 1983009808
    %v3885 = vunpack.c.0.s8 %v3884
    %v3886 = vlaneseq
    %v3887 = vshrl.u32 %v3886, 7
    %v3888 = vsub.s32 %v3885, %v3887
    %v3889 = vrot.slane %v3881, %v3888
    %v3891 = vunpack.c.l.s4 1983009808
    %v3892 = vunpack.c.0.s8 %v3891
    %v3893 = vlaneseq
    %v3894 = vshrl.u32 %v3893, 7
    %v3895 = vsub.s32 %v3892, %v3894
    %v3896 = vrot.slane %v3882, %v3895
    %v3897 = vcombine.low %v3862, %v3870
    %v3898 = vcombine.high %v3862, %v3870
    %v3900 = vunpack.c.l.s4 1983009808
    %v3901 = vunpack.c.0.s8 %v3900
    %v3902 = vlaneseq
    %v3903 = vshrl.u32 %v3902, 7
    %v3904 = vsub.s32 %v3901, %v3903
    %v3905 = vrot.slane %v3897, %v3904
    %v3907 = vunpack.c.l.s4 1983009808
    %v3908 = vunpack.c.0.s8 %v3907
    %v3909 = vlaneseq
    %v3910 = vshrl.u32 %v3909, 7
    %v3911 = vsub.s32 %v3908, %v3910
    %v3912 = vrot.slane %v3898, %v3911
    %v3913 = vcombine.low %v3889, %v3905
    %v3914 = vcombine.high %v3889, %v3905
    %v3916 = vunpack.c.l.s4 1934713408
    %v3917 = vunpack.c.0.s8 %v3916
    %v3918 = vlaneseq
    %v3919 = vshrl.u32 %v3918, 7
    %v3920 = vsub.s32 %v3917, %v3919
    %v3921 = vrot.slane %v3913, %v3920
    %v3923 = vunpack.c.l.s4 1934713408
    %v3924 = vunpack.c.0.s8 %v3923
    %v3925 = vlaneseq
    %v3926 = vshrl.u32 %v3925, 7
    %v3927 = vsub.s32 %v3924, %v3926
    %v3928 = vrot.slane %v3914, %v3927
    %v3929 = vcombine.low %v3896, %v3912
    %v3930 = vcombine.high %v3896, %v3912
    %v3932 = vunpack.c.l.s4 1934713408
    %v3933 = vunpack.c.0.s8 %v3932
    %v3934 = vlaneseq
    %v3935 = vshrl.u32 %v3934, 7
    %v3936 = vsub.s32 %v3933, %v3935
    %v3937 = vrot.slane %v3929, %v3936
    %v3939 = vunpack.c.l.s4 1934713408
    %v3940 = vunpack.c.0.s8 %v3939
    %v3941 = vlaneseq
    %v3942 = vshrl.u32 %v3941, 7
    %v3943 = vsub.s32 %v3940, %v3942
    %v3944 = vrot.slane %v3930, %v3943
    %v3945 = vcombine.high %v3921, 0.0
    %v3946 = vcombine.high %v3928, 0.0
    %v3947 = vcombine.high %v3937, 0.0
    %v3948 = vcombine.high %v3944, 0.0
    %v3949 = vcombine.low %v3860, %v3868
    %v3950 = vcombine.high %v3860, %v3868
    %v3952 = vunpack.c.l.s4 1983009808
    %v3953 = vunpack.c.0.s8 %v3952
    %v3954 = vlaneseq
    %v3955 = vshrl.u32 %v3954, 7
    %v3956 = vsub.s32 %v3953, %v3955
    %v3957 = vrot.slane %v3949, %v3956
    %v3959 = vunpack.c.l.s4 1983009808
    %v3960 = vunpack.c.0.s8 %v3959
    %v3961 = vlaneseq
    %v3962 = vshrl.u32 %v3961, 7
    %v3963 = vsub.s32 %v3960, %v3962
    %v3964 = vrot.slane %v3950, %v3963
    %v3965 = vcombine.low %v3864, %v3872
    %v3966 = vcombine.high %v3864, %v3872
    %v3968 = vunpack.c.l.s4 1983009808
    %v3969 = vunpack.c.0.s8 %v3968
    %v3970 = vlaneseq
    %v3971 = vshrl.u32 %v3970, 7
    %v3972 = vsub.s32 %v3969, %v3971
    %v3973 = vrot.slane %v3965, %v3972
    %v3975 = vunpack.c.l.s4 1983009808
    %v3976 = vunpack.c.0.s8 %v3975
    %v3977 = vlaneseq
    %v3978 = vshrl.u32 %v3977, 7
    %v3979 = vsub.s32 %v3976, %v3978
    %v3980 = vrot.slane %v3966, %v3979
    %v3981 = vcombine.low %v3957, %v3973
    %v3982 = vcombine.high %v3957, %v3973
    %v3984 = vunpack.c.l.s4 1934713408
    %v3985 = vunpack.c.0.s8 %v3984
    %v3986 = vlaneseq
    %v3987 = vshrl.u32 %v3986, 7
    %v3988 = vsub.s32 %v3985, %v3987
    %v3989 = vrot.slane %v3981, %v3988
    %v3991 = vunpack.c.l.s4 1934713408
    %v3992 = vunpack.c.0.s8 %v3991
    %v3993 = vlaneseq
    %v3994 = vshrl.u32 %v3993, 7
    %v3995 = vsub.s32 %v3992, %v3994
    %v3996 = vrot.slane %v3982, %v3995
    %v3997 = vcombine.low %v3964, %v3980
    %v3998 = vcombine.high %v3964, %v3980
    %v4000 = vunpack.c.l.s4 1934713408
    %v4001 = vunpack.c.0.s8 %v4000
    %v4002 = vlaneseq
    %v4003 = vshrl.u32 %v4002, 7
    %v4004 = vsub.s32 %v4001, %v4003
    %v4005 = vrot.slane %v3997, %v4004
    %v4007 = vunpack.c.l.s4 1934713408
    %v4008 = vunpack.c.0.s8 %v4007
    %v4009 = vlaneseq
    %v4010 = vshrl.u32 %v4009, 7
    %v4011 = vsub.s32 %v4008, %v4010
    %v4012 = vrot.slane %v3998, %v4011
    %v4013 = vcombine.high %v3989, 0.0
    %v4014 = vcombine.high %v3996, 0.0
    %v4015 = vcombine.high %v4005, 0.0
    %v4016 = vcombine.high %v4012, 0.0
    %4018 = vrot.lane.b32.xlu0 %v3945, 16
    %v4019 = vpop.permute.xlu0 %4018
    %4022 = vrot.lane.b32.xlu0 %v3928, 32
    %v4023 = vpop.permute.xlu0 %4022
    %4026 = vrot.lane.b32.xlu0 %v3946, 48
    %v4027 = vpop.permute.xlu0 %4026
    %4030 = vrot.lane.b32.xlu0 %v3937, 64
    %v4031 = vpop.permute.xlu0 %4030
    %4034 = vrot.lane.b32.xlu0 %v3947, 80
    %v4035 = vpop.permute.xlu0 %4034
    %4038 = vrot.lane.b32.xlu0 %v3944, 96
    %v4039 = vpop.permute.xlu0 %4038
    %4042 = vrot.lane.b32.xlu0 %v3948, 112
    %v4043 = vpop.permute.xlu0 %4042
    %4046 = vrot.lane.b32.xlu0 %v4013, 16
    %v4047 = vpop.permute.xlu0 %4046
    %4050 = vrot.lane.b32.xlu0 %v3996, 32
    %v4051 = vpop.permute.xlu0 %4050
    %4054 = vrot.lane.b32.xlu0 %v4014, 48
    %v4055 = vpop.permute.xlu0 %4054
    %4058 = vrot.lane.b32.xlu0 %v4005, 64
    %v4059 = vpop.permute.xlu0 %4058
    %4062 = vrot.lane.b32.xlu0 %v4015, 80
    %v4063 = vpop.permute.xlu0 %4062
    %4066 = vrot.lane.b32.xlu0 %v4012, 96
    %v4067 = vpop.permute.xlu0 %4066
    %4070 = vrot.lane.b32.xlu0 %v4016, 112
    %v4071 = vpop.permute.xlu0 %4070
    %v4073 = vsel %vm368, %v3921, %v4019
    %v4074 = vsel %vm370, %v4073, %v4023
    %v4075 = vsel %vm372, %v4074, %v4027
    %v4076 = vsel %vm374, %v4075, %v4031
    %v4077 = vsel %vm376, %v4076, %v4035
    %v4078 = vsel %vm378, %v4077, %v4039
    %v4079 = vsel %vm380, %v4078, %v4043
    %v4080 = vsel %vm368, %v3989, %v4047
    %v4081 = vsel %vm370, %v4080, %v4051
    %v4082 = vsel %vm372, %v4081, %v4055
    %v4083 = vsel %vm374, %v4082, %v4059
    %v4084 = vsel %vm376, %v4083, %v4063
    %v4085 = vsel %vm378, %v4084, %v4067
    %v4086 = vsel %vm380, %v4085, %v4071
    %4087 = vrot.lane.b32.xlu0 %v3165, 126
    %v4088 = vpop.permute.xlu0 %4087
    %4089 = vrot.lane.b32.xlu0 %v3167, 126
    %v4090 = vpop.permute.xlu0 %4089
    %4091 = vrot.lane.b32.xlu0 %v3170, 126
    %v4092 = vpop.permute.xlu0 %4091
    %4093 = vrot.lane.b32.xlu0 %v3172, 126
    %v4094 = vpop.permute.xlu0 %4093
    %4095 = vrot.lane.b32.xlu0 %v3175, 126
    %v4096 = vpop.permute.xlu0 %4095
    %4097 = vrot.lane.b32.xlu0 %v3177, 126
    %v4098 = vpop.permute.xlu0 %4097
    %4099 = vrot.lane.b32.xlu0 %v3180, 126
    %v4100 = vpop.permute.xlu0 %4099
    %4101 = vrot.lane.b32.xlu0 %v3182, 126
    %v4102 = vpop.permute.xlu0 %4101
    %v4111 = vcombine.low %v4088, %v4096
    %v4112 = vcombine.high %v4088, %v4096
    %v4114 = vunpack.c.l.s4 1983009808
    %v4115 = vunpack.c.0.s8 %v4114
    %v4116 = vlaneseq
    %v4117 = vshrl.u32 %v4116, 7
    %v4118 = vsub.s32 %v4115, %v4117
    %v4119 = vrot.slane %v4111, %v4118
    %v4121 = vunpack.c.l.s4 1983009808
    %v4122 = vunpack.c.0.s8 %v4121
    %v4123 = vlaneseq
    %v4124 = vshrl.u32 %v4123, 7
    %v4125 = vsub.s32 %v4122, %v4124
    %v4126 = vrot.slane %v4112, %v4125
    %v4127 = vcombine.low %v4092, %v4100
    %v4128 = vcombine.high %v4092, %v4100
    %v4130 = vunpack.c.l.s4 1983009808
    %v4131 = vunpack.c.0.s8 %v4130
    %v4132 = vlaneseq
    %v4133 = vshrl.u32 %v4132, 7
    %v4134 = vsub.s32 %v4131, %v4133
    %v4135 = vrot.slane %v4127, %v4134
    %v4137 = vunpack.c.l.s4 1983009808
    %v4138 = vunpack.c.0.s8 %v4137
    %v4139 = vlaneseq
    %v4140 = vshrl.u32 %v4139, 7
    %v4141 = vsub.s32 %v4138, %v4140
    %v4142 = vrot.slane %v4128, %v4141
    %v4143 = vcombine.low %v4119, %v4135
    %v4144 = vcombine.high %v4119, %v4135
    %v4146 = vunpack.c.l.s4 1934713408
    %v4147 = vunpack.c.0.s8 %v4146
    %v4148 = vlaneseq
    %v4149 = vshrl.u32 %v4148, 7
    %v4150 = vsub.s32 %v4147, %v4149
    %v4151 = vrot.slane %v4143, %v4150
    %v4153 = vunpack.c.l.s4 1934713408
    %v4154 = vunpack.c.0.s8 %v4153
    %v4155 = vlaneseq
    %v4156 = vshrl.u32 %v4155, 7
    %v4157 = vsub.s32 %v4154, %v4156
    %v4158 = vrot.slane %v4144, %v4157
    %v4159 = vcombine.low %v4126, %v4142
    %v4160 = vcombine.high %v4126, %v4142
    %v4162 = vunpack.c.l.s4 1934713408
    %v4163 = vunpack.c.0.s8 %v4162
    %v4164 = vlaneseq
    %v4165 = vshrl.u32 %v4164, 7
    %v4166 = vsub.s32 %v4163, %v4165
    %v4167 = vrot.slane %v4159, %v4166
    %v4169 = vunpack.c.l.s4 1934713408
    %v4170 = vunpack.c.0.s8 %v4169
    %v4171 = vlaneseq
    %v4172 = vshrl.u32 %v4171, 7
    %v4173 = vsub.s32 %v4170, %v4172
    %v4174 = vrot.slane %v4160, %v4173
    %v4175 = vcombine.high %v4151, 0.0
    %v4176 = vcombine.high %v4158, 0.0
    %v4177 = vcombine.high %v4167, 0.0
    %v4178 = vcombine.high %v4174, 0.0
    %v4179 = vcombine.low %v4090, %v4098
    %v4180 = vcombine.high %v4090, %v4098
    %v4182 = vunpack.c.l.s4 1983009808
    %v4183 = vunpack.c.0.s8 %v4182
    %v4184 = vlaneseq
    %v4185 = vshrl.u32 %v4184, 7
    %v4186 = vsub.s32 %v4183, %v4185
    %v4187 = vrot.slane %v4179, %v4186
    %v4189 = vunpack.c.l.s4 1983009808
    %v4190 = vunpack.c.0.s8 %v4189
    %v4191 = vlaneseq
    %v4192 = vshrl.u32 %v4191, 7
    %v4193 = vsub.s32 %v4190, %v4192
    %v4194 = vrot.slane %v4180, %v4193
    %v4195 = vcombine.low %v4094, %v4102
    %v4196 = vcombine.high %v4094, %v4102
    %v4198 = vunpack.c.l.s4 1983009808
    %v4199 = vunpack.c.0.s8 %v4198
    %v4200 = vlaneseq
    %v4201 = vshrl.u32 %v4200, 7
    %v4202 = vsub.s32 %v4199, %v4201
    %v4203 = vrot.slane %v4195, %v4202
    %v4205 = vunpack.c.l.s4 1983009808
    %v4206 = vunpack.c.0.s8 %v4205
    %v4207 = vlaneseq
    %v4208 = vshrl.u32 %v4207, 7
    %v4209 = vsub.s32 %v4206, %v4208
    %v4210 = vrot.slane %v4196, %v4209
    %v4211 = vcombine.low %v4187, %v4203
    %v4212 = vcombine.high %v4187, %v4203
    %v4214 = vunpack.c.l.s4 1934713408
    %v4215 = vunpack.c.0.s8 %v4214
    %v4216 = vlaneseq
    %v4217 = vshrl.u32 %v4216, 7
    %v4218 = vsub.s32 %v4215, %v4217
    %v4219 = vrot.slane %v4211, %v4218
    %v4221 = vunpack.c.l.s4 1934713408
    %v4222 = vunpack.c.0.s8 %v4221
    %v4223 = vlaneseq
    %v4224 = vshrl.u32 %v4223, 7
    %v4225 = vsub.s32 %v4222, %v4224
    %v4226 = vrot.slane %v4212, %v4225
    %v4227 = vcombine.low %v4194, %v4210
    %v4228 = vcombine.high %v4194, %v4210
    %v4230 = vunpack.c.l.s4 1934713408
    %v4231 = vunpack.c.0.s8 %v4230
    %v4232 = vlaneseq
    %v4233 = vshrl.u32 %v4232, 7
    %v4234 = vsub.s32 %v4231, %v4233
    %v4235 = vrot.slane %v4227, %v4234
    %v4237 = vunpack.c.l.s4 1934713408
    %v4238 = vunpack.c.0.s8 %v4237
    %v4239 = vlaneseq
    %v4240 = vshrl.u32 %v4239, 7
    %v4241 = vsub.s32 %v4238, %v4240
    %v4242 = vrot.slane %v4228, %v4241
    %v4243 = vcombine.high %v4219, 0.0
    %v4244 = vcombine.high %v4226, 0.0
    %v4245 = vcombine.high %v4235, 0.0
    %v4246 = vcombine.high %v4242, 0.0
    %4248 = vrot.lane.b32.xlu0 %v4175, 16
    %v4249 = vpop.permute.xlu0 %4248
    %4252 = vrot.lane.b32.xlu0 %v4158, 32
    %v4253 = vpop.permute.xlu0 %4252
    %4256 = vrot.lane.b32.xlu0 %v4176, 48
    %v4257 = vpop.permute.xlu0 %4256
    %4260 = vrot.lane.b32.xlu0 %v4167, 64
    %v4261 = vpop.permute.xlu0 %4260
    %4264 = vrot.lane.b32.xlu0 %v4177, 80
    %v4265 = vpop.permute.xlu0 %4264
    %4268 = vrot.lane.b32.xlu0 %v4174, 96
    %v4269 = vpop.permute.xlu0 %4268
    %4272 = vrot.lane.b32.xlu0 %v4178, 112
    %v4273 = vpop.permute.xlu0 %4272
    %4276 = vrot.lane.b32.xlu0 %v4243, 16
    %v4277 = vpop.permute.xlu0 %4276
    %4280 = vrot.lane.b32.xlu0 %v4226, 32
    %v4281 = vpop.permute.xlu0 %4280
    %4284 = vrot.lane.b32.xlu0 %v4244, 48
    %v4285 = vpop.permute.xlu0 %4284
    %4288 = vrot.lane.b32.xlu0 %v4235, 64
    %v4289 = vpop.permute.xlu0 %4288
    %4292 = vrot.lane.b32.xlu0 %v4245, 80
    %v4293 = vpop.permute.xlu0 %4292
    %4296 = vrot.lane.b32.xlu0 %v4242, 96
    %v4297 = vpop.permute.xlu0 %4296
    %4300 = vrot.lane.b32.xlu0 %v4246, 112
    %v4301 = vpop.permute.xlu0 %4300
    %v4303 = vsel %vm368, %v4151, %v4249
    %v4304 = vsel %vm370, %v4303, %v4253
    %v4305 = vsel %vm372, %v4304, %v4257
    %v4306 = vsel %vm374, %v4305, %v4261
    %v4307 = vsel %vm376, %v4306, %v4265
    %v4308 = vsel %vm378, %v4307, %v4269
    %v4309 = vsel %vm380, %v4308, %v4273
    %v4310 = vsel %vm368, %v4219, %v4277
    %v4311 = vsel %vm370, %v4310, %v4281
    %v4312 = vsel %vm372, %v4311, %v4285
    %v4313 = vsel %vm374, %v4312, %v4289
    %v4314 = vsel %vm376, %v4313, %v4293
    %v4315 = vsel %vm378, %v4314, %v4297
    %v4316 = vsel %vm380, %v4315, %v4301
    %v4321 = vrot.slane %v825, 4
    %v4322 = vrot.slane %v832, 4
    %v4323 = vrot.slane %v1063, 4
    %v4324 = vrot.slane %v1070, 4
    %v4333 = vrot.slane %v1762, 4
    %v4334 = vrot.slane %v1769, 4
    %v4335 = vrot.slane %v2000, 4
    %v4336 = vrot.slane %v2007, 4
    %v4345 = vrot.slane %v2690, 4
    %v4346 = vrot.slane %v2697, 4
    %v4347 = vrot.slane %v2920, 4
    %v4348 = vrot.slane %v2927, 4
    %v4357 = vrot.slane %v3619, 4
    %v4358 = vrot.slane %v3626, 4
    %v4359 = vrot.slane %v3849, 4
    %v4360 = vrot.slane %v3856, 4
    %vm4365 = vcmask 1043456
    %v4366 = vsel %vm4365, %v381, %v4321
    %v4367 = vsel %vm4365, %v388, %v4322
    %v4368 = vsel %vm4365, %v587, %v4323
    %v4369 = vsel %vm4365, %v594, %v4324
    %v4370 = vsel %vm4365, %v1293, %v4333
    %v4371 = vsel %vm4365, %v1300, %v4334
    %v4372 = vsel %vm4365, %v1523, %v4335
    %v4373 = vsel %vm4365, %v1530, %v4336
    %v4374 = vsel %vm4365, %v2230, %v4345
    %v4375 = vsel %vm4365, %v2237, %v4346
    %v4376 = vsel %vm4365, %v2460, %v4347
    %v4377 = vsel %vm4365, %v2467, %v4348
    %v4378 = vsel %vm4365, %v3155, %v4357
    %v4379 = vsel %vm4365, %v3162, %v4358
    %v4380 = vsel %vm4365, %v3389, %v4359
    %v4381 = vsel %vm4365, %v3396, %v4360
    %v4382 = vld [vmem:[%s1] sm:$0xff]
    %v4383 = vld [vmem:[%s1 + $0x8] sm:$0xff]
    %v4384 = vld [vmem:[%s2] sm:$0xff]
    %v4385 = vld [vmem:[%s2 + $0x8] sm:$0xff]
    %4387 = vset.pattern.permute.xlu0 0
    %4388 = vperm.xlu0 %4387, %v4384
    %v4389 = vpop.permute.xlu0 %4388
    %4392 = vset.pattern.permute.xlu0 0
    %4393 = vperm.xlu0 %4392, %v4385
    %v4394 = vpop.permute.xlu0 %4393
    %vm4396 = vcmask 293888
    %v4398 = vsel %vm4396, %v4382, 0
    %v4401 = vsel %vm4396, %v4383, 0
    %v4404 = vsel %vm4365, %v4079, 0
    %v4407 = vsel %vm4365, %v4086, 0
    %v4410 = vsel %vm4365, %v4309, 0
    %v4413 = vsel %vm4365, %v4316, 0
    %4415 = vmatprep.subr.mxu0 %v4367
    %4416 = vmatpush1.msra.mxu0 %v4366
    %4417 = vmatprep.subr.mxu0 %v4371
    %4418 = vmatpush1.msra.mxu0 %v4370
    %4419 = vmatprep.subr.mxu0 %v4375
    %4420 = vmatpush1.msra.mxu0 %v4374
    %4421 = vmatprep.subr.mxu0 %v4379
    %4422 = vmatpush1.msra.mxu0 %v4378
    %4423 = vmatprep.subr.mxu0 %v4407
    %4424 = vmatpush1.msra.mxu0 %v4404
    %4425 = vmatprep.subr.mxu0 0.0
    %4426 = vmatpush1.msra.mxu0 0.0
    %4427 = vmatprep.subr.mxu0 0.0
    %4428 = vmatpush1.msra.mxu0 0.0
    %4429 = vmatprep.subr.mxu0 0.0
    %4430 = vmatpush1.msra.mxu0 0.0
    %4431 = vmatprep.subr.mxu0 0.0
    %4432 = vmatpush1.msra.mxu0 0.0
    %4433 = vmatprep.subr.mxu0 0.0
    %4434 = vmatpush1.msra.mxu0 0.0
    %4435 = vmatprep.subr.mxu0 0.0
    %4436 = vmatpush1.msra.mxu0 0.0
    %4437 = vmatprep.subr.mxu0 0.0
    %4438 = vmatpush1.msra.mxu0 0.0
    %4439 = vmatprep.subr.mxu0 0.0
    %4440 = vmatpush1.msra.mxu0 0.0
    %4441 = vmatprep.subr.mxu0 0.0
    %4442 = vmatpush1.msra.mxu0 0.0
    %4443 = vmatprep.subr.mxu0 0.0
    %4444 = vmatpush1.msra.mxu0 0.0
    %4445 = vmatprep.subr.mxu0 0.0
    %4446 = vmatpush1.msra.mxu0 0.0
    %4447 = vmatprep.subr.mxu0 0.0
    %4448 = vmatpush1.msra.mxu0 0.0
    %4449 = vmatprep.subr.mxu0 0.0
    %4450 = vmatpush1.msra.mxu0 0.0
    %4451 = vmatprep.subr.mxu0 0.0
    %4452 = vmatpush1.msra.mxu0 0.0
    %4453 = vmatprep.subr.mxu0 0.0
    %4454 = vmatpush1.msra.mxu0 0.0
    %4455 = vmatprep.subr.mxu0 0.0
    %4456 = vmatpush1.msra.mxu0 0.0
    %4457 = vmatprep.subr.mxu0 0.0
    %4458 = vmatpush1.msra.mxu0 0.0
    %4459 = vmatprep.subr.mxu0 0.0
    %4460 = vmatpush1.msra.mxu0 0.0
    %4461 = vmatprep.subr.mxu0 0.0
    %4462 = vmatpush1.msra.mxu0 0.0
    %4463 = vmatprep.subr.mxu0 0.0
    %4464 = vmatpush1.msra.mxu0 0.0
    %4465 = vmatprep.subr.mxu0 0.0
    %4466 = vmatpush1.msra.mxu0 0.0
    %4467 = vmatprep.subr.mxu0 0.0
    %4468 = vmatpush1.msra.mxu0 0.0
    %4469 = vmatprep.subr.mxu0 0.0
    %4470 = vmatpush1.msra.mxu0 0.0
    %4471 = vmatprep.subr.mxu0 0.0
    %4472 = vmatpush1.msra.mxu0 0.0
    %4473 = vmatprep.subr.mxu0 0.0
    %4474 = vmatpush1.msra.mxu0 0.0
    %4475 = vmatprep.subr.mxu0 0.0
    %4476 = vmatpush1.msra.mxu0 0.0
    %4477 = vmatprep.subr.mxu0 0.0
    %4478 = vmatpush1.msra.mxu0 0.0
    %4479 = vmatprep.mubr.f32.mxu0 0.0
    %4480 = vmatmul.mubr.f32.gmra.mrb[0].mxu0 %v4398
    %v4481 = vpop.f32.mrb[0].mxu0
    %v4482 = vadd.f32 %v4389, %v4481
    %v4483 = vpop.f32.mrb[0].mxu0
    %v4484 = vadd.f32 %v4389, %v4483
    %4485 = vmatprep.mubr.f32.mxu0 0.0
    %4486 = vmatmul.mubr.f32.gmra.mrb[0].mxu0 %v4401
    %v4487 = vpop.f32.mrb[0].mxu0
    %v4488 = vadd.f32 %v4394, %v4487
    %v4489 = vpop.f32.mrb[0].mxu0
    %v4490 = vadd.f32 %v4394, %v4489
    %4491 = vdwg.mxu0
    %4492 = vmatprep.subr.mxu0 %v4369
    %4493 = vmatpush1.msra.mxu0 %v4368
    %4494 = vmatprep.subr.mxu0 %v4373
    %4495 = vmatpush1.msra.mxu0 %v4372
    %4496 = vmatprep.subr.mxu0 %v4377
    %4497 = vmatpush1.msra.mxu0 %v4376
    %4498 = vmatprep.subr.mxu0 %v4381
    %4499 = vmatpush1.msra.mxu0 %v4380
    %4500 = vmatprep.subr.mxu0 %v4413
    %4501 = vmatpush1.msra.mxu0 %v4410
    %4502 = vmatprep.subr.mxu0 0.0
    %4503 = vmatpush1.msra.mxu0 0.0
    %4504 = vmatprep.subr.mxu0 0.0
    %4505 = vmatpush1.msra.mxu0 0.0
    %4506 = vmatprep.subr.mxu0 0.0
    %4507 = vmatpush1.msra.mxu0 0.0
    %4508 = vmatprep.subr.mxu0 0.0
    %4509 = vmatpush1.msra.mxu0 0.0
    %4510 = vmatprep.subr.mxu0 0.0
    %4511 = vmatpush1.msra.mxu0 0.0
    %4512 = vmatprep.subr.mxu0 0.0
    %4513 = vmatpush1.msra.mxu0 0.0
    %4514 = vmatprep.subr.mxu0 0.0
    %4515 = vmatpush1.msra.mxu0 0.0
    %4516 = vmatprep.subr.mxu0 0.0
    %4517 = vmatpush1.msra.mxu0 0.0
    %4518 = vmatprep.subr.mxu0 0.0
    %4519 = vmatpush1.msra.mxu0 0.0
    %4520 = vmatprep.subr.mxu0 0.0
    %4521 = vmatpush1.msra.mxu0 0.0
    %4522 = vmatprep.subr.mxu0 0.0
    %4523 = vmatpush1.msra.mxu0 0.0
    %4524 = vmatprep.subr.mxu0 0.0
    %4525 = vmatpush1.msra.mxu0 0.0
    %4526 = vmatprep.subr.mxu0 0.0
    %4527 = vmatpush1.msra.mxu0 0.0
    %4528 = vmatprep.subr.mxu0 0.0
    %4529 = vmatpush1.msra.mxu0 0.0
    %4530 = vmatprep.subr.mxu0 0.0
    %4531 = vmatpush1.msra.mxu0 0.0
    %4532 = vmatprep.subr.mxu0 0.0
    %4533 = vmatpush1.msra.mxu0 0.0
    %4534 = vmatprep.subr.mxu0 0.0
    %4535 = vmatpush1.msra.mxu0 0.0
    %4536 = vmatprep.subr.mxu0 0.0
    %4537 = vmatpush1.msra.mxu0 0.0
    %4538 = vmatprep.subr.mxu0 0.0
    %4539 = vmatpush1.msra.mxu0 0.0
    %4540 = vmatprep.subr.mxu0 0.0
    %4541 = vmatpush1.msra.mxu0 0.0
    %4542 = vmatprep.subr.mxu0 0.0
    %4543 = vmatpush1.msra.mxu0 0.0
    %4544 = vmatprep.subr.mxu0 0.0
    %4545 = vmatpush1.msra.mxu0 0.0
    %4546 = vmatprep.subr.mxu0 0.0
    %4547 = vmatpush1.msra.mxu0 0.0
    %4548 = vmatprep.subr.mxu0 0.0
    %4549 = vmatpush1.msra.mxu0 0.0
    %4550 = vmatprep.subr.mxu0 0.0
    %4551 = vmatpush1.msra.mxu0 0.0
    %4552 = vmatprep.subr.mxu0 0.0
    %4553 = vmatpush1.msra.mxu0 0.0
    %4554 = vmatprep.subr.mxu0 0.0
    %4555 = vmatpush1.msra.mxu0 0.0
    %4556 = vmatprep.mubr.f32.mxu0 0.0
    %4557 = vmatmul.mubr.f32.gmra.mrb[0].mxu0 %v4398
    %v4558 = vpop.f32.mrb[0].mxu0
    %v4559 = vadd.f32 %v4389, %v4558
    %v4560 = vpop.f32.mrb[0].mxu0
    %v4561 = vadd.f32 %v4389, %v4560
    %4562 = vmatprep.mubr.f32.mxu0 0.0
    %4563 = vmatmul.mubr.f32.gmra.mrb[0].mxu0 %v4401
    %v4564 = vpop.f32.mrb[0].mxu0
    %v4565 = vadd.f32 %v4394, %v4564
    %v4566 = vpop.f32.mrb[0].mxu0
    %v4567 = vadd.f32 %v4394, %v4566
    %4568 = vdwg.mxu0
    %v4569 = vmax.f32 %v4482, 0.0
    %v4570 = vmax.f32 %v4484, 0.0
    %v4571 = vmax.f32 %v4559, 0.0
    %v4572 = vmax.f32 %v4561, 0.0
    %v4573 = vmax.f32 %v4488, 0.0
    %v4574 = vmax.f32 %v4490, 0.0
    %v4575 = vmax.f32 %v4565, 0.0
    %v4576 = vmax.f32 %v4567, 0.0
    %4577 = vst [vmem:[#allocation6] sm:$0xff] %v4569
    %4578 = vst [vmem:[#allocation6 + $0x8] sm:$0xff] %v4570
    %4579 = vst [vmem:[#allocation6 + $0x10] sm:$0xff] %v4573
    %4580 = vst [vmem:[#allocation6 + $0x18] sm:$0xff] %v4574
    %s4581 = scalar_lea.vmem [#allocation6], 32
    %4582 = vst [vmem:[%s4581] sm:$0xff] %v4571
    %4583 = vst [vmem:[%s4581 + $0x8] sm:$0xff] %v4572
    %4584 = vst [vmem:[%s4581 + $0x10] sm:$0xff] %v4575
    %4585 = vst [vmem:[%s4581 + $0x18] sm:$0xff] %v4576
    // Predicated region
    $region18: #{tpu_custom_call.1} parent=1 // pred_check
      _
    $region19: #{tpu_custom_call.1} parent=1 // pred_check_branch
      %4587 = sbr.rel (0) target = $region21
    $region20: #{tpu_custom_call.1} parent=1 // pred_region
      %s4589 = ssub.s32 1024, 1024
      %4590 = vsyncadd [#allocation5], %s4589
      %s4591 = sshll.u32 [#allocation6], 4
      %s4592 = int_to_ptr.vmem [resolvable:$true] %s4591
      %4597 = dma.vmem_to_hbm [thread:$0]  %s4592, 1024, %s3, [#allocation5], 256, 256, 16
    $region21: #{tpu_custom_call.1} parent=1 // pred_fallthru
      _
    // Predicated region
    $region22: #{tpu_custom_call.1} parent=1 // pred_check
      _
    $region23: #{tpu_custom_call.1} parent=1 // pred_check_branch
      %4599 = sbr.rel (0) target = $region25
    $region24: #{tpu_custom_call.1} parent=1 // pred_region
      %4600 = dma.done [#allocation5], 1024
    $region25: #{tpu_custom_call.1} parent=1 // pred_fallthru
      _
    %4601 = vsyncpa [#allocation4], 1
    %4602 = vsyncpa [#allocation5], 1

</llo_original>
